<compile_context>
chip_gen: v7x
topology: tpu7x:2x2x1
jax: 0.10.0
libtpu: 0.0.40
codegen_flags: <defaults>
</compile_context>

<pallas_src>
import math

import jax
import jax.numpy as jnp
from jax import lax
from jax.experimental import pallas as pl
from jax.experimental.pallas import tpu as pltpu

# ----------------------------- configuration --------------------------------
B = 8            # batch size
X1_DIM = 16      # flattened x1 dim
X2_DIM = 16      # flattened x2 dim
HIDDEN = 32      # hidden_dim
EMBED = 16       # embed_dim
NUM_LABELS = 4   # num_labels
# layers=1, activation='relu'  -> every mlp() is Linear,ReLU,Linear,ReLU,Linear

EPS = 1e-8
SINKHORN_ITERS = 500
SINKHORN_ATOL = 0.01
SINKHORN_INNER = 10                           # updates per while_loop step
SINKHORN_OUTER = SINKHORN_ITERS // SINKHORN_INNER   # 50 * 10 == 500 exactly

LE = EMBED * NUM_LABELS                 # 64   (mlp1 / mlp2 output width)
OUT_DIM = 2 * LE + 3 * NUM_LABELS       # 140  (q1 | q2 | d1 | d2 | d12)
HID_ALL = 5 * HIDDEN                    # 160  (5 merged hidden blocks)

_VMEM = pl.BlockSpec(memory_space=pltpu.MemorySpace.VMEM)
_SMEM = pl.BlockSpec(memory_space=pltpu.MemorySpace.SMEM)


# --------------------------- single fused kernel -----------------------------
def _fused_kernel(x_ref, w1_ref, b1_ref, w2_ref, b2_ref, w3_ref, b3_ref,
                  py_ref, align_ref, stats_ref):
    b = x_ref.shape[0]
    L = NUM_LABELS

    # ---- all 5 MLPs fused into one 3-matmul chain (block weights) ----------
    x = x_ref[...]                                                  # (B, 32)
    h = jnp.maximum(
        jnp.dot(x, w1_ref[...], preferred_element_type=jnp.float32) + b1_ref[...], 0.0)
    h = jnp.maximum(
        jnp.dot(h, w2_ref[...], preferred_element_type=jnp.float32) + b2_ref[...], 0.0)
    o = jnp.dot(h, w3_ref[...], preferred_element_type=jnp.float32) + b3_ref[...]

    q1 = o[:, 0:LE]                         # mlp1(x1) raw logits   (B, L*E)
    q2 = o[:, LE:2 * LE]                    # mlp2(x2) raw logits   (B, L*E)

    def softmax(z):
        z = z - jnp.max(z, axis=-1, keepdims=True)
        e = jnp.exp(z)
        return e / jnp.sum(e, axis=-1, keepdims=True)

    p1 = softmax(o[:, 2 * LE:2 * LE + L])               # p(y | x1)     (B, L)
    p2 = softmax(o[:, 2 * LE + L:2 * LE + 2 * L])       # p(y | x2)     (B, L)
    p12 = softmax(o[:, 2 * LE + 2 * L:2 * LE + 3 * L])  # p(y | x1,x2)  (B, L)

    # ---- per-label feature normalization (torch.var unbiased=True) ---------
    a1 = jnp.transpose(q1.reshape(b, L, EMBED), (1, 0, 2))    # (L, B, E)
    a2 = jnp.transpose(q2.reshape(b, L, EMBED), (1, 0, 2))    # (L, B, E)
    inv_em1 = 1.0 / (EMBED - 1)

    def norm(a):
        m = jnp.mean(a, axis=2, keepdims=True)
        v = jnp.sum((a - m) ** 2, axis=2, keepdims=True) * inv_em1
        return (a - m) / jnp.sqrt(v + EPS)

    a1 = norm(a1)
    a2 = norm(a2)

    # einsum('ahx,bhx->abh') in label-major layout -> (L, B, B)
    logits = jnp.einsum('lax,lbx->lab', a1, a2,
                        preferred_element_type=jnp.float32)
    mat0 = jnp.exp(logits * (1.0 / math.sqrt(EMBED)))

    x1p_col = jnp.transpose(p1).reshape(L, b, 1)     # p(y=h|x1_a)  as (L, B, 1)
    x2p_row = jnp.transpose(p2).reshape(L, 1, b)     # p(y=h|x2_b)  as (L, 1, B)
    # hoisted loop-invariant broadcasts (JAX does not CSE broadcast_in_dim)
    x1p_bb = jnp.broadcast_to(x1p_col, (L, b, b))
    x2p_bb = jnp.broadcast_to(x2p_row, (L, b, b))

    # ---- batched Sinkhorn over all labels with per-label freeze ------------
    # Exact torch semantics: if the row check fires, that label freezes on the
    # column-normalized matrix (m_a); else if the column check fires it freezes
    # on m_b.  The convergence reduce / loop branch runs once per
    # SINKHORN_INNER fully-unrolled updates; the freeze mask keeps the result
    # identical to checking every iteration.
    def one_step(m, done):
        col = jnp.sum(m, axis=1, keepdims=True)                       # (L,1,B)
        m_a = m / (col + EPS) * x2p_bb
        rsum = jnp.sum(m_a, axis=2, keepdims=True)                    # (L,B,1)
        ok1 = (jnp.max(jnp.abs(rsum - x1p_col), axis=1, keepdims=True)
               <= SINKHORN_ATOL)                                      # (L,1,1) bool
        m_b = m_a / (rsum + EPS) * x1p_bb
        csum = jnp.sum(m_b, axis=1, keepdims=True)                    # (L,1,B)
        ok2 = (jnp.max(jnp.abs(csum - x2p_row), axis=2, keepdims=True)
               <= SINKHORN_ATOL)                                      # (L,1,1) bool
        cand = jnp.where(ok1, m_a, m_b)
        new_m = jnp.where(done, m, cand)
        new_done = jnp.logical_or(done, jnp.logical_or(ok1, ok2))
        return new_m, new_done

    def cond(carry):
        it, _, done_f = carry
        return jnp.logical_and(it < SINKHORN_OUTER, jnp.min(done_f) < 0.5)

    def body(carry):
        it, m, done_f = carry
        done = done_f > 0.5                  # bool inside the unrolled block
        for _ in range(SINKHORN_INNER):      # static unroll -> LLO visibility
            m, done = one_step(m, done)
        return it + 1, m, done.astype(jnp.float32)

    carry0 = (jnp.zeros((), jnp.int32), mat0,
              jnp.zeros((L, 1, 1), jnp.float32))
    mats = lax.while_loop(cond, body, carry0)[1]                      # (L,B,B)

    align_ref[...] = mats          # label-major alignment output

    # ---- q(x2 | x1, y) and all mutual-information terms --------------------
    q = mats / (jnp.sum(mats, axis=2, keepdims=True) + EPS)           # (L,B,B)
    denom = jnp.sum(q * x1p_col, axis=0)                              # (B,B) = einsum('aby,ay->ab')
    log_term = jnp.log(q + EPS) - jnp.log(denom + EPS)                # (L,B,B)
    w = x1p_col * q                                                   # p1[a,h]*q[h,a,b]

    inv_b = 1.0 / b
    log_py = jnp.log(py_ref[...])                    # (1, L)  (no EPS, matches torch)
    log_py_eps_col = jnp.log(py_ref[...] + EPS).reshape(L, 1, 1)

    loss = jnp.sum(w * log_term) * inv_b
    # mi_q reuses the loss reduction: the remaining term is independent of b
    mi_q = loss + jnp.sum(w * (jnp.log(x1p_col + EPS) - log_py_eps_col)) * inv_b
    mi_y_x1 = jnp.sum(p1 * (jnp.log(p1) - log_py)) * inv_b
    mi_y_x2 = jnp.sum(p2 * (jnp.log(p2) - log_py)) * inv_b
    mi_y_x1x2 = jnp.sum(p12 * (jnp.log(p12) - log_py)) * inv_b

    stats_ref[0] = loss
    stats_ref[1] = mi_y_x1
    stats_ref[2] = mi_y_x2
    stats_ref[3] = mi_y_x1x2
    stats_ref[4] = mi_q


# ----------------------------- parameter init --------------------------------
def init_mlp_params(key, in_dim, hidden, out_dim):
    ks = jax.random.split(key, 6)

    def lin(kw, kb, fi, fo):
        w = jax.random.normal(kw, (fi, fo), jnp.float32) / jnp.sqrt(float(fi))
        bias = jax.random.normal(kb, (1, fo), jnp.float32) * 0.01
        return w, bias

    w1, b1 = lin(ks[0], ks[1], in_dim, hidden)
    w2, b2 = lin(ks[2], ks[3], hidden, hidden)   # layers = 1
    w3, b3 = lin(ks[4], ks[5], hidden, out_dim)
    return (w1, b1, w2, b2, w3, b3)


def init_all_params(key):
    k = jax.random.split(key, 6)
    return {
        "mlp1": init_mlp_params(k[0], X1_DIM, HIDDEN, LE),
        "mlp2": init_mlp_params(k[1], X2_DIM, HIDDEN, LE),
        "d1": init_mlp_params(k[2], X1_DIM, HIDDEN, NUM_LABELS),
        "d2": init_mlp_params(k[3], X2_DIM, HIDDEN, NUM_LABELS),
        "d12": init_mlp_params(k[4], X1_DIM + X2_DIM, HIDDEN, NUM_LABELS),
        # registered buffer p_y (a valid, non-uniform label marginal)
        "p_y": jax.nn.softmax(0.3 * jnp.arange(NUM_LABELS, dtype=jnp.float32)),
    }


def merge_mlp_params(params):
    """Pack the 5 MLPs into one block-structured 3-layer MLP.

    Input is [x1 | x2] (32 wide); hidden is 5 blocks of 32 (one per original
    MLP, zeros off-block so results are exactly the separate MLPs); output
    columns are [q1(64) | q2(64) | d1(4) | d2(4) | d12(4)].
    """
    blocks = [params["mlp1"], params["mlp2"], params["d1"], params["d2"], params["d12"]]
    H = HIDDEN
    row_slices = [(0, X1_DIM),                       # mlp1 reads x1
                  (X1_DIM, X1_DIM + X2_DIM),         # mlp2 reads x2
                  (0, X1_DIM),                       # discrim_1 reads x1
                  (X1_DIM, X1_DIM + X2_DIM),         # discrim_2 reads x2
                  (0, X1_DIM + X2_DIM)]              # discrim_12 reads [x1|x2]
    w1 = jnp.zeros((X1_DIM + X2_DIM, HID_ALL), jnp.float32)
    for i, (p, (r0, r1)) in enumerate(zip(blocks, row_slices)):
        w1 = w1.at[r0:r1, i * H:(i + 1) * H].set(p[0])
    b1 = jnp.concatenate([p[1] for p in blocks], axis=1)

    w2 = jnp.zeros((HID_ALL, HID_ALL), jnp.float32)          # block diagonal
    for i, p in enumerate(blocks):
        w2 = w2.at[i * H:(i + 1) * H, i * H:(i + 1) * H].set(p[2])
    b2 = jnp.concatenate([p[3] for p in blocks], axis=1)

    col_offs = [0, LE, 2 * LE, 2 * LE + NUM_LABELS, 2 * LE + 2 * NUM_LABELS, OUT_DIM]
    w3 = jnp.zeros((HID_ALL, OUT_DIM), jnp.float32)
    for i, p in enumerate(blocks):
        w3 = w3.at[i * H:(i + 1) * H, col_offs[i]:col_offs[i + 1]].set(p[4])
    b3 = jnp.concatenate([p[5] for p in blocks], axis=1)
    return (w1, b1, w2, b2, w3, b3)


# ----------------------------- forward pass ----------------------------------
@jax.jit
def ce_alignment_information_forward(merged, p_y, x1, x2, y):
    # NOTE: as in the reference, y only feeds the *_sampled quantities which do
    # not contribute to any returned value, so y is accepted but unused here.
    del y
    x12 = jnp.concatenate([x1, x2], axis=-1)

    align_lbb, stats = pl.pallas_call(
        _fused_kernel,
        out_shape=(jax.ShapeDtypeStruct((NUM_LABELS, B, B), jnp.float32),
                   jax.ShapeDtypeStruct((5,), jnp.float32)),
        in_specs=[_VMEM] * 8,
        out_specs=(_VMEM, _SMEM),
    )(x12, *merged, p_y.reshape(1, NUM_LABELS))

    loss = stats[0]
    mi_y_x1, mi_y_x2, mi_y_x1x2, mi_q_y_x1x2 = stats[1], stats[2], stats[3], stats[4]

    redundancy = mi_y_x1 + mi_y_x2 - mi_q_y_x1x2
    unique1 = mi_q_y_x1x2 - mi_y_x2
    unique2 = mi_q_y_x1x2 - mi_y_x1
    synergy = mi_y_x1x2 - mi_q_y_x1x2

    align = jnp.transpose(align_lbb, (1, 2, 0))   # -> (B, B, num_labels)
    return loss, jnp.stack([redundancy, unique1, unique2, synergy]), align


# ----------------------------------- main ------------------------------------
if __name__ == "__main__":
    key = jax.random.PRNGKey(0)
    kp, kx1, kx2, ky = jax.random.split(key, 4)

    params = init_all_params(kp)
    merged = merge_mlp_params(params)

    x1 = jax.random.normal(kx1, (B, X1_DIM), jnp.float32)
    x2 = jax.random.normal(kx2, (B, X2_DIM), jnp.float32)
    y = jax.random.randint(ky, (B, 1), 0, NUM_LABELS, jnp.int32)

    loss, terms, align = ce_alignment_information_forward(merged, params["p_y"],
                                                          x1, x2, y)
    loss = jax.block_until_ready(loss)
    terms = jax.block_until_ready(terms)
    align = jax.block_until_ready(align)

    # mirror of the torch nan guard on the normalized alignment
    if bool(jnp.any(jnp.isnan(align))):
        raise Exception("nan")

    print("KERNEL_OK")
</pallas_src>

<mosaic_0001>
module attributes {stable_mosaic.version = 11 : i64} {
  func.func @_fused_kernel(%arg0: memref<8x32xf32, #tpu.memory_space<vmem>>, %arg1: memref<32x160xf32, #tpu.memory_space<vmem>>, %arg2: memref<1x160xf32, #tpu.memory_space<vmem>>, %arg3: memref<160x160xf32, #tpu.memory_space<vmem>>, %arg4: memref<1x160xf32, #tpu.memory_space<vmem>>, %arg5: memref<160x140xf32, #tpu.memory_space<vmem>>, %arg6: memref<1x140xf32, #tpu.memory_space<vmem>>, %arg7: memref<1x4xf32, #tpu.memory_space<vmem>>, %arg8: memref<4x8x8xf32, #tpu.memory_space<vmem>>, %arg9: memref<5xf32, #tpu.memory_space<smem>>) attributes {dimension_semantics = [], scalar_prefetch = 0 : i64, scratch_operands = 0 : i64, tpu.core_type = #tpu.core_type<tc>} {
    %c0 = arith.constant 0 : index
    %c0_0 = arith.constant 0 : index
    %0 = vector.load %arg0[%c0, %c0_0] : memref<8x32xf32, #tpu.memory_space<vmem>>, vector<8x32xf32>
    %c0_1 = arith.constant 0 : index
    %c0_2 = arith.constant 0 : index
    %1 = vector.load %arg1[%c0_1, %c0_2] : memref<32x160xf32, #tpu.memory_space<vmem>>, vector<32x160xf32>
    %cst = arith.constant dense<0.000000e+00> : vector<8x160xf32>
    %2 = tpu.matmul %0, %1, %cst {dimension_numbers = #tpu.dot_dimension_numbers<[1], [0], [0], [1], [0, 0, 1, 1], [], []>} : vector<8x32xf32>, vector<32x160xf32>, vector<8x160xf32> -> vector<8x160xf32>
    %c0_3 = arith.constant 0 : index
    %c0_4 = arith.constant 0 : index
    %3 = vector.load %arg2[%c0_3, %c0_4] : memref<1x160xf32, #tpu.memory_space<vmem>>, vector<1x160xf32>
    %4 = vector.broadcast %3 : vector<1x160xf32> to vector<8x160xf32>
    %5 = arith.addf %2, %4 : vector<8x160xf32>
    %cst_5 = arith.constant 0.000000e+00 : f32
    %6 = vector.broadcast %cst_5 : f32 to vector<8x160xf32>
    %7 = arith.maximumf %5, %6 : vector<8x160xf32>
    %c0_6 = arith.constant 0 : index
    %c0_7 = arith.constant 0 : index
    %8 = vector.load %arg3[%c0_6, %c0_7] : memref<160x160xf32, #tpu.memory_space<vmem>>, vector<160x160xf32>
    %cst_8 = arith.constant dense<0.000000e+00> : vector<8x160xf32>
    %9 = tpu.matmul %7, %8, %cst_8 {dimension_numbers = #tpu.dot_dimension_numbers<[1], [0], [0], [1], [0, 0, 1, 1], [], []>} : vector<8x160xf32>, vector<160x160xf32>, vector<8x160xf32> -> vector<8x160xf32>
    %c0_9 = arith.constant 0 : index
    %c0_10 = arith.constant 0 : index
    %10 = vector.load %arg4[%c0_9, %c0_10] : memref<1x160xf32, #tpu.memory_space<vmem>>, vector<1x160xf32>
    %11 = vector.broadcast %10 : vector<1x160xf32> to vector<8x160xf32>
    %12 = arith.addf %9, %11 : vector<8x160xf32>
    %cst_11 = arith.constant 0.000000e+00 : f32
    %13 = vector.broadcast %cst_11 : f32 to vector<8x160xf32>
    %14 = arith.maximumf %12, %13 : vector<8x160xf32>
    %c0_12 = arith.constant 0 : index
    %c0_13 = arith.constant 0 : index
    %15 = vector.load %arg5[%c0_12, %c0_13] : memref<160x140xf32, #tpu.memory_space<vmem>>, vector<160x140xf32>
    %cst_14 = arith.constant dense<0.000000e+00> : vector<8x140xf32>
    %16 = tpu.matmul %14, %15, %cst_14 {dimension_numbers = #tpu.dot_dimension_numbers<[1], [0], [0], [1], [0, 0, 1, 1], [], []>} : vector<8x160xf32>, vector<160x140xf32>, vector<8x140xf32> -> vector<8x140xf32>
    %c0_15 = arith.constant 0 : index
    %c0_16 = arith.constant 0 : index
    %17 = vector.load %arg6[%c0_15, %c0_16] : memref<1x140xf32, #tpu.memory_space<vmem>>, vector<1x140xf32>
    %18 = vector.broadcast %17 : vector<1x140xf32> to vector<8x140xf32>
    %19 = arith.addf %16, %18 : vector<8x140xf32>
    %20 = vector.extract_strided_slice %19 {offsets = [0, 0], sizes = [8, 64], strides = [1, 1]} : vector<8x140xf32> to vector<8x64xf32>
    %21 = vector.extract_strided_slice %19 {offsets = [0, 64], sizes = [8, 64], strides = [1, 1]} : vector<8x140xf32> to vector<8x64xf32>
    %22 = vector.extract_strided_slice %19 {offsets = [0, 128], sizes = [8, 4], strides = [1, 1]} : vector<8x140xf32> to vector<8x4xf32>
    %cst_17 = arith.constant dense<0xFF800000> : vector<8xf32>
    %23 = vector.multi_reduction <maximumf>, %22, %cst_17 [1] : vector<8x4xf32> to vector<8xf32>
    %24 = vector.shape_cast %23 : vector<8xf32> to vector<8x1xf32>
    %25 = vector.broadcast %24 : vector<8x1xf32> to vector<8x4xf32>
    %26 = arith.subf %22, %25 : vector<8x4xf32>
    %27 = math.exp %26 : vector<8x4xf32>
    %cst_18 = arith.constant dense<0.000000e+00> : vector<8xf32>
    %28 = vector.multi_reduction <add>, %27, %cst_18 [1] : vector<8x4xf32> to vector<8xf32>
    %29 = vector.shape_cast %28 : vector<8xf32> to vector<8x1xf32>
    %30 = vector.broadcast %29 : vector<8x1xf32> to vector<8x4xf32>
    %31 = arith.divf %27, %30 : vector<8x4xf32>
    %32 = vector.extract_strided_slice %19 {offsets = [0, 132], sizes = [8, 4], strides = [1, 1]} : vector<8x140xf32> to vector<8x4xf32>
    %cst_19 = arith.constant dense<0xFF800000> : vector<8xf32>
    %33 = vector.multi_reduction <maximumf>, %32, %cst_19 [1] : vector<8x4xf32> to vector<8xf32>
    %34 = vector.shape_cast %33 : vector<8xf32> to vector<8x1xf32>
    %35 = vector.broadcast %34 : vector<8x1xf32> to vector<8x4xf32>
    %36 = arith.subf %32, %35 : vector<8x4xf32>
    %37 = math.exp %36 : vector<8x4xf32>
    %cst_20 = arith.constant dense<0.000000e+00> : vector<8xf32>
    %38 = vector.multi_reduction <add>, %37, %cst_20 [1] : vector<8x4xf32> to vector<8xf32>
    %39 = vector.shape_cast %38 : vector<8xf32> to vector<8x1xf32>
    %40 = vector.broadcast %39 : vector<8x1xf32> to vector<8x4xf32>
    %41 = arith.divf %37, %40 : vector<8x4xf32>
    %42 = vector.extract_strided_slice %19 {offsets = [0, 136], sizes = [8, 4], strides = [1, 1]} : vector<8x140xf32> to vector<8x4xf32>
    %cst_21 = arith.constant dense<0xFF800000> : vector<8xf32>
    %43 = vector.multi_reduction <maximumf>, %42, %cst_21 [1] : vector<8x4xf32> to vector<8xf32>
    %44 = vector.shape_cast %43 : vector<8xf32> to vector<8x1xf32>
    %45 = vector.broadcast %44 : vector<8x1xf32> to vector<8x4xf32>
    %46 = arith.subf %42, %45 : vector<8x4xf32>
    %47 = math.exp %46 : vector<8x4xf32>
    %cst_22 = arith.constant dense<0.000000e+00> : vector<8xf32>
    %48 = vector.multi_reduction <add>, %47, %cst_22 [1] : vector<8x4xf32> to vector<8xf32>
    %49 = vector.shape_cast %48 : vector<8xf32> to vector<8x1xf32>
    %50 = vector.broadcast %49 : vector<8x1xf32> to vector<8x4xf32>
    %51 = arith.divf %47, %50 : vector<8x4xf32>
    %52 = vector.shape_cast %20 : vector<8x64xf32> to vector<8x4x16xf32>
    %53 = tpu.transpose %52, [1, 0, 2] : vector<8x4x16xf32> -> vector<4x8x16xf32>
    %54 = vector.shape_cast %21 : vector<8x64xf32> to vector<8x4x16xf32>
    %55 = tpu.transpose %54, [1, 0, 2] : vector<8x4x16xf32> -> vector<4x8x16xf32>
    %cst_23 = arith.constant dense<0.000000e+00> : vector<4x8xf32>
    %56 = vector.multi_reduction <add>, %53, %cst_23 [2] : vector<4x8x16xf32> to vector<4x8xf32>
    %57 = vector.shape_cast %56 : vector<4x8xf32> to vector<4x8x1xf32>
    %cst_24 = arith.constant 1.600000e+01 : f32
    %58 = vector.broadcast %cst_24 : f32 to vector<4x8x1xf32>
    %59 = arith.divf %57, %58 : vector<4x8x1xf32>
    %60 = vector.broadcast %59 : vector<4x8x1xf32> to vector<4x8x16xf32>
    %61 = arith.subf %53, %60 : vector<4x8x16xf32>
    %62 = arith.mulf %61, %61 : vector<4x8x16xf32>
    %cst_25 = arith.constant dense<0.000000e+00> : vector<4x8xf32>
    %63 = vector.multi_reduction <add>, %62, %cst_25 [2] : vector<4x8x16xf32> to vector<4x8xf32>
    %64 = vector.shape_cast %63 : vector<4x8xf32> to vector<4x8x1xf32>
    %cst_26 = arith.constant 0.0666666701 : f32
    %65 = vector.broadcast %cst_26 : f32 to vector<4x8x1xf32>
    %66 = arith.mulf %64, %65 : vector<4x8x1xf32>
    %67 = vector.broadcast %59 : vector<4x8x1xf32> to vector<4x8x16xf32>
    %68 = arith.subf %53, %67 : vector<4x8x16xf32>
    %cst_27 = arith.constant 9.99999993E-9 : f32
    %69 = vector.broadcast %cst_27 : f32 to vector<4x8x1xf32>
    %70 = arith.addf %66, %69 : vector<4x8x1xf32>
    %71 = math.sqrt %70 : vector<4x8x1xf32>
    %72 = vector.broadcast %71 : vector<4x8x1xf32> to vector<4x8x16xf32>
    %73 = arith.divf %68, %72 : vector<4x8x16xf32>
    %cst_28 = arith.constant dense<0.000000e+00> : vector<4x8xf32>
    %74 = vector.multi_reduction <add>, %55, %cst_28 [2] : vector<4x8x16xf32> to vector<4x8xf32>
    %75 = vector.shape_cast %74 : vector<4x8xf32> to vector<4x8x1xf32>
    %cst_29 = arith.constant 1.600000e+01 : f32
    %76 = vector.broadcast %cst_29 : f32 to vector<4x8x1xf32>
    %77 = arith.divf %75, %76 : vector<4x8x1xf32>
    %78 = vector.broadcast %77 : vector<4x8x1xf32> to vector<4x8x16xf32>
    %79 = arith.subf %55, %78 : vector<4x8x16xf32>
    %80 = arith.mulf %79, %79 : vector<4x8x16xf32>
    %cst_30 = arith.constant dense<0.000000e+00> : vector<4x8xf32>
    %81 = vector.multi_reduction <add>, %80, %cst_30 [2] : vector<4x8x16xf32> to vector<4x8xf32>
    %82 = vector.shape_cast %81 : vector<4x8xf32> to vector<4x8x1xf32>
    %cst_31 = arith.constant 0.0666666701 : f32
    %83 = vector.broadcast %cst_31 : f32 to vector<4x8x1xf32>
    %84 = arith.mulf %82, %83 : vector<4x8x1xf32>
    %85 = vector.broadcast %77 : vector<4x8x1xf32> to vector<4x8x16xf32>
    %86 = arith.subf %55, %85 : vector<4x8x16xf32>
    %cst_32 = arith.constant 9.99999993E-9 : f32
    %87 = vector.broadcast %cst_32 : f32 to vector<4x8x1xf32>
    %88 = arith.addf %84, %87 : vector<4x8x1xf32>
    %89 = math.sqrt %88 : vector<4x8x1xf32>
    %90 = vector.broadcast %89 : vector<4x8x1xf32> to vector<4x8x16xf32>
    %91 = arith.divf %86, %90 : vector<4x8x16xf32>
    "tpu.trace_start"() <{level = 10 : i32, message = "lax,lbx->lab"}> : () -> ()
    %cst_33 = arith.constant dense<0.000000e+00> : vector<4x8x8xf32>
    %92 = tpu.matmul %73, %91, %cst_33 {dimension_numbers = #tpu.dot_dimension_numbers<[2], [2], [1], [1], [0, 0, 0, 1, 1, 1], [0], [0]>} : vector<4x8x16xf32>, vector<4x8x16xf32>, vector<4x8x8xf32> -> vector<4x8x8xf32>
    "tpu.trace_stop"() : () -> ()
    %cst_34 = arith.constant 2.500000e-01 : f32
    %93 = vector.broadcast %cst_34 : f32 to vector<4x8x8xf32>
    %94 = arith.mulf %92, %93 : vector<4x8x8xf32>
    %95 = math.exp %94 : vector<4x8x8xf32>
    %96 = tpu.transpose %31, [1, 0] : vector<8x4xf32> -> vector<4x8xf32>
    %97 = vector.shape_cast %96 : vector<4x8xf32> to vector<4x8x1xf32>
    %98 = tpu.transpose %41, [1, 0] : vector<8x4xf32> -> vector<4x8xf32>
    %99 = vector.shape_cast %98 : vector<4x8xf32> to vector<4x1x8xf32>
    %100 = vector.shape_cast %97 : vector<4x8x1xf32> to vector<4x8x1xf32>
    %101 = vector.broadcast %100 : vector<4x8x1xf32> to vector<4x8x8xf32>
    %102 = vector.shape_cast %99 : vector<4x1x8xf32> to vector<4x1x8xf32>
    %103 = vector.broadcast %102 : vector<4x1x8xf32> to vector<4x8x8xf32>
    %cst_35 = arith.constant 0.000000e+00 : f32
    %104 = vector.broadcast %cst_35 : f32 to vector<4x1x1xf32>
    %c0_i32 = arith.constant 0 : i32
    %105:3 = scf.while (%arg10 = %c0_i32, %arg11 = %95, %arg12 = %104) : (i32, vector<4x8x8xf32>, vector<4x1x1xf32>) -> (i32, vector<4x8x8xf32>, vector<4x1x1xf32>) {
      %c50_i32 = arith.constant 50 : i32
      %185 = arith.cmpi slt, %arg10, %c50_i32 : i32
      %186 = vector.shape_cast %arg12 : vector<4x1x1xf32> to vector<1x4x1x1xf32>
      %cst_61 = arith.constant dense<0x7F800000> : vector<1xf32>
      %187 = vector.multi_reduction <minimumf>, %186, %cst_61 [1, 2, 3] : vector<1x4x1x1xf32> to vector<1xf32>
      %188 = vector.shape_cast %187 : vector<1xf32> to vector<1x1x1x1xf32>
      %189 = vector.extract %188[0, 0, 0, 0] : f32 from vector<1x1x1x1xf32>
      %cst_62 = arith.constant 5.000000e-01 : f32
      %190 = arith.cmpf olt, %189, %cst_62 : f32
      %191 = arith.andi %185, %190 : i1
      scf.condition(%191) %arg10, %arg11, %arg12 : i32, vector<4x8x8xf32>, vector<4x1x1xf32>
    } do {
    ^bb0(%arg10: i32, %arg11: vector<4x8x8xf32>, %arg12: vector<4x1x1xf32>):
      %cst_61 = arith.constant 5.000000e-01 : f32
      %185 = vector.broadcast %cst_61 : f32 to vector<4x1x1xf32>
      %186 = arith.cmpf ogt, %arg12, %185 : vector<4x1x1xf32>
      %cst_62 = arith.constant dense<0.000000e+00> : vector<4x8xf32>
      %187 = vector.multi_reduction <add>, %arg11, %cst_62 [1] : vector<4x8x8xf32> to vector<4x8xf32>
      %188 = vector.shape_cast %187 : vector<4x8xf32> to vector<4x1x8xf32>
      %cst_63 = arith.constant 9.99999993E-9 : f32
      %189 = vector.broadcast %cst_63 : f32 to vector<4x1x8xf32>
      %190 = arith.addf %188, %189 : vector<4x1x8xf32>
      %191 = vector.broadcast %190 : vector<4x1x8xf32> to vector<4x8x8xf32>
      %192 = arith.divf %arg11, %191 : vector<4x8x8xf32>
      %193 = arith.mulf %192, %103 : vector<4x8x8xf32>
      %cst_64 = arith.constant dense<0.000000e+00> : vector<4x8xf32>
      %194 = vector.multi_reduction <add>, %193, %cst_64 [2] : vector<4x8x8xf32> to vector<4x8xf32>
      %195 = vector.shape_cast %194 : vector<4x8xf32> to vector<4x8x1xf32>
      %196 = arith.subf %195, %97 : vector<4x8x1xf32>
      %197 = math.absf %196 : vector<4x8x1xf32>
      %cst_65 = arith.constant dense<0xFF800000> : vector<4x1xf32>
      %198 = vector.multi_reduction <maximumf>, %197, %cst_65 [1] : vector<4x8x1xf32> to vector<4x1xf32>
      %199 = vector.shape_cast %198 : vector<4x1xf32> to vector<4x1x1xf32>
      %cst_66 = arith.constant 0.00999999977 : f32
      %200 = vector.broadcast %cst_66 : f32 to vector<4x1x1xf32>
      %201 = arith.cmpf ole, %199, %200 : vector<4x1x1xf32>
      %cst_67 = arith.constant 9.99999993E-9 : f32
      %202 = vector.broadcast %cst_67 : f32 to vector<4x8x1xf32>
      %203 = arith.addf %195, %202 : vector<4x8x1xf32>
      %204 = vector.broadcast %203 : vector<4x8x1xf32> to vector<4x8x8xf32>
      %205 = arith.divf %193, %204 : vector<4x8x8xf32>
      %206 = arith.mulf %205, %101 : vector<4x8x8xf32>
      %cst_68 = arith.constant dense<0.000000e+00> : vector<4x8xf32>
      %207 = vector.multi_reduction <add>, %206, %cst_68 [1] : vector<4x8x8xf32> to vector<4x8xf32>
      %208 = vector.shape_cast %207 : vector<4x8xf32> to vector<4x1x8xf32>
      %209 = arith.subf %208, %99 : vector<4x1x8xf32>
      %210 = math.absf %209 : vector<4x1x8xf32>
      %cst_69 = arith.constant dense<0xFF800000> : vector<4x1xf32>
      %211 = vector.multi_reduction <maximumf>, %210, %cst_69 [2] : vector<4x1x8xf32> to vector<4x1xf32>
      %212 = vector.shape_cast %211 : vector<4x1xf32> to vector<4x1x1xf32>
      %cst_70 = arith.constant 0.00999999977 : f32
      %213 = vector.broadcast %cst_70 : f32 to vector<4x1x1xf32>
      %214 = arith.cmpf ole, %212, %213 : vector<4x1x1xf32>
      %215 = vector.shape_cast %201 : vector<4x1x1xi1> to vector<4x1x1xi1>
      %216 = vector.broadcast %215 : vector<4x1x1xi1> to vector<4x8x8xi1>
      %217 = arith.select %216, %193, %206 : vector<4x8x8xi1>, vector<4x8x8xf32>
      %218 = vector.shape_cast %186 : vector<4x1x1xi1> to vector<4x1x1xi1>
      %219 = vector.broadcast %218 : vector<4x1x1xi1> to vector<4x8x8xi1>
      %220 = arith.select %219, %arg11, %217 : vector<4x8x8xi1>, vector<4x8x8xf32>
      %221 = arith.ori %201, %214 : vector<4x1x1xi1>
      %222 = arith.ori %186, %221 : vector<4x1x1xi1>
      %cst_71 = arith.constant dense<0.000000e+00> : vector<4x8xf32>
      %223 = vector.multi_reduction <add>, %220, %cst_71 [1] : vector<4x8x8xf32> to vector<4x8xf32>
      %224 = vector.shape_cast %223 : vector<4x8xf32> to vector<4x1x8xf32>
      %cst_72 = arith.constant 9.99999993E-9 : f32
      %225 = vector.broadcast %cst_72 : f32 to vector<4x1x8xf32>
      %226 = arith.addf %224, %225 : vector<4x1x8xf32>
      %227 = vector.broadcast %226 : vector<4x1x8xf32> to vector<4x8x8xf32>
      %228 = arith.divf %220, %227 : vector<4x8x8xf32>
      %229 = arith.mulf %228, %103 : vector<4x8x8xf32>
      %cst_73 = arith.constant dense<0.000000e+00> : vector<4x8xf32>
      %230 = vector.multi_reduction <add>, %229, %cst_73 [2] : vector<4x8x8xf32> to vector<4x8xf32>
      %231 = vector.shape_cast %230 : vector<4x8xf32> to vector<4x8x1xf32>
      %232 = arith.subf %231, %97 : vector<4x8x1xf32>
      %233 = math.absf %232 : vector<4x8x1xf32>
      %cst_74 = arith.constant dense<0xFF800000> : vector<4x1xf32>
      %234 = vector.multi_reduction <maximumf>, %233, %cst_74 [1] : vector<4x8x1xf32> to vector<4x1xf32>
      %235 = vector.shape_cast %234 : vector<4x1xf32> to vector<4x1x1xf32>
      %cst_75 = arith.constant 0.00999999977 : f32
      %236 = vector.broadcast %cst_75 : f32 to vector<4x1x1xf32>
      %237 = arith.cmpf ole, %235, %236 : vector<4x1x1xf32>
      %cst_76 = arith.constant 9.99999993E-9 : f32
      %238 = vector.broadcast %cst_76 : f32 to vector<4x8x1xf32>
      %239 = arith.addf %231, %238 : vector<4x8x1xf32>
      %240 = vector.broadcast %239 : vector<4x8x1xf32> to vector<4x8x8xf32>
      %241 = arith.divf %229, %240 : vector<4x8x8xf32>
      %242 = arith.mulf %241, %101 : vector<4x8x8xf32>
      %cst_77 = arith.constant dense<0.000000e+00> : vector<4x8xf32>
      %243 = vector.multi_reduction <add>, %242, %cst_77 [1] : vector<4x8x8xf32> to vector<4x8xf32>
      %244 = vector.shape_cast %243 : vector<4x8xf32> to vector<4x1x8xf32>
      %245 = arith.subf %244, %99 : vector<4x1x8xf32>
      %246 = math.absf %245 : vector<4x1x8xf32>
      %cst_78 = arith.constant dense<0xFF800000> : vector<4x1xf32>
      %247 = vector.multi_reduction <maximumf>, %246, %cst_78 [2] : vector<4x1x8xf32> to vector<4x1xf32>
      %248 = vector.shape_cast %247 : vector<4x1xf32> to vector<4x1x1xf32>
      %cst_79 = arith.constant 0.00999999977 : f32
      %249 = vector.broadcast %cst_79 : f32 to vector<4x1x1xf32>
      %250 = arith.cmpf ole, %248, %249 : vector<4x1x1xf32>
      %251 = vector.shape_cast %237 : vector<4x1x1xi1> to vector<4x1x1xi1>
      %252 = vector.broadcast %251 : vector<4x1x1xi1> to vector<4x8x8xi1>
      %253 = arith.select %252, %229, %242 : vector<4x8x8xi1>, vector<4x8x8xf32>
      %254 = vector.shape_cast %222 : vector<4x1x1xi1> to vector<4x1x1xi1>
      %255 = vector.broadcast %254 : vector<4x1x1xi1> to vector<4x8x8xi1>
      %256 = arith.select %255, %220, %253 : vector<4x8x8xi1>, vector<4x8x8xf32>
      %257 = arith.ori %237, %250 : vector<4x1x1xi1>
      %258 = arith.ori %222, %257 : vector<4x1x1xi1>
      %cst_80 = arith.constant dense<0.000000e+00> : vector<4x8xf32>
      %259 = vector.multi_reduction <add>, %256, %cst_80 [1] : vector<4x8x8xf32> to vector<4x8xf32>
      %260 = vector.shape_cast %259 : vector<4x8xf32> to vector<4x1x8xf32>
      %cst_81 = arith.constant 9.99999993E-9 : f32
      %261 = vector.broadcast %cst_81 : f32 to vector<4x1x8xf32>
      %262 = arith.addf %260, %261 : vector<4x1x8xf32>
      %263 = vector.broadcast %262 : vector<4x1x8xf32> to vector<4x8x8xf32>
      %264 = arith.divf %256, %263 : vector<4x8x8xf32>
      %265 = arith.mulf %264, %103 : vector<4x8x8xf32>
      %cst_82 = arith.constant dense<0.000000e+00> : vector<4x8xf32>
      %266 = vector.multi_reduction <add>, %265, %cst_82 [2] : vector<4x8x8xf32> to vector<4x8xf32>
      %267 = vector.shape_cast %266 : vector<4x8xf32> to vector<4x8x1xf32>
      %268 = arith.subf %267, %97 : vector<4x8x1xf32>
      %269 = math.absf %268 : vector<4x8x1xf32>
      %cst_83 = arith.constant dense<0xFF800000> : vector<4x1xf32>
      %270 = vector.multi_reduction <maximumf>, %269, %cst_83 [1] : vector<4x8x1xf32> to vector<4x1xf32>
      %271 = vector.shape_cast %270 : vector<4x1xf32> to vector<4x1x1xf32>
      %cst_84 = arith.constant 0.00999999977 : f32
      %272 = vector.broadcast %cst_84 : f32 to vector<4x1x1xf32>
      %273 = arith.cmpf ole, %271, %272 : vector<4x1x1xf32>
      %cst_85 = arith.constant 9.99999993E-9 : f32
      %274 = vector.broadcast %cst_85 : f32 to vector<4x8x1xf32>
      %275 = arith.addf %267, %274 : vector<4x8x1xf32>
      %276 = vector.broadcast %275 : vector<4x8x1xf32> to vector<4x8x8xf32>
      %277 = arith.divf %265, %276 : vector<4x8x8xf32>
      %278 = arith.mulf %277, %101 : vector<4x8x8xf32>
      %cst_86 = arith.constant dense<0.000000e+00> : vector<4x8xf32>
      %279 = vector.multi_reduction <add>, %278, %cst_86 [1] : vector<4x8x8xf32> to vector<4x8xf32>
      %280 = vector.shape_cast %279 : vector<4x8xf32> to vector<4x1x8xf32>
      %281 = arith.subf %280, %99 : vector<4x1x8xf32>
      %282 = math.absf %281 : vector<4x1x8xf32>
      %cst_87 = arith.constant dense<0xFF800000> : vector<4x1xf32>
      %283 = vector.multi_reduction <maximumf>, %282, %cst_87 [2] : vector<4x1x8xf32> to vector<4x1xf32>
      %284 = vector.shape_cast %283 : vector<4x1xf32> to vector<4x1x1xf32>
      %cst_88 = arith.constant 0.00999999977 : f32
      %285 = vector.broadcast %cst_88 : f32 to vector<4x1x1xf32>
      %286 = arith.cmpf ole, %284, %285 : vector<4x1x1xf32>
      %287 = vector.shape_cast %273 : vector<4x1x1xi1> to vector<4x1x1xi1>
      %288 = vector.broadcast %287 : vector<4x1x1xi1> to vector<4x8x8xi1>
      %289 = arith.select %288, %265, %278 : vector<4x8x8xi1>, vector<4x8x8xf32>
      %290 = vector.shape_cast %258 : vector<4x1x1xi1> to vector<4x1x1xi1>
      %291 = vector.broadcast %290 : vector<4x1x1xi1> to vector<4x8x8xi1>
      %292 = arith.select %291, %256, %289 : vector<4x8x8xi1>, vector<4x8x8xf32>
      %293 = arith.ori %273, %286 : vector<4x1x1xi1>
      %294 = arith.ori %258, %293 : vector<4x1x1xi1>
      %cst_89 = arith.constant dense<0.000000e+00> : vector<4x8xf32>
      %295 = vector.multi_reduction <add>, %292, %cst_89 [1] : vector<4x8x8xf32> to vector<4x8xf32>
      %296 = vector.shape_cast %295 : vector<4x8xf32> to vector<4x1x8xf32>
      %cst_90 = arith.constant 9.99999993E-9 : f32
      %297 = vector.broadcast %cst_90 : f32 to vector<4x1x8xf32>
      %298 = arith.addf %296, %297 : vector<4x1x8xf32>
      %299 = vector.broadcast %298 : vector<4x1x8xf32> to vector<4x8x8xf32>
      %300 = arith.divf %292, %299 : vector<4x8x8xf32>
      %301 = arith.mulf %300, %103 : vector<4x8x8xf32>
      %cst_91 = arith.constant dense<0.000000e+00> : vector<4x8xf32>
      %302 = vector.multi_reduction <add>, %301, %cst_91 [2] : vector<4x8x8xf32> to vector<4x8xf32>
      %303 = vector.shape_cast %302 : vector<4x8xf32> to vector<4x8x1xf32>
      %304 = arith.subf %303, %97 : vector<4x8x1xf32>
      %305 = math.absf %304 : vector<4x8x1xf32>
      %cst_92 = arith.constant dense<0xFF800000> : vector<4x1xf32>
      %306 = vector.multi_reduction <maximumf>, %305, %cst_92 [1] : vector<4x8x1xf32> to vector<4x1xf32>
      %307 = vector.shape_cast %306 : vector<4x1xf32> to vector<4x1x1xf32>
      %cst_93 = arith.constant 0.00999999977 : f32
      %308 = vector.broadcast %cst_93 : f32 to vector<4x1x1xf32>
      %309 = arith.cmpf ole, %307, %308 : vector<4x1x1xf32>
      %cst_94 = arith.constant 9.99999993E-9 : f32
      %310 = vector.broadcast %cst_94 : f32 to vector<4x8x1xf32>
      %311 = arith.addf %303, %310 : vector<4x8x1xf32>
      %312 = vector.broadcast %311 : vector<4x8x1xf32> to vector<4x8x8xf32>
      %313 = arith.divf %301, %312 : vector<4x8x8xf32>
      %314 = arith.mulf %313, %101 : vector<4x8x8xf32>
      %cst_95 = arith.constant dense<0.000000e+00> : vector<4x8xf32>
      %315 = vector.multi_reduction <add>, %314, %cst_95 [1] : vector<4x8x8xf32> to vector<4x8xf32>
      %316 = vector.shape_cast %315 : vector<4x8xf32> to vector<4x1x8xf32>
      %317 = arith.subf %316, %99 : vector<4x1x8xf32>
      %318 = math.absf %317 : vector<4x1x8xf32>
      %cst_96 = arith.constant dense<0xFF800000> : vector<4x1xf32>
      %319 = vector.multi_reduction <maximumf>, %318, %cst_96 [2] : vector<4x1x8xf32> to vector<4x1xf32>
      %320 = vector.shape_cast %319 : vector<4x1xf32> to vector<4x1x1xf32>
      %cst_97 = arith.constant 0.00999999977 : f32
      %321 = vector.broadcast %cst_97 : f32 to vector<4x1x1xf32>
      %322 = arith.cmpf ole, %320, %321 : vector<4x1x1xf32>
      %323 = vector.shape_cast %309 : vector<4x1x1xi1> to vector<4x1x1xi1>
      %324 = vector.broadcast %323 : vector<4x1x1xi1> to vector<4x8x8xi1>
      %325 = arith.select %324, %301, %314 : vector<4x8x8xi1>, vector<4x8x8xf32>
      %326 = vector.shape_cast %294 : vector<4x1x1xi1> to vector<4x1x1xi1>
      %327 = vector.broadcast %326 : vector<4x1x1xi1> to vector<4x8x8xi1>
      %328 = arith.select %327, %292, %325 : vector<4x8x8xi1>, vector<4x8x8xf32>
      %329 = arith.ori %309, %322 : vector<4x1x1xi1>
      %330 = arith.ori %294, %329 : vector<4x1x1xi1>
      %cst_98 = arith.constant dense<0.000000e+00> : vector<4x8xf32>
      %331 = vector.multi_reduction <add>, %328, %cst_98 [1] : vector<4x8x8xf32> to vector<4x8xf32>
      %332 = vector.shape_cast %331 : vector<4x8xf32> to vector<4x1x8xf32>
      %cst_99 = arith.constant 9.99999993E-9 : f32
      %333 = vector.broadcast %cst_99 : f32 to vector<4x1x8xf32>
      %334 = arith.addf %332, %333 : vector<4x1x8xf32>
      %335 = vector.broadcast %334 : vector<4x1x8xf32> to vector<4x8x8xf32>
      %336 = arith.divf %328, %335 : vector<4x8x8xf32>
      %337 = arith.mulf %336, %103 : vector<4x8x8xf32>
      %cst_100 = arith.constant dense<0.000000e+00> : vector<4x8xf32>
      %338 = vector.multi_reduction <add>, %337, %cst_100 [2] : vector<4x8x8xf32> to vector<4x8xf32>
      %339 = vector.shape_cast %338 : vector<4x8xf32> to vector<4x8x1xf32>
      %340 = arith.subf %339, %97 : vector<4x8x1xf32>
      %341 = math.absf %340 : vector<4x8x1xf32>
      %cst_101 = arith.constant dense<0xFF800000> : vector<4x1xf32>
      %342 = vector.multi_reduction <maximumf>, %341, %cst_101 [1] : vector<4x8x1xf32> to vector<4x1xf32>
      %343 = vector.shape_cast %342 : vector<4x1xf32> to vector<4x1x1xf32>
      %cst_102 = arith.constant 0.00999999977 : f32
      %344 = vector.broadcast %cst_102 : f32 to vector<4x1x1xf32>
      %345 = arith.cmpf ole, %343, %344 : vector<4x1x1xf32>
      %cst_103 = arith.constant 9.99999993E-9 : f32
      %346 = vector.broadcast %cst_103 : f32 to vector<4x8x1xf32>
      %347 = arith.addf %339, %346 : vector<4x8x1xf32>
      %348 = vector.broadcast %347 : vector<4x8x1xf32> to vector<4x8x8xf32>
      %349 = arith.divf %337, %348 : vector<4x8x8xf32>
      %350 = arith.mulf %349, %101 : vector<4x8x8xf32>
      %cst_104 = arith.constant dense<0.000000e+00> : vector<4x8xf32>
      %351 = vector.multi_reduction <add>, %350, %cst_104 [1] : vector<4x8x8xf32> to vector<4x8xf32>
      %352 = vector.shape_cast %351 : vector<4x8xf32> to vector<4x1x8xf32>
      %353 = arith.subf %352, %99 : vector<4x1x8xf32>
      %354 = math.absf %353 : vector<4x1x8xf32>
      %cst_105 = arith.constant dense<0xFF800000> : vector<4x1xf32>
      %355 = vector.multi_reduction <maximumf>, %354, %cst_105 [2] : vector<4x1x8xf32> to vector<4x1xf32>
      %356 = vector.shape_cast %355 : vector<4x1xf32> to vector<4x1x1xf32>
      %cst_106 = arith.constant 0.00999999977 : f32
      %357 = vector.broadcast %cst_106 : f32 to vector<4x1x1xf32>
      %358 = arith.cmpf ole, %356, %357 : vector<4x1x1xf32>
      %359 = vector.shape_cast %345 : vector<4x1x1xi1> to vector<4x1x1xi1>
      %360 = vector.broadcast %359 : vector<4x1x1xi1> to vector<4x8x8xi1>
      %361 = arith.select %360, %337, %350 : vector<4x8x8xi1>, vector<4x8x8xf32>
      %362 = vector.shape_cast %330 : vector<4x1x1xi1> to vector<4x1x1xi1>
      %363 = vector.broadcast %362 : vector<4x1x1xi1> to vector<4x8x8xi1>
      %364 = arith.select %363, %328, %361 : vector<4x8x8xi1>, vector<4x8x8xf32>
      %365 = arith.ori %345, %358 : vector<4x1x1xi1>
      %366 = arith.ori %330, %365 : vector<4x1x1xi1>
      %cst_107 = arith.constant dense<0.000000e+00> : vector<4x8xf32>
      %367 = vector.multi_reduction <add>, %364, %cst_107 [1] : vector<4x8x8xf32> to vector<4x8xf32>
      %368 = vector.shape_cast %367 : vector<4x8xf32> to vector<4x1x8xf32>
      %cst_108 = arith.constant 9.99999993E-9 : f32
      %369 = vector.broadcast %cst_108 : f32 to vector<4x1x8xf32>
      %370 = arith.addf %368, %369 : vector<4x1x8xf32>
      %371 = vector.broadcast %370 : vector<4x1x8xf32> to vector<4x8x8xf32>
      %372 = arith.divf %364, %371 : vector<4x8x8xf32>
      %373 = arith.mulf %372, %103 : vector<4x8x8xf32>
      %cst_109 = arith.constant dense<0.000000e+00> : vector<4x8xf32>
      %374 = vector.multi_reduction <add>, %373, %cst_109 [2] : vector<4x8x8xf32> to vector<4x8xf32>
      %375 = vector.shape_cast %374 : vector<4x8xf32> to vector<4x8x1xf32>
      %376 = arith.subf %375, %97 : vector<4x8x1xf32>
      %377 = math.absf %376 : vector<4x8x1xf32>
      %cst_110 = arith.constant dense<0xFF800000> : vector<4x1xf32>
      %378 = vector.multi_reduction <maximumf>, %377, %cst_110 [1] : vector<4x8x1xf32> to vector<4x1xf32>
      %379 = vector.shape_cast %378 : vector<4x1xf32> to vector<4x1x1xf32>
      %cst_111 = arith.constant 0.00999999977 : f32
      %380 = vector.broadcast %cst_111 : f32 to vector<4x1x1xf32>
      %381 = arith.cmpf ole, %379, %380 : vector<4x1x1xf32>
      %cst_112 = arith.constant 9.99999993E-9 : f32
      %382 = vector.broadcast %cst_112 : f32 to vector<4x8x1xf32>
      %383 = arith.addf %375, %382 : vector<4x8x1xf32>
      %384 = vector.broadcast %383 : vector<4x8x1xf32> to vector<4x8x8xf32>
      %385 = arith.divf %373, %384 : vector<4x8x8xf32>
      %386 = arith.mulf %385, %101 : vector<4x8x8xf32>
      %cst_113 = arith.constant dense<0.000000e+00> : vector<4x8xf32>
      %387 = vector.multi_reduction <add>, %386, %cst_113 [1] : vector<4x8x8xf32> to vector<4x8xf32>
      %388 = vector.shape_cast %387 : vector<4x8xf32> to vector<4x1x8xf32>
      %389 = arith.subf %388, %99 : vector<4x1x8xf32>
      %390 = math.absf %389 : vector<4x1x8xf32>
      %cst_114 = arith.constant dense<0xFF800000> : vector<4x1xf32>
      %391 = vector.multi_reduction <maximumf>, %390, %cst_114 [2] : vector<4x1x8xf32> to vector<4x1xf32>
      %392 = vector.shape_cast %391 : vector<4x1xf32> to vector<4x1x1xf32>
      %cst_115 = arith.constant 0.00999999977 : f32
      %393 = vector.broadcast %cst_115 : f32 to vector<4x1x1xf32>
      %394 = arith.cmpf ole, %392, %393 : vector<4x1x1xf32>
      %395 = vector.shape_cast %381 : vector<4x1x1xi1> to vector<4x1x1xi1>
      %396 = vector.broadcast %395 : vector<4x1x1xi1> to vector<4x8x8xi1>
      %397 = arith.select %396, %373, %386 : vector<4x8x8xi1>, vector<4x8x8xf32>
      %398 = vector.shape_cast %366 : vector<4x1x1xi1> to vector<4x1x1xi1>
      %399 = vector.broadcast %398 : vector<4x1x1xi1> to vector<4x8x8xi1>
      %400 = arith.select %399, %364, %397 : vector<4x8x8xi1>, vector<4x8x8xf32>
      %401 = arith.ori %381, %394 : vector<4x1x1xi1>
      %402 = arith.ori %366, %401 : vector<4x1x1xi1>
      %cst_116 = arith.constant dense<0.000000e+00> : vector<4x8xf32>
      %403 = vector.multi_reduction <add>, %400, %cst_116 [1] : vector<4x8x8xf32> to vector<4x8xf32>
      %404 = vector.shape_cast %403 : vector<4x8xf32> to vector<4x1x8xf32>
      %cst_117 = arith.constant 9.99999993E-9 : f32
      %405 = vector.broadcast %cst_117 : f32 to vector<4x1x8xf32>
      %406 = arith.addf %404, %405 : vector<4x1x8xf32>
      %407 = vector.broadcast %406 : vector<4x1x8xf32> to vector<4x8x8xf32>
      %408 = arith.divf %400, %407 : vector<4x8x8xf32>
      %409 = arith.mulf %408, %103 : vector<4x8x8xf32>
      %cst_118 = arith.constant dense<0.000000e+00> : vector<4x8xf32>
      %410 = vector.multi_reduction <add>, %409, %cst_118 [2] : vector<4x8x8xf32> to vector<4x8xf32>
      %411 = vector.shape_cast %410 : vector<4x8xf32> to vector<4x8x1xf32>
      %412 = arith.subf %411, %97 : vector<4x8x1xf32>
      %413 = math.absf %412 : vector<4x8x1xf32>
      %cst_119 = arith.constant dense<0xFF800000> : vector<4x1xf32>
      %414 = vector.multi_reduction <maximumf>, %413, %cst_119 [1] : vector<4x8x1xf32> to vector<4x1xf32>
      %415 = vector.shape_cast %414 : vector<4x1xf32> to vector<4x1x1xf32>
      %cst_120 = arith.constant 0.00999999977 : f32
      %416 = vector.broadcast %cst_120 : f32 to vector<4x1x1xf32>
      %417 = arith.cmpf ole, %415, %416 : vector<4x1x1xf32>
      %cst_121 = arith.constant 9.99999993E-9 : f32
      %418 = vector.broadcast %cst_121 : f32 to vector<4x8x1xf32>
      %419 = arith.addf %411, %418 : vector<4x8x1xf32>
      %420 = vector.broadcast %419 : vector<4x8x1xf32> to vector<4x8x8xf32>
      %421 = arith.divf %409, %420 : vector<4x8x8xf32>
      %422 = arith.mulf %421, %101 : vector<4x8x8xf32>
      %cst_122 = arith.constant dense<0.000000e+00> : vector<4x8xf32>
      %423 = vector.multi_reduction <add>, %422, %cst_122 [1] : vector<4x8x8xf32> to vector<4x8xf32>
      %424 = vector.shape_cast %423 : vector<4x8xf32> to vector<4x1x8xf32>
      %425 = arith.subf %424, %99 : vector<4x1x8xf32>
      %426 = math.absf %425 : vector<4x1x8xf32>
      %cst_123 = arith.constant dense<0xFF800000> : vector<4x1xf32>
      %427 = vector.multi_reduction <maximumf>, %426, %cst_123 [2] : vector<4x1x8xf32> to vector<4x1xf32>
      %428 = vector.shape_cast %427 : vector<4x1xf32> to vector<4x1x1xf32>
      %cst_124 = arith.constant 0.00999999977 : f32
      %429 = vector.broadcast %cst_124 : f32 to vector<4x1x1xf32>
      %430 = arith.cmpf ole, %428, %429 : vector<4x1x1xf32>
      %431 = vector.shape_cast %417 : vector<4x1x1xi1> to vector<4x1x1xi1>
      %432 = vector.broadcast %431 : vector<4x1x1xi1> to vector<4x8x8xi1>
      %433 = arith.select %432, %409, %422 : vector<4x8x8xi1>, vector<4x8x8xf32>
      %434 = vector.shape_cast %402 : vector<4x1x1xi1> to vector<4x1x1xi1>
      %435 = vector.broadcast %434 : vector<4x1x1xi1> to vector<4x8x8xi1>
      %436 = arith.select %435, %400, %433 : vector<4x8x8xi1>, vector<4x8x8xf32>
      %437 = arith.ori %417, %430 : vector<4x1x1xi1>
      %438 = arith.ori %402, %437 : vector<4x1x1xi1>
      %cst_125 = arith.constant dense<0.000000e+00> : vector<4x8xf32>
      %439 = vector.multi_reduction <add>, %436, %cst_125 [1] : vector<4x8x8xf32> to vector<4x8xf32>
      %440 = vector.shape_cast %439 : vector<4x8xf32> to vector<4x1x8xf32>
      %cst_126 = arith.constant 9.99999993E-9 : f32
      %441 = vector.broadcast %cst_126 : f32 to vector<4x1x8xf32>
      %442 = arith.addf %440, %441 : vector<4x1x8xf32>
      %443 = vector.broadcast %442 : vector<4x1x8xf32> to vector<4x8x8xf32>
      %444 = arith.divf %436, %443 : vector<4x8x8xf32>
      %445 = arith.mulf %444, %103 : vector<4x8x8xf32>
      %cst_127 = arith.constant dense<0.000000e+00> : vector<4x8xf32>
      %446 = vector.multi_reduction <add>, %445, %cst_127 [2] : vector<4x8x8xf32> to vector<4x8xf32>
      %447 = vector.shape_cast %446 : vector<4x8xf32> to vector<4x8x1xf32>
      %448 = arith.subf %447, %97 : vector<4x8x1xf32>
      %449 = math.absf %448 : vector<4x8x1xf32>
      %cst_128 = arith.constant dense<0xFF800000> : vector<4x1xf32>
      %450 = vector.multi_reduction <maximumf>, %449, %cst_128 [1] : vector<4x8x1xf32> to vector<4x1xf32>
      %451 = vector.shape_cast %450 : vector<4x1xf32> to vector<4x1x1xf32>
      %cst_129 = arith.constant 0.00999999977 : f32
      %452 = vector.broadcast %cst_129 : f32 to vector<4x1x1xf32>
      %453 = arith.cmpf ole, %451, %452 : vector<4x1x1xf32>
      %cst_130 = arith.constant 9.99999993E-9 : f32
      %454 = vector.broadcast %cst_130 : f32 to vector<4x8x1xf32>
      %455 = arith.addf %447, %454 : vector<4x8x1xf32>
      %456 = vector.broadcast %455 : vector<4x8x1xf32> to vector<4x8x8xf32>
      %457 = arith.divf %445, %456 : vector<4x8x8xf32>
      %458 = arith.mulf %457, %101 : vector<4x8x8xf32>
      %cst_131 = arith.constant dense<0.000000e+00> : vector<4x8xf32>
      %459 = vector.multi_reduction <add>, %458, %cst_131 [1] : vector<4x8x8xf32> to vector<4x8xf32>
      %460 = vector.shape_cast %459 : vector<4x8xf32> to vector<4x1x8xf32>
      %461 = arith.subf %460, %99 : vector<4x1x8xf32>
      %462 = math.absf %461 : vector<4x1x8xf32>
      %cst_132 = arith.constant dense<0xFF800000> : vector<4x1xf32>
      %463 = vector.multi_reduction <maximumf>, %462, %cst_132 [2] : vector<4x1x8xf32> to vector<4x1xf32>
      %464 = vector.shape_cast %463 : vector<4x1xf32> to vector<4x1x1xf32>
      %cst_133 = arith.constant 0.00999999977 : f32
      %465 = vector.broadcast %cst_133 : f32 to vector<4x1x1xf32>
      %466 = arith.cmpf ole, %464, %465 : vector<4x1x1xf32>
      %467 = vector.shape_cast %453 : vector<4x1x1xi1> to vector<4x1x1xi1>
      %468 = vector.broadcast %467 : vector<4x1x1xi1> to vector<4x8x8xi1>
      %469 = arith.select %468, %445, %458 : vector<4x8x8xi1>, vector<4x8x8xf32>
      %470 = vector.shape_cast %438 : vector<4x1x1xi1> to vector<4x1x1xi1>
      %471 = vector.broadcast %470 : vector<4x1x1xi1> to vector<4x8x8xi1>
      %472 = arith.select %471, %436, %469 : vector<4x8x8xi1>, vector<4x8x8xf32>
      %473 = arith.ori %453, %466 : vector<4x1x1xi1>
      %474 = arith.ori %438, %473 : vector<4x1x1xi1>
      %cst_134 = arith.constant dense<0.000000e+00> : vector<4x8xf32>
      %475 = vector.multi_reduction <add>, %472, %cst_134 [1] : vector<4x8x8xf32> to vector<4x8xf32>
      %476 = vector.shape_cast %475 : vector<4x8xf32> to vector<4x1x8xf32>
      %cst_135 = arith.constant 9.99999993E-9 : f32
      %477 = vector.broadcast %cst_135 : f32 to vector<4x1x8xf32>
      %478 = arith.addf %476, %477 : vector<4x1x8xf32>
      %479 = vector.broadcast %478 : vector<4x1x8xf32> to vector<4x8x8xf32>
      %480 = arith.divf %472, %479 : vector<4x8x8xf32>
      %481 = arith.mulf %480, %103 : vector<4x8x8xf32>
      %cst_136 = arith.constant dense<0.000000e+00> : vector<4x8xf32>
      %482 = vector.multi_reduction <add>, %481, %cst_136 [2] : vector<4x8x8xf32> to vector<4x8xf32>
      %483 = vector.shape_cast %482 : vector<4x8xf32> to vector<4x8x1xf32>
      %484 = arith.subf %483, %97 : vector<4x8x1xf32>
      %485 = math.absf %484 : vector<4x8x1xf32>
      %cst_137 = arith.constant dense<0xFF800000> : vector<4x1xf32>
      %486 = vector.multi_reduction <maximumf>, %485, %cst_137 [1] : vector<4x8x1xf32> to vector<4x1xf32>
      %487 = vector.shape_cast %486 : vector<4x1xf32> to vector<4x1x1xf32>
      %cst_138 = arith.constant 0.00999999977 : f32
      %488 = vector.broadcast %cst_138 : f32 to vector<4x1x1xf32>
      %489 = arith.cmpf ole, %487, %488 : vector<4x1x1xf32>
      %cst_139 = arith.constant 9.99999993E-9 : f32
      %490 = vector.broadcast %cst_139 : f32 to vector<4x8x1xf32>
      %491 = arith.addf %483, %490 : vector<4x8x1xf32>
      %492 = vector.broadcast %491 : vector<4x8x1xf32> to vector<4x8x8xf32>
      %493 = arith.divf %481, %492 : vector<4x8x8xf32>
      %494 = arith.mulf %493, %101 : vector<4x8x8xf32>
      %cst_140 = arith.constant dense<0.000000e+00> : vector<4x8xf32>
      %495 = vector.multi_reduction <add>, %494, %cst_140 [1] : vector<4x8x8xf32> to vector<4x8xf32>
      %496 = vector.shape_cast %495 : vector<4x8xf32> to vector<4x1x8xf32>
      %497 = arith.subf %496, %99 : vector<4x1x8xf32>
      %498 = math.absf %497 : vector<4x1x8xf32>
      %cst_141 = arith.constant dense<0xFF800000> : vector<4x1xf32>
      %499 = vector.multi_reduction <maximumf>, %498, %cst_141 [2] : vector<4x1x8xf32> to vector<4x1xf32>
      %500 = vector.shape_cast %499 : vector<4x1xf32> to vector<4x1x1xf32>
      %cst_142 = arith.constant 0.00999999977 : f32
      %501 = vector.broadcast %cst_142 : f32 to vector<4x1x1xf32>
      %502 = arith.cmpf ole, %500, %501 : vector<4x1x1xf32>
      %503 = vector.shape_cast %489 : vector<4x1x1xi1> to vector<4x1x1xi1>
      %504 = vector.broadcast %503 : vector<4x1x1xi1> to vector<4x8x8xi1>
      %505 = arith.select %504, %481, %494 : vector<4x8x8xi1>, vector<4x8x8xf32>
      %506 = vector.shape_cast %474 : vector<4x1x1xi1> to vector<4x1x1xi1>
      %507 = vector.broadcast %506 : vector<4x1x1xi1> to vector<4x8x8xi1>
      %508 = arith.select %507, %472, %505 : vector<4x8x8xi1>, vector<4x8x8xf32>
      %509 = arith.ori %489, %502 : vector<4x1x1xi1>
      %510 = arith.ori %474, %509 : vector<4x1x1xi1>
      %cst_143 = arith.constant dense<0.000000e+00> : vector<4x8xf32>
      %511 = vector.multi_reduction <add>, %508, %cst_143 [1] : vector<4x8x8xf32> to vector<4x8xf32>
      %512 = vector.shape_cast %511 : vector<4x8xf32> to vector<4x1x8xf32>
      %cst_144 = arith.constant 9.99999993E-9 : f32
      %513 = vector.broadcast %cst_144 : f32 to vector<4x1x8xf32>
      %514 = arith.addf %512, %513 : vector<4x1x8xf32>
      %515 = vector.broadcast %514 : vector<4x1x8xf32> to vector<4x8x8xf32>
      %516 = arith.divf %508, %515 : vector<4x8x8xf32>
      %517 = arith.mulf %516, %103 : vector<4x8x8xf32>
      %cst_145 = arith.constant dense<0.000000e+00> : vector<4x8xf32>
      %518 = vector.multi_reduction <add>, %517, %cst_145 [2] : vector<4x8x8xf32> to vector<4x8xf32>
      %519 = vector.shape_cast %518 : vector<4x8xf32> to vector<4x8x1xf32>
      %520 = arith.subf %519, %97 : vector<4x8x1xf32>
      %521 = math.absf %520 : vector<4x8x1xf32>
      %cst_146 = arith.constant dense<0xFF800000> : vector<4x1xf32>
      %522 = vector.multi_reduction <maximumf>, %521, %cst_146 [1] : vector<4x8x1xf32> to vector<4x1xf32>
      %523 = vector.shape_cast %522 : vector<4x1xf32> to vector<4x1x1xf32>
      %cst_147 = arith.constant 0.00999999977 : f32
      %524 = vector.broadcast %cst_147 : f32 to vector<4x1x1xf32>
      %525 = arith.cmpf ole, %523, %524 : vector<4x1x1xf32>
      %cst_148 = arith.constant 9.99999993E-9 : f32
      %526 = vector.broadcast %cst_148 : f32 to vector<4x8x1xf32>
      %527 = arith.addf %519, %526 : vector<4x8x1xf32>
      %528 = vector.broadcast %527 : vector<4x8x1xf32> to vector<4x8x8xf32>
      %529 = arith.divf %517, %528 : vector<4x8x8xf32>
      %530 = arith.mulf %529, %101 : vector<4x8x8xf32>
      %cst_149 = arith.constant dense<0.000000e+00> : vector<4x8xf32>
      %531 = vector.multi_reduction <add>, %530, %cst_149 [1] : vector<4x8x8xf32> to vector<4x8xf32>
      %532 = vector.shape_cast %531 : vector<4x8xf32> to vector<4x1x8xf32>
      %533 = arith.subf %532, %99 : vector<4x1x8xf32>
      %534 = math.absf %533 : vector<4x1x8xf32>
      %cst_150 = arith.constant dense<0xFF800000> : vector<4x1xf32>
      %535 = vector.multi_reduction <maximumf>, %534, %cst_150 [2] : vector<4x1x8xf32> to vector<4x1xf32>
      %536 = vector.shape_cast %535 : vector<4x1xf32> to vector<4x1x1xf32>
      %cst_151 = arith.constant 0.00999999977 : f32
      %537 = vector.broadcast %cst_151 : f32 to vector<4x1x1xf32>
      %538 = arith.cmpf ole, %536, %537 : vector<4x1x1xf32>
      %539 = vector.shape_cast %525 : vector<4x1x1xi1> to vector<4x1x1xi1>
      %540 = vector.broadcast %539 : vector<4x1x1xi1> to vector<4x8x8xi1>
      %541 = arith.select %540, %517, %530 : vector<4x8x8xi1>, vector<4x8x8xf32>
      %542 = vector.shape_cast %510 : vector<4x1x1xi1> to vector<4x1x1xi1>
      %543 = vector.broadcast %542 : vector<4x1x1xi1> to vector<4x8x8xi1>
      %544 = arith.select %543, %508, %541 : vector<4x8x8xi1>, vector<4x8x8xf32>
      %545 = arith.ori %525, %538 : vector<4x1x1xi1>
      %546 = arith.ori %510, %545 : vector<4x1x1xi1>
      %c1_i32 = arith.constant 1 : i32
      %547 = arith.addi %arg10, %c1_i32 : i32
      %548 = arith.extui %546 : vector<4x1x1xi1> to vector<4x1x1xi32>
      %549 = arith.sitofp %548 : vector<4x1x1xi32> to vector<4x1x1xf32>
      scf.yield %547, %544, %549 : i32, vector<4x8x8xf32>, vector<4x1x1xf32>
    }
    %c0_36 = arith.constant 0 : index
    %c0_37 = arith.constant 0 : index
    %c0_38 = arith.constant 0 : index
    %106 = vector.load %arg8[%c0_36, %c0_37, %c0_38] : memref<4x8x8xf32, #tpu.memory_space<vmem>>, vector<4x8x8xf32>
    tpu.vector_store %arg8[%c0_36, %c0_37, %c0_38], %105#1 {strides = array<i32>} : memref<4x8x8xf32, #tpu.memory_space<vmem>>, vector<4x8x8xf32>,
    %cst_39 = arith.constant dense<0.000000e+00> : vector<4x8xf32>
    %107 = vector.multi_reduction <add>, %105#1, %cst_39 [2] : vector<4x8x8xf32> to vector<4x8xf32>
    %108 = vector.shape_cast %107 : vector<4x8xf32> to vector<4x8x1xf32>
    %cst_40 = arith.constant 9.99999993E-9 : f32
    %109 = vector.broadcast %cst_40 : f32 to vector<4x8x1xf32>
    %110 = arith.addf %108, %109 : vector<4x8x1xf32>
    %111 = vector.broadcast %110 : vector<4x8x1xf32> to vector<4x8x8xf32>
    %112 = arith.divf %105#1, %111 : vector<4x8x8xf32>
    %113 = vector.broadcast %97 : vector<4x8x1xf32> to vector<4x8x8xf32>
    %114 = arith.mulf %112, %113 : vector<4x8x8xf32>
    %cst_41 = arith.constant dense<0.000000e+00> : vector<8x8xf32>
    %115 = vector.multi_reduction <add>, %114, %cst_41 [0] : vector<4x8x8xf32> to vector<8x8xf32>
    %cst_42 = arith.constant 9.99999993E-9 : f32
    %116 = vector.broadcast %cst_42 : f32 to vector<4x8x8xf32>
    %117 = arith.addf %112, %116 : vector<4x8x8xf32>
    %118 = math.log %117 : vector<4x8x8xf32>
    %cst_43 = arith.constant 9.99999993E-9 : f32
    %119 = vector.broadcast %cst_43 : f32 to vector<8x8xf32>
    %120 = arith.addf %115, %119 : vector<8x8xf32>
    %121 = math.log %120 : vector<8x8xf32>
    %122 = vector.shape_cast %121 : vector<8x8xf32> to vector<1x8x8xf32>
    %123 = vector.broadcast %122 : vector<1x8x8xf32> to vector<4x8x8xf32>
    %124 = arith.subf %118, %123 : vector<4x8x8xf32>
    %125 = vector.broadcast %97 : vector<4x8x1xf32> to vector<4x8x8xf32>
    %126 = arith.mulf %125, %112 : vector<4x8x8xf32>
    %c0_44 = arith.constant 0 : index
    %c0_45 = arith.constant 0 : index
    %127 = vector.load %arg7[%c0_44, %c0_45] : memref<1x4xf32, #tpu.memory_space<vmem>>, vector<1x4xf32>
    %128 = math.log %127 : vector<1x4xf32>
    %c0_46 = arith.constant 0 : index
    %c0_47 = arith.constant 0 : index
    %129 = vector.load %arg7[%c0_46, %c0_47] : memref<1x4xf32, #tpu.memory_space<vmem>>, vector<1x4xf32>
    %cst_48 = arith.constant 9.99999993E-9 : f32
    %130 = vector.broadcast %cst_48 : f32 to vector<1x4xf32>
    %131 = arith.addf %129, %130 : vector<1x4xf32>
    %132 = math.log %131 : vector<1x4xf32>
    %133 = vector.shape_cast %132 : vector<1x4xf32> to vector<4x1x1xf32>
    %134 = arith.mulf %126, %124 : vector<4x8x8xf32>
    %135 = vector.shape_cast %134 : vector<4x8x8xf32> to vector<1x4x8x8xf32>
    %cst_49 = arith.constant dense<0.000000e+00> : vector<1xf32>
    %136 = vector.multi_reduction <add>, %135, %cst_49 [1, 2, 3] : vector<1x4x8x8xf32> to vector<1xf32>
    %137 = vector.shape_cast %136 : vector<1xf32> to vector<1x1x1x1xf32>
    %138 = vector.extract %137[0, 0, 0, 0] : f32 from vector<1x1x1x1xf32>
    %cst_50 = arith.constant 1.250000e-01 : f32
    %139 = arith.mulf %138, %cst_50 : f32
    %cst_51 = arith.constant 9.99999993E-9 : f32
    %140 = vector.broadcast %cst_51 : f32 to vector<4x8x1xf32>
    %141 = arith.addf %97, %140 : vector<4x8x1xf32>
    %142 = math.log %141 : vector<4x8x1xf32>
    %143 = vector.broadcast %133 : vector<4x1x1xf32> to vector<4x8x1xf32>
    %144 = arith.subf %142, %143 : vector<4x8x1xf32>
    %145 = vector.broadcast %144 : vector<4x8x1xf32> to vector<4x8x8xf32>
    %146 = arith.mulf %126, %145 : vector<4x8x8xf32>
    %147 = vector.shape_cast %146 : vector<4x8x8xf32> to vector<1x4x8x8xf32>
    %cst_52 = arith.constant dense<0.000000e+00> : vector<1xf32>
    %148 = vector.multi_reduction <add>, %147, %cst_52 [1, 2, 3] : vector<1x4x8x8xf32> to vector<1xf32>
    %149 = vector.shape_cast %148 : vector<1xf32> to vector<1x1x1x1xf32>
    %150 = vector.extract %149[0, 0, 0, 0] : f32 from vector<1x1x1x1xf32>
    %cst_53 = arith.constant 1.250000e-01 : f32
    %151 = arith.mulf %150, %cst_53 : f32
    %152 = arith.addf %139, %151 : f32
    %153 = math.log %31 : vector<8x4xf32>
    %154 = vector.broadcast %128 : vector<1x4xf32> to vector<8x4xf32>
    %155 = arith.subf %153, %154 : vector<8x4xf32>
    %156 = arith.mulf %31, %155 : vector<8x4xf32>
    %157 = vector.shape_cast %156 : vector<8x4xf32> to vector<1x8x4xf32>
    %cst_54 = arith.constant dense<0.000000e+00> : vector<1xf32>
    %158 = vector.multi_reduction <add>, %157, %cst_54 [1, 2] : vector<1x8x4xf32> to vector<1xf32>
    %159 = vector.shape_cast %158 : vector<1xf32> to vector<1x1x1xf32>
    %160 = vector.extract %159[0, 0, 0] : f32 from vector<1x1x1xf32>
    %cst_55 = arith.constant 1.250000e-01 : f32
    %161 = arith.mulf %160, %cst_55 : f32
    %162 = math.log %41 : vector<8x4xf32>
    %163 = vector.broadcast %128 : vector<1x4xf32> to vector<8x4xf32>
    %164 = arith.subf %162, %163 : vector<8x4xf32>
    %165 = arith.mulf %41, %164 : vector<8x4xf32>
    %166 = vector.shape_cast %165 : vector<8x4xf32> to vector<1x8x4xf32>
    %cst_56 = arith.constant dense<0.000000e+00> : vector<1xf32>
    %167 = vector.multi_reduction <add>, %166, %cst_56 [1, 2] : vector<1x8x4xf32> to vector<1xf32>
    %168 = vector.shape_cast %167 : vector<1xf32> to vector<1x1x1xf32>
    %169 = vector.extract %168[0, 0, 0] : f32 from vector<1x1x1xf32>
    %cst_57 = arith.constant 1.250000e-01 : f32
    %170 = arith.mulf %169, %cst_57 : f32
    %171 = math.log %51 : vector<8x4xf32>
    %172 = vector.broadcast %128 : vector<1x4xf32> to vector<8x4xf32>
    %173 = arith.subf %171, %172 : vector<8x4xf32>
    %174 = arith.mulf %51, %173 : vector<8x4xf32>
    %175 = vector.shape_cast %174 : vector<8x4xf32> to vector<1x8x4xf32>
    %cst_58 = arith.constant dense<0.000000e+00> : vector<1xf32>
    %176 = vector.multi_reduction <add>, %175, %cst_58 [1, 2] : vector<1x8x4xf32> to vector<1xf32>
    %177 = vector.shape_cast %176 : vector<1xf32> to vector<1x1x1xf32>
    %178 = vector.extract %177[0, 0, 0] : f32 from vector<1x1x1xf32>
    %cst_59 = arith.constant 1.250000e-01 : f32
    %179 = arith.mulf %178, %cst_59 : f32
    %c0_60 = arith.constant 0 : index
    %180 = memref.load %arg9[%c0_60] : memref<5xf32, #tpu.memory_space<smem>>
    memref.store %139, %arg9[%c0_60] : memref<5xf32, #tpu.memory_space<smem>>
    %c1 = arith.constant 1 : index
    %181 = memref.load %arg9[%c1] : memref<5xf32, #tpu.memory_space<smem>>
    memref.store %161, %arg9[%c1] : memref<5xf32, #tpu.memory_space<smem>>
    %c2 = arith.constant 2 : index
    %182 = memref.load %arg9[%c2] : memref<5xf32, #tpu.memory_space<smem>>
    memref.store %170, %arg9[%c2] : memref<5xf32, #tpu.memory_space<smem>>
    %c3 = arith.constant 3 : index
    %183 = memref.load %arg9[%c3] : memref<5xf32, #tpu.memory_space<smem>>
    memref.store %179, %arg9[%c3] : memref<5xf32, #tpu.memory_space<smem>>
    %c4 = arith.constant 4 : index
    %184 = memref.load %arg9[%c4] : memref<5xf32, #tpu.memory_space<smem>>
    memref.store %152, %arg9[%c4] : memref<5xf32, #tpu.memory_space<smem>>
    return
  }
}

</mosaic_0001>

<llo_original>
// kernel: ce_alignment_information_forward.1
$region0: #{ce_alignment_information_forward.1}
  #allocation0 [shape = 'u32[]', space=smem, size = 0x4, offset = 0x4, fixed_abs, tag = 'smem constant byte address 0x4 - core index']
  #allocation1 [shape = 'u32[144,128]{1,0:T(1,128)}', space=vmem, size = 0x12000, scoped, tag = 'internal scratch']
  %s0 = inlined_call_operand.vmem [shape: f32[8,32], index: 0, kind: input, shape index: {}]
  %s1 = inlined_call_operand.vmem [shape: f32[32,160], index: 1, kind: input, shape index: {}]
  %s2 = inlined_call_operand.vmem [shape: f32[1,160], index: 2, kind: input, shape index: {}]
  %s3 = inlined_call_operand.vmem [shape: f32[160,160], index: 3, kind: input, shape index: {}]
  %s4 = inlined_call_operand.vmem [shape: f32[1,160], index: 4, kind: input, shape index: {}]
  %s5 = inlined_call_operand.vmem [shape: f32[160,140], index: 5, kind: input, shape index: {}]
  %s6 = inlined_call_operand.vmem [shape: f32[1,140], index: 6, kind: input, shape index: {}]
  %s7 = inlined_call_operand.vmem [shape: f32[1,4], index: 7, kind: input, shape index: {}]
  %s8 = inlined_call_operand.vmem [shape: f32[4,8,8], index: 8, kind: output, shape index: {0}]
  %s9 = inlined_call_operand.vmem [shape: f32[5], index: 9, kind: output, shape index: {1}]
  %10 = xla_tuple %s8, %s9
  %s11 = sld [smem:[#allocation0]]
  $region57: #{ce_alignment_information_forward.1} parent=0
    _
  %s13 = ssub.s32 1, %s11
  %s14 = scalar_select 0, %s13, %s11
  $region1: #{ce_alignment_information_forward.1} parent=0
    #allocation2 [shape = 'u8[512]{0}', space=smem, size = 0x200, scoped, tag = 'output window, operand 1, single buffered']
    #allocation3 [shape = 's32[1]{0}', space=sflag, size = 0x4, scoped, tag = 'scoped memory for ce_alignment_information_forward.1']
    %15 = vsyncpa [#allocation3], 0
    // Predicated region
    $region2: #{ce_alignment_information_forward.1} parent=1 // pred_check
      _
    $region3: #{ce_alignment_information_forward.1} parent=1 // pred_check_branch
      %17 = sbr.rel (0) target = $region5
    $region4: #{ce_alignment_information_forward.1} parent=1 // pred_region
      _
    $region5: #{ce_alignment_information_forward.1} parent=1 // pred_fallthru
      _
    // Predicated region
    $region6: #{ce_alignment_information_forward.1} parent=1 // pred_check
      _
    $region7: #{ce_alignment_information_forward.1} parent=1 // pred_check_branch
      %19 = sbr.rel (0) target = $region9
    $region8: #{ce_alignment_information_forward.1} parent=1 // pred_region
      _
    $region9: #{ce_alignment_information_forward.1} parent=1 // pred_fallthru
      _
    // Predicated region
    $region10: #{ce_alignment_information_forward.1} parent=1 // pred_check
      _
    $region11: #{ce_alignment_information_forward.1} parent=1 // pred_check_branch
      %21 = sbr.rel (0) target = $region13
    $region12: #{ce_alignment_information_forward.1} parent=1 // pred_region
      _
    $region13: #{ce_alignment_information_forward.1} parent=1 // pred_fallthru
      _
    // Predicated region
    $region14: #{ce_alignment_information_forward.1} parent=1 // pred_check
      _
    $region15: #{ce_alignment_information_forward.1} parent=1 // pred_check_branch
      %23 = sbr.rel (0) target = $region17
    $region16: #{ce_alignment_information_forward.1} parent=1 // pred_region
      _
    $region17: #{ce_alignment_information_forward.1} parent=1 // pred_fallthru
      _
    // Predicated region
    $region18: #{ce_alignment_information_forward.1} parent=1 // pred_check
      _
    $region19: #{ce_alignment_information_forward.1} parent=1 // pred_check_branch
      %25 = sbr.rel (0) target = $region21
    $region20: #{ce_alignment_information_forward.1} parent=1 // pred_region
      _
    $region21: #{ce_alignment_information_forward.1} parent=1 // pred_fallthru
      _
    // Predicated region
    $region22: #{ce_alignment_information_forward.1} parent=1 // pred_check
      _
    $region23: #{ce_alignment_information_forward.1} parent=1 // pred_check_branch
      %27 = sbr.rel (0) target = $region25
    $region24: #{ce_alignment_information_forward.1} parent=1 // pred_region
      _
    $region25: #{ce_alignment_information_forward.1} parent=1 // pred_fallthru
      _
    // Predicated region
    $region26: #{ce_alignment_information_forward.1} parent=1 // pred_check
      _
    $region27: #{ce_alignment_information_forward.1} parent=1 // pred_check_branch
      %29 = sbr.rel (0) target = $region29
    $region28: #{ce_alignment_information_forward.1} parent=1 // pred_region
      _
    $region29: #{ce_alignment_information_forward.1} parent=1 // pred_fallthru
      _
    // Predicated region
    $region30: #{ce_alignment_information_forward.1} parent=1 // pred_check
      _
    $region31: #{ce_alignment_information_forward.1} parent=1 // pred_check_branch
      %31 = sbr.rel (0) target = $region33
    $region32: #{ce_alignment_information_forward.1} parent=1 // pred_region
      _
    $region33: #{ce_alignment_information_forward.1} parent=1 // pred_fallthru
      _
    %v32 = vld [vmem:[%s0] sm:$0xff]
    %v33 = vld [vmem:[%s1] sm:$0xff]
    %v34 = vld [vmem:[%s1 + $0x8] sm:$0xff]
    %v35 = vld [vmem:[%s1 + $0x10] sm:$0xff]
    %v36 = vld [vmem:[%s1 + $0x18] sm:$0xff]
    %v37 = vld [vmem:[%s1 + $0x20] sm:$0xff]
    %v38 = vld [vmem:[%s1 + $0x28] sm:$0xff]
    %v39 = vld [vmem:[%s1 + $0x30] sm:$0xff]
    %v40 = vld [vmem:[%s1 + $0x38] sm:$0xff]
    %v41 = vld [vmem:[%s2] sm:$0x3]
    %v43 = vlaneseq
    %v44 = vshrl.u32 %v43, 7
    %v45 = vsub.s32 0, %v44
    %v46 = vrot.slane %v41, %v45
    %v47 = vlaneseq
    %v48 = vshrl.u32 %v47, 7
    %v49 = vsub.s32 1, %v48
    %v50 = vrot.slane %v41, %v49
    %vm53 = vcmask 261120
    %v55 = vsel %vm53, %v32, 0
    %57 = vmatprep.subr.mxu0 %v34
    %58 = vmatpush1.msra.mxu0 %v33
    %59 = vmatprep.subr.mxu0 %v36
    %60 = vmatpush1.msra.mxu0 %v35
    %61 = vmatprep.subr.mxu0 %v38
    %62 = vmatpush1.msra.mxu0 %v37
    %63 = vmatprep.subr.mxu0 %v40
    %64 = vmatpush1.msra.mxu0 %v39
    %65 = vmatprep.subr.mxu0 0.0
    %66 = vmatpush1.msra.mxu0 0.0
    %67 = vmatprep.subr.mxu0 0.0
    %68 = vmatpush1.msra.mxu0 0.0
    %69 = vmatprep.subr.mxu0 0.0
    %70 = vmatpush1.msra.mxu0 0.0
    %71 = vmatprep.subr.mxu0 0.0
    %72 = vmatpush1.msra.mxu0 0.0
    %73 = vmatprep.subr.mxu0 0.0
    %74 = vmatpush1.msra.mxu0 0.0
    %75 = vmatprep.subr.mxu0 0.0
    %76 = vmatpush1.msra.mxu0 0.0
    %77 = vmatprep.subr.mxu0 0.0
    %78 = vmatpush1.msra.mxu0 0.0
    %79 = vmatprep.subr.mxu0 0.0
    %80 = vmatpush1.msra.mxu0 0.0
    %81 = vmatprep.subr.mxu0 0.0
    %82 = vmatpush1.msra.mxu0 0.0
    %83 = vmatprep.subr.mxu0 0.0
    %84 = vmatpush1.msra.mxu0 0.0
    %85 = vmatprep.subr.mxu0 0.0
    %86 = vmatpush1.msra.mxu0 0.0
    %87 = vmatprep.subr.mxu0 0.0
    %88 = vmatpush1.msra.mxu0 0.0
    %89 = vmatprep.subr.mxu0 0.0
    %90 = vmatpush1.msra.mxu0 0.0
    %91 = vmatprep.subr.mxu0 0.0
    %92 = vmatpush1.msra.mxu0 0.0
    %93 = vmatprep.subr.mxu0 0.0
    %94 = vmatpush1.msra.mxu0 0.0
    %95 = vmatprep.subr.mxu0 0.0
    %96 = vmatpush1.msra.mxu0 0.0
    %97 = vmatprep.subr.mxu0 0.0
    %98 = vmatpush1.msra.mxu0 0.0
    %99 = vmatprep.subr.mxu0 0.0
    %100 = vmatpush1.msra.mxu0 0.0
    %101 = vmatprep.subr.mxu0 0.0
    %102 = vmatpush1.msra.mxu0 0.0
    %103 = vmatprep.subr.mxu0 0.0
    %104 = vmatpush1.msra.mxu0 0.0
    %105 = vmatprep.subr.mxu0 0.0
    %106 = vmatpush1.msra.mxu0 0.0
    %107 = vmatprep.subr.mxu0 0.0
    %108 = vmatpush1.msra.mxu0 0.0
    %109 = vmatprep.subr.mxu0 0.0
    %110 = vmatpush1.msra.mxu0 0.0
    %111 = vmatprep.subr.mxu0 0.0
    %112 = vmatpush1.msra.mxu0 0.0
    %113 = vmatprep.subr.mxu0 0.0
    %114 = vmatpush1.msra.mxu0 0.0
    %115 = vmatprep.subr.mxu0 0.0
    %116 = vmatpush1.msra.mxu0 0.0
    %117 = vmatprep.subr.mxu0 0.0
    %118 = vmatpush1.msra.mxu0 0.0
    %119 = vmatprep.subr.mxu0 0.0
    %120 = vmatpush1.msra.mxu0 0.0
    %121 = vmatprep.mubr.f32.mxu0 0.0
    %122 = vmatmul.mubr.f32.gmra.mrb[0].mxu0 %v55
    %v123 = vpop.f32.mrb[0].mxu0
    %v124 = vadd.f32 %v46, %v123
    %v125 = vpop.f32.mrb[0].mxu0
    %v126 = vadd.f32 %v50, %v125
    %127 = vdwg.mxu0
    %v128 = vmax.f32 %v124, 0.0
    %v129 = vmax.f32 %v126, 0.0
    %v130 = vld [vmem:[%s3] sm:$0xff]
    %v131 = vld [vmem:[%s3 + $0x8] sm:$0xff]
    %v132 = vld [vmem:[%s3 + $0x10] sm:$0xff]
    %v133 = vld [vmem:[%s3 + $0x18] sm:$0xff]
    %v134 = vld [vmem:[%s3 + $0x20] sm:$0xff]
    %v135 = vld [vmem:[%s3 + $0x28] sm:$0xff]
    %v136 = vld [vmem:[%s3 + $0x30] sm:$0xff]
    %v137 = vld [vmem:[%s3 + $0x38] sm:$0xff]
    %v138 = vld [vmem:[%s3 + $0x40] sm:$0xff]
    %v139 = vld [vmem:[%s3 + $0x48] sm:$0xff]
    %v140 = vld [vmem:[%s3 + $0x50] sm:$0xff]
    %v141 = vld [vmem:[%s3 + $0x58] sm:$0xff]
    %v142 = vld [vmem:[%s3 + $0x60] sm:$0xff]
    %v143 = vld [vmem:[%s3 + $0x68] sm:$0xff]
    %v144 = vld [vmem:[%s3 + $0x70] sm:$0xff]
    %v145 = vld [vmem:[%s3 + $0x78] sm:$0xff]
    %v146 = vld [vmem:[%s3 + $0x80] sm:$0xff]
    %v147 = vld [vmem:[%s3 + $0x88] sm:$0xff]
    %v148 = vld [vmem:[%s3 + $0x90] sm:$0xff]
    %v149 = vld [vmem:[%s3 + $0x98] sm:$0xff]
    %v150 = vld [vmem:[%s3 + $0xa0] sm:$0xff]
    %v151 = vld [vmem:[%s3 + $0xa8] sm:$0xff]
    %v152 = vld [vmem:[%s3 + $0xb0] sm:$0xff]
    %v153 = vld [vmem:[%s3 + $0xb8] sm:$0xff]
    %v154 = vld [vmem:[%s3 + $0xc0] sm:$0xff]
    %v155 = vld [vmem:[%s3 + $0xc8] sm:$0xff]
    %v156 = vld [vmem:[%s3 + $0xd0] sm:$0xff]
    %v157 = vld [vmem:[%s3 + $0xd8] sm:$0xff]
    %v158 = vld [vmem:[%s3 + $0xe0] sm:$0xff]
    %v159 = vld [vmem:[%s3 + $0xe8] sm:$0xff]
    %v160 = vld [vmem:[%s3 + $0xf0] sm:$0xff]
    %v161 = vld [vmem:[%s3 + $0xf8] sm:$0xff]
    %v162 = vld [vmem:[%s3 + $0x100] sm:$0xff]
    %v163 = vld [vmem:[%s3 + $0x108] sm:$0xff]
    %v164 = vld [vmem:[%s3 + $0x110] sm:$0xff]
    %v165 = vld [vmem:[%s3 + $0x118] sm:$0xff]
    %v166 = vld [vmem:[%s3 + $0x120] sm:$0xff]
    %v167 = vld [vmem:[%s3 + $0x128] sm:$0xff]
    %v168 = vld [vmem:[%s3 + $0x130] sm:$0xff]
    %v169 = vld [vmem:[%s3 + $0x138] sm:$0xff]
    %v170 = vld [vmem:[%s4] sm:$0x3]
    %v172 = vlaneseq
    %v173 = vshrl.u32 %v172, 7
    %v174 = vsub.s32 0, %v173
    %v175 = vrot.slane %v170, %v174
    %v176 = vlaneseq
    %v177 = vshrl.u32 %v176, 7
    %v178 = vsub.s32 1, %v177
    %v179 = vrot.slane %v170, %v178
    %v183 = vsel %vm53, %v129, 0
    %185 = vmatprep.subr.mxu0 %v131
    %186 = vmatpush1.msra.mxu0 %v130
    %187 = vmatprep.subr.mxu0 %v133
    %188 = vmatpush1.msra.mxu0 %v132
    %189 = vmatprep.subr.mxu0 %v135
    %190 = vmatpush1.msra.mxu0 %v134
    %191 = vmatprep.subr.mxu0 %v137
    %192 = vmatpush1.msra.mxu0 %v136
    %193 = vmatprep.subr.mxu0 %v139
    %194 = vmatpush1.msra.mxu0 %v138
    %195 = vmatprep.subr.mxu0 %v141
    %196 = vmatpush1.msra.mxu0 %v140
    %197 = vmatprep.subr.mxu0 %v143
    %198 = vmatpush1.msra.mxu0 %v142
    %199 = vmatprep.subr.mxu0 %v145
    %200 = vmatpush1.msra.mxu0 %v144
    %201 = vmatprep.subr.mxu0 %v147
    %202 = vmatpush1.msra.mxu0 %v146
    %203 = vmatprep.subr.mxu0 %v149
    %204 = vmatpush1.msra.mxu0 %v148
    %205 = vmatprep.subr.mxu0 %v151
    %206 = vmatpush1.msra.mxu0 %v150
    %207 = vmatprep.subr.mxu0 %v153
    %208 = vmatpush1.msra.mxu0 %v152
    %209 = vmatprep.subr.mxu0 %v155
    %210 = vmatpush1.msra.mxu0 %v154
    %211 = vmatprep.subr.mxu0 %v157
    %212 = vmatpush1.msra.mxu0 %v156
    %213 = vmatprep.subr.mxu0 %v159
    %214 = vmatpush1.msra.mxu0 %v158
    %215 = vmatprep.subr.mxu0 %v161
    %216 = vmatpush1.msra.mxu0 %v160
    %217 = vmatprep.subr.mxu0 %v163
    %218 = vmatpush1.msra.mxu0 %v162
    %219 = vmatprep.subr.mxu0 %v165
    %220 = vmatpush1.msra.mxu0 %v164
    %221 = vmatprep.subr.mxu0 %v167
    %222 = vmatpush1.msra.mxu0 %v166
    %223 = vmatprep.subr.mxu0 %v169
    %224 = vmatpush1.msra.mxu0 %v168
    %225 = vmatprep.subr.mxu0 0.0
    %226 = vmatpush1.msra.mxu0 0.0
    %227 = vmatprep.subr.mxu0 0.0
    %228 = vmatpush1.msra.mxu0 0.0
    %229 = vmatprep.subr.mxu0 0.0
    %230 = vmatpush1.msra.mxu0 0.0
    %231 = vmatprep.subr.mxu0 0.0
    %232 = vmatpush1.msra.mxu0 0.0
    %233 = vmatprep.subr.mxu0 0.0
    %234 = vmatpush1.msra.mxu0 0.0
    %235 = vmatprep.subr.mxu0 0.0
    %236 = vmatpush1.msra.mxu0 0.0
    %237 = vmatprep.subr.mxu0 0.0
    %238 = vmatpush1.msra.mxu0 0.0
    %239 = vmatprep.subr.mxu0 0.0
    %240 = vmatpush1.msra.mxu0 0.0
    %241 = vmatprep.subr.mxu0 0.0
    %242 = vmatpush1.msra.mxu0 0.0
    %243 = vmatprep.subr.mxu0 0.0
    %244 = vmatpush1.msra.mxu0 0.0
    %245 = vmatprep.subr.mxu0 0.0
    %246 = vmatpush1.msra.mxu0 0.0
    %247 = vmatprep.subr.mxu0 0.0
    %248 = vmatpush1.msra.mxu0 0.0
    %249 = vmatprep.mubr.f32.mxu0 %v183
    %250 = vmatmul.mubr.f32.gmra.mrb[0].mxu0 %v128
    %v251 = vpop.f32.mrb[0].mxu0
    %v252 = vadd.f32 %v175, %v251
    %v253 = vpop.f32.mrb[0].mxu0
    %v254 = vadd.f32 %v179, %v253
    %255 = vdwg.mxu0
    %v256 = vmax.f32 %v252, 0.0
    %v257 = vmax.f32 %v254, 0.0
    %v258 = vld [vmem:[%s5] sm:$0xff]
    %v259 = vld [vmem:[%s5 + $0x8] sm:$0xff]
    %v260 = vld [vmem:[%s5 + $0x10] sm:$0xff]
    %v261 = vld [vmem:[%s5 + $0x18] sm:$0xff]
    %v262 = vld [vmem:[%s5 + $0x20] sm:$0xff]
    %v263 = vld [vmem:[%s5 + $0x28] sm:$0xff]
    %v264 = vld [vmem:[%s5 + $0x30] sm:$0xff]
    %v265 = vld [vmem:[%s5 + $0x38] sm:$0xff]
    %v266 = vld [vmem:[%s5 + $0x40] sm:$0xff]
    %v267 = vld [vmem:[%s5 + $0x48] sm:$0xff]
    %v268 = vld [vmem:[%s5 + $0x50] sm:$0xff]
    %v269 = vld [vmem:[%s5 + $0x58] sm:$0xff]
    %v270 = vld [vmem:[%s5 + $0x60] sm:$0xff]
    %v271 = vld [vmem:[%s5 + $0x68] sm:$0xff]
    %v272 = vld [vmem:[%s5 + $0x70] sm:$0xff]
    %v273 = vld [vmem:[%s5 + $0x78] sm:$0xff]
    %v274 = vld [vmem:[%s5 + $0x80] sm:$0xff]
    %v275 = vld [vmem:[%s5 + $0x88] sm:$0xff]
    %v276 = vld [vmem:[%s5 + $0x90] sm:$0xff]
    %v277 = vld [vmem:[%s5 + $0x98] sm:$0xff]
    %v278 = vld [vmem:[%s5 + $0xa0] sm:$0xff]
    %v279 = vld [vmem:[%s5 + $0xa8] sm:$0xff]
    %v280 = vld [vmem:[%s5 + $0xb0] sm:$0xff]
    %v281 = vld [vmem:[%s5 + $0xb8] sm:$0xff]
    %v282 = vld [vmem:[%s5 + $0xc0] sm:$0xff]
    %v283 = vld [vmem:[%s5 + $0xc8] sm:$0xff]
    %v284 = vld [vmem:[%s5 + $0xd0] sm:$0xff]
    %v285 = vld [vmem:[%s5 + $0xd8] sm:$0xff]
    %v286 = vld [vmem:[%s5 + $0xe0] sm:$0xff]
    %v287 = vld [vmem:[%s5 + $0xe8] sm:$0xff]
    %v288 = vld [vmem:[%s5 + $0xf0] sm:$0xff]
    %v289 = vld [vmem:[%s5 + $0xf8] sm:$0xff]
    %v290 = vld [vmem:[%s5 + $0x100] sm:$0xff]
    %v291 = vld [vmem:[%s5 + $0x108] sm:$0xff]
    %v292 = vld [vmem:[%s5 + $0x110] sm:$0xff]
    %v293 = vld [vmem:[%s5 + $0x118] sm:$0xff]
    %v294 = vld [vmem:[%s5 + $0x120] sm:$0xff]
    %v295 = vld [vmem:[%s5 + $0x128] sm:$0xff]
    %v296 = vld [vmem:[%s5 + $0x130] sm:$0xff]
    %v297 = vld [vmem:[%s5 + $0x138] sm:$0xff]
    %v298 = vld [vmem:[%s6] sm:$0x3]
    %v300 = vlaneseq
    %v301 = vshrl.u32 %v300, 7
    %v302 = vsub.s32 0, %v301
    %v303 = vrot.slane %v298, %v302
    %v304 = vlaneseq
    %v305 = vshrl.u32 %v304, 7
    %v306 = vsub.s32 1, %v305
    %v307 = vrot.slane %v298, %v306
    %v311 = vsel %vm53, %v257, 0
    %313 = vmatprep.subr.mxu0 %v259
    %314 = vmatpush1.msra.mxu0 %v258
    %315 = vmatprep.subr.mxu0 %v261
    %316 = vmatpush1.msra.mxu0 %v260
    %317 = vmatprep.subr.mxu0 %v263
    %318 = vmatpush1.msra.mxu0 %v262
    %319 = vmatprep.subr.mxu0 %v265
    %320 = vmatpush1.msra.mxu0 %v264
    %321 = vmatprep.subr.mxu0 %v267
    %322 = vmatpush1.msra.mxu0 %v266
    %323 = vmatprep.subr.mxu0 %v269
    %324 = vmatpush1.msra.mxu0 %v268
    %325 = vmatprep.subr.mxu0 %v271
    %326 = vmatpush1.msra.mxu0 %v270
    %327 = vmatprep.subr.mxu0 %v273
    %328 = vmatpush1.msra.mxu0 %v272
    %329 = vmatprep.subr.mxu0 %v275
    %330 = vmatpush1.msra.mxu0 %v274
    %331 = vmatprep.subr.mxu0 %v277
    %332 = vmatpush1.msra.mxu0 %v276
    %333 = vmatprep.subr.mxu0 %v279
    %334 = vmatpush1.msra.mxu0 %v278
    %335 = vmatprep.subr.mxu0 %v281
    %336 = vmatpush1.msra.mxu0 %v280
    %337 = vmatprep.subr.mxu0 %v283
    %338 = vmatpush1.msra.mxu0 %v282
    %339 = vmatprep.subr.mxu0 %v285
    %340 = vmatpush1.msra.mxu0 %v284
    %341 = vmatprep.subr.mxu0 %v287
    %342 = vmatpush1.msra.mxu0 %v286
    %343 = vmatprep.subr.mxu0 %v289
    %344 = vmatpush1.msra.mxu0 %v288
    %345 = vmatprep.subr.mxu0 %v291
    %346 = vmatpush1.msra.mxu0 %v290
    %347 = vmatprep.subr.mxu0 %v293
    %348 = vmatpush1.msra.mxu0 %v292
    %349 = vmatprep.subr.mxu0 %v295
    %350 = vmatpush1.msra.mxu0 %v294
    %351 = vmatprep.subr.mxu0 %v297
    %352 = vmatpush1.msra.mxu0 %v296
    %353 = vmatprep.subr.mxu0 0.0
    %354 = vmatpush1.msra.mxu0 0.0
    %355 = vmatprep.subr.mxu0 0.0
    %356 = vmatpush1.msra.mxu0 0.0
    %357 = vmatprep.subr.mxu0 0.0
    %358 = vmatpush1.msra.mxu0 0.0
    %359 = vmatprep.subr.mxu0 0.0
    %360 = vmatpush1.msra.mxu0 0.0
    %361 = vmatprep.subr.mxu0 0.0
    %362 = vmatpush1.msra.mxu0 0.0
    %363 = vmatprep.subr.mxu0 0.0
    %364 = vmatpush1.msra.mxu0 0.0
    %365 = vmatprep.subr.mxu0 0.0
    %366 = vmatpush1.msra.mxu0 0.0
    %367 = vmatprep.subr.mxu0 0.0
    %368 = vmatpush1.msra.mxu0 0.0
    %369 = vmatprep.subr.mxu0 0.0
    %370 = vmatpush1.msra.mxu0 0.0
    %371 = vmatprep.subr.mxu0 0.0
    %372 = vmatpush1.msra.mxu0 0.0
    %373 = vmatprep.subr.mxu0 0.0
    %374 = vmatpush1.msra.mxu0 0.0
    %375 = vmatprep.subr.mxu0 0.0
    %376 = vmatpush1.msra.mxu0 0.0
    %377 = vmatprep.mubr.f32.mxu0 %v311
    %378 = vmatmul.mubr.f32.gmra.mrb[0].mxu0 %v256
    %v379 = vpop.f32.mrb[0].mxu0
    %v380 = vadd.f32 %v303, %v379
    %v381 = vpop.f32.mrb[0].mxu0
    %v382 = vadd.f32 %v307, %v381
    %383 = vdwg.mxu0
    %vm384 = vcmask 31744
    %v385 = vsel %vm384, %v382, -inf
    %386 = vmax.xlane.f32.xlu0 %v385
    %v387 = vpop.xlane.xlu0 %386
    %v388 = vsub.f32 %v382, %v387
    %v389 = vmul.f32 %v388, 1.442695
    %v390 = vpow.pop %v389
    %v391 = vsel %vm384, %v390, 0.0
    %392 = vadd.xlane.f32.xlu0 %v391
    %v393 = vpop.xlane.xlu0 %392
    %v394 = vrcp.pop %v393
    %v395 = vmul.f32 %v390, %v394
    %vm396 = vcmask 64544
    %v397 = vsel %vm396, %v382, -inf
    %398 = vmax.xlane.f32.xlu0 %v397
    %v399 = vpop.xlane.xlu0 %398
    %v400 = vsub.f32 %v382, %v399
    %v401 = vmul.f32 %v400, 1.442695
    %v402 = vpow.pop %v401
    %404 = vrot.lane.b32.xlu0 %v402, 124
    %v405 = vpop.permute.xlu0 %404
    %v407 = vsel %vm384, %v405, 0.0
    %408 = vadd.xlane.f32.xlu0 %v407
    %v409 = vpop.xlane.xlu0 %408
    %v410 = vrcp.pop %v409
    %v411 = vmul.f32 %v402, %v410
    %vm412 = vcmask 97344
    %v413 = vsel %vm412, %v382, -inf
    %414 = vmax.xlane.f32.xlu0 %v413
    %v415 = vpop.xlane.xlu0 %414
    %v416 = vsub.f32 %v382, %v415
    %v417 = vmul.f32 %v416, 1.442695
    %v418 = vpow.pop %v417
    %420 = vrot.lane.b32.xlu0 %v418, 120
    %v421 = vpop.permute.xlu0 %420
    %v423 = vsel %vm384, %v421, 0.0
    %424 = vadd.xlane.f32.xlu0 %v423
    %v425 = vpop.xlane.xlu0 %424
    %v426 = vrcp.pop %v425
    %v427 = vmul.f32 %v418, %v426
    %429 = vrot.lane.b32.xlu0 %v380, 112
    %v430 = vpop.permute.xlu0 %429
    %432 = vrot.lane.b32.xlu0 %v380, 96
    %v433 = vpop.permute.xlu0 %432
    %435 = vrot.lane.b32.xlu0 %v380, 80
    %v436 = vpop.permute.xlu0 %435
    %v438 = vcombine.low %v380, %v433
    %v439 = vcombine.high %v380, %v433
    %v441 = vunpack.c.l.s4 1983009808
    %v442 = vunpack.c.0.s8 %v441
    %v443 = vlaneseq
    %v444 = vshrl.u32 %v443, 7
    %v445 = vsub.s32 %v442, %v444
    %v446 = vrot.slane %v438, %v445
    %v448 = vunpack.c.l.s4 1983009808
    %v449 = vunpack.c.0.s8 %v448
    %v450 = vlaneseq
    %v451 = vshrl.u32 %v450, 7
    %v452 = vsub.s32 %v449, %v451
    %v453 = vrot.slane %v439, %v452
    %v454 = vcombine.low %v430, %v436
    %v455 = vcombine.high %v430, %v436
    %v457 = vunpack.c.l.s4 1983009808
    %v458 = vunpack.c.0.s8 %v457
    %v459 = vlaneseq
    %v460 = vshrl.u32 %v459, 7
    %v461 = vsub.s32 %v458, %v460
    %v462 = vrot.slane %v454, %v461
    %v464 = vunpack.c.l.s4 1983009808
    %v465 = vunpack.c.0.s8 %v464
    %v466 = vlaneseq
    %v467 = vshrl.u32 %v466, 7
    %v468 = vsub.s32 %v465, %v467
    %v469 = vrot.slane %v455, %v468
    %v470 = vcombine.low %v446, %v462
    %v471 = vcombine.high %v446, %v462
    %v473 = vunpack.c.l.s4 1934713408
    %v474 = vunpack.c.0.s8 %v473
    %v475 = vlaneseq
    %v476 = vshrl.u32 %v475, 7
    %v477 = vsub.s32 %v474, %v476
    %v478 = vrot.slane %v470, %v477
    %v480 = vunpack.c.l.s4 1934713408
    %v481 = vunpack.c.0.s8 %v480
    %v482 = vlaneseq
    %v483 = vshrl.u32 %v482, 7
    %v484 = vsub.s32 %v481, %v483
    %v485 = vrot.slane %v471, %v484
    %v486 = vcombine.low %v453, %v469
    %v487 = vcombine.high %v453, %v469
    %v489 = vunpack.c.l.s4 1934713408
    %v490 = vunpack.c.0.s8 %v489
    %v491 = vlaneseq
    %v492 = vshrl.u32 %v491, 7
    %v493 = vsub.s32 %v490, %v492
    %v494 = vrot.slane %v486, %v493
    %v496 = vunpack.c.l.s4 1934713408
    %v497 = vunpack.c.0.s8 %v496
    %v498 = vlaneseq
    %v499 = vshrl.u32 %v498, 7
    %v500 = vsub.s32 %v497, %v499
    %v501 = vrot.slane %v487, %v500
    %v502 = vcombine.high %v478, 0.0
    %v503 = vcombine.high %v485, 0.0
    %v504 = vcombine.high %v494, 0.0
    %v505 = vcombine.high %v501, 0.0
    %v506 = vcombine.low %v478, %v485
    %v508 = vunpack.c.l.s4 1983009808
    %v509 = vunpack.c.0.s8 %v508
    %v510 = vlaneseq
    %v511 = vshrl.u32 %v510, 7
    %v512 = vsub.s32 %v509, %v511
    %v513 = vrot.slane %v506, %v512
    %v514 = vcombine.low %v502, %v503
    %v516 = vunpack.c.l.s4 1983009808
    %v517 = vunpack.c.0.s8 %v516
    %v518 = vlaneseq
    %v519 = vshrl.u32 %v518, 7
    %v520 = vsub.s32 %v517, %v519
    %v521 = vrot.slane %v514, %v520
    %v522 = vcombine.low %v494, %v501
    %v524 = vunpack.c.l.s4 1983009808
    %v525 = vunpack.c.0.s8 %v524
    %v526 = vlaneseq
    %v527 = vshrl.u32 %v526, 7
    %v528 = vsub.s32 %v525, %v527
    %v529 = vrot.slane %v522, %v528
    %v530 = vcombine.low %v504, %v505
    %v532 = vunpack.c.l.s4 1983009808
    %v533 = vunpack.c.0.s8 %v532
    %v534 = vlaneseq
    %v535 = vshrl.u32 %v534, 7
    %v536 = vsub.s32 %v533, %v535
    %v537 = vrot.slane %v530, %v536
    %v538 = vcombine.low %v513, %v521
    %v539 = vcombine.high %v513, %v521
    %v541 = vunpack.c.l.s4 1934713408
    %v542 = vunpack.c.0.s8 %v541
    %v543 = vlaneseq
    %v544 = vshrl.u32 %v543, 7
    %v545 = vsub.s32 %v542, %v544
    %v546 = vrot.slane %v538, %v545
    %v548 = vunpack.c.l.s4 1934713408
    %v549 = vunpack.c.0.s8 %v548
    %v550 = vlaneseq
    %v551 = vshrl.u32 %v550, 7
    %v552 = vsub.s32 %v549, %v551
    %v553 = vrot.slane %v539, %v552
    %v554 = vcombine.low %v529, %v537
    %v555 = vcombine.high %v529, %v537
    %v557 = vunpack.c.l.s4 1934713408
    %v558 = vunpack.c.0.s8 %v557
    %v559 = vlaneseq
    %v560 = vshrl.u32 %v559, 7
    %v561 = vsub.s32 %v558, %v560
    %v562 = vrot.slane %v554, %v561
    %v564 = vunpack.c.l.s4 1934713408
    %v565 = vunpack.c.0.s8 %v564
    %v566 = vlaneseq
    %v567 = vshrl.u32 %v566, 7
    %v568 = vsub.s32 %v565, %v567
    %v569 = vrot.slane %v555, %v568
    %v570 = vcombine.low %v546, %v562
    %v571 = vcombine.high %v546, %v562
    %v572 = vcombine.low %v553, %v569
    %v573 = vcombine.high %v553, %v569
    %574 = vrot.lane.b32.xlu0 %v380, 64
    %v575 = vpop.permute.xlu0 %574
    %576 = vrot.lane.b32.xlu0 %v430, 64
    %v577 = vpop.permute.xlu0 %576
    %578 = vrot.lane.b32.xlu0 %v433, 64
    %v579 = vpop.permute.xlu0 %578
    %580 = vrot.lane.b32.xlu0 %v436, 64
    %v581 = vpop.permute.xlu0 %580
    %v586 = vcombine.low %v575, %v579
    %v587 = vcombine.high %v575, %v579
    %v589 = vunpack.c.l.s4 1983009808
    %v590 = vunpack.c.0.s8 %v589
    %v591 = vlaneseq
    %v592 = vshrl.u32 %v591, 7
    %v593 = vsub.s32 %v590, %v592
    %v594 = vrot.slane %v586, %v593
    %v596 = vunpack.c.l.s4 1983009808
    %v597 = vunpack.c.0.s8 %v596
    %v598 = vlaneseq
    %v599 = vshrl.u32 %v598, 7
    %v600 = vsub.s32 %v597, %v599
    %v601 = vrot.slane %v587, %v600
    %v602 = vcombine.low %v577, %v581
    %v603 = vcombine.high %v577, %v581
    %v605 = vunpack.c.l.s4 1983009808
    %v606 = vunpack.c.0.s8 %v605
    %v607 = vlaneseq
    %v608 = vshrl.u32 %v607, 7
    %v609 = vsub.s32 %v606, %v608
    %v610 = vrot.slane %v602, %v609
    %v612 = vunpack.c.l.s4 1983009808
    %v613 = vunpack.c.0.s8 %v612
    %v614 = vlaneseq
    %v615 = vshrl.u32 %v614, 7
    %v616 = vsub.s32 %v613, %v615
    %v617 = vrot.slane %v603, %v616
    %v618 = vcombine.low %v594, %v610
    %v619 = vcombine.high %v594, %v610
    %v621 = vunpack.c.l.s4 1934713408
    %v622 = vunpack.c.0.s8 %v621
    %v623 = vlaneseq
    %v624 = vshrl.u32 %v623, 7
    %v625 = vsub.s32 %v622, %v624
    %v626 = vrot.slane %v618, %v625
    %v628 = vunpack.c.l.s4 1934713408
    %v629 = vunpack.c.0.s8 %v628
    %v630 = vlaneseq
    %v631 = vshrl.u32 %v630, 7
    %v632 = vsub.s32 %v629, %v631
    %v633 = vrot.slane %v619, %v632
    %v634 = vcombine.low %v601, %v617
    %v635 = vcombine.high %v601, %v617
    %v637 = vunpack.c.l.s4 1934713408
    %v638 = vunpack.c.0.s8 %v637
    %v639 = vlaneseq
    %v640 = vshrl.u32 %v639, 7
    %v641 = vsub.s32 %v638, %v640
    %v642 = vrot.slane %v634, %v641
    %v644 = vunpack.c.l.s4 1934713408
    %v645 = vunpack.c.0.s8 %v644
    %v646 = vlaneseq
    %v647 = vshrl.u32 %v646, 7
    %v648 = vsub.s32 %v645, %v647
    %v649 = vrot.slane %v635, %v648
    %v650 = vcombine.high %v626, 0.0
    %v651 = vcombine.high %v633, 0.0
    %v652 = vcombine.high %v642, 0.0
    %v653 = vcombine.high %v649, 0.0
    %v654 = vcombine.low %v626, %v633
    %v656 = vunpack.c.l.s4 1983009808
    %v657 = vunpack.c.0.s8 %v656
    %v658 = vlaneseq
    %v659 = vshrl.u32 %v658, 7
    %v660 = vsub.s32 %v657, %v659
    %v661 = vrot.slane %v654, %v660
    %v662 = vcombine.low %v650, %v651
    %v664 = vunpack.c.l.s4 1983009808
    %v665 = vunpack.c.0.s8 %v664
    %v666 = vlaneseq
    %v667 = vshrl.u32 %v666, 7
    %v668 = vsub.s32 %v665, %v667
    %v669 = vrot.slane %v662, %v668
    %v670 = vcombine.low %v642, %v649
    %v672 = vunpack.c.l.s4 1983009808
    %v673 = vunpack.c.0.s8 %v672
    %v674 = vlaneseq
    %v675 = vshrl.u32 %v674, 7
    %v676 = vsub.s32 %v673, %v675
    %v677 = vrot.slane %v670, %v676
    %v678 = vcombine.low %v652, %v653
    %v680 = vunpack.c.l.s4 1983009808
    %v681 = vunpack.c.0.s8 %v680
    %v682 = vlaneseq
    %v683 = vshrl.u32 %v682, 7
    %v684 = vsub.s32 %v681, %v683
    %v685 = vrot.slane %v678, %v684
    %v686 = vcombine.low %v661, %v669
    %v687 = vcombine.high %v661, %v669
    %v689 = vunpack.c.l.s4 1934713408
    %v690 = vunpack.c.0.s8 %v689
    %v691 = vlaneseq
    %v692 = vshrl.u32 %v691, 7
    %v693 = vsub.s32 %v690, %v692
    %v694 = vrot.slane %v686, %v693
    %v696 = vunpack.c.l.s4 1934713408
    %v697 = vunpack.c.0.s8 %v696
    %v698 = vlaneseq
    %v699 = vshrl.u32 %v698, 7
    %v700 = vsub.s32 %v697, %v699
    %v701 = vrot.slane %v687, %v700
    %v702 = vcombine.low %v677, %v685
    %v703 = vcombine.high %v677, %v685
    %v705 = vunpack.c.l.s4 1934713408
    %v706 = vunpack.c.0.s8 %v705
    %v707 = vlaneseq
    %v708 = vshrl.u32 %v707, 7
    %v709 = vsub.s32 %v706, %v708
    %v710 = vrot.slane %v702, %v709
    %v712 = vunpack.c.l.s4 1934713408
    %v713 = vunpack.c.0.s8 %v712
    %v714 = vlaneseq
    %v715 = vshrl.u32 %v714, 7
    %v716 = vsub.s32 %v713, %v715
    %v717 = vrot.slane %v703, %v716
    %v718 = vcombine.low %v694, %v710
    %v719 = vcombine.high %v694, %v710
    %v720 = vcombine.low %v701, %v717
    %v721 = vcombine.high %v701, %v717
    %vm722 = vcmask 130048
    %v723 = vsel %vm722, %v570, 0.0
    %724 = vadd.xlane.f32.xlu0 %v723
    %v725 = vpop.xlane.xlu0 %724
    %v726 = vsel %vm722, %v571, 0.0
    %727 = vadd.xlane.f32.xlu0 %v726
    %v728 = vpop.xlane.xlu0 %727
    %v729 = vsel %vm722, %v572, 0.0
    %730 = vadd.xlane.f32.xlu0 %v729
    %v731 = vpop.xlane.xlu0 %730
    %v732 = vsel %vm722, %v573, 0.0
    %733 = vadd.xlane.f32.xlu0 %v732
    %v734 = vpop.xlane.xlu0 %733
    %v735 = vrcp.pop 16.0
    %v736 = vmul.f32 %v725, %v735
    %v737 = vmul.f32 %v728, %v735
    %v738 = vmul.f32 %v731, %v735
    %v739 = vmul.f32 %v734, %v735
    %v740 = vsub.f32 %v570, %v736
    %v741 = vsub.f32 %v571, %v737
    %v742 = vsub.f32 %v572, %v738
    %v743 = vsub.f32 %v573, %v739
    %v744 = vmul.f32 %v740, %v740
    %v745 = vmul.f32 %v741, %v741
    %v746 = vmul.f32 %v742, %v742
    %v747 = vmul.f32 %v743, %v743
    %v748 = vsel %vm722, %v744, 0.0
    %749 = vadd.xlane.f32.xlu0 %v748
    %v750 = vpop.xlane.xlu0 %749
    %v751 = vsel %vm722, %v745, 0.0
    %752 = vadd.xlane.f32.xlu0 %v751
    %v753 = vpop.xlane.xlu0 %752
    %v754 = vsel %vm722, %v746, 0.0
    %755 = vadd.xlane.f32.xlu0 %v754
    %v756 = vpop.xlane.xlu0 %755
    %v757 = vsel %vm722, %v747, 0.0
    %758 = vadd.xlane.f32.xlu0 %v757
    %v759 = vpop.xlane.xlu0 %758
    %v760 = vmul.f32 %v750, 0.06666667
    %v761 = vmul.f32 %v753, 0.06666667
    %v762 = vmul.f32 %v756, 0.06666667
    %v763 = vmul.f32 %v759, 0.06666667
    %v764 = vadd.f32 %v760, 1e-08
    %v765 = vadd.f32 %v761, 1e-08
    %v766 = vadd.f32 %v762, 1e-08
    %v767 = vadd.f32 %v763, 1e-08
    %v768 = vrsqrt.pop %v764
    %v769 = vmul.f32 %v764, %v768
    %vm770 = vcmp.eq.f32.partialorder %v764, inf
    %v771 = vsel %vm770, %v764, %v769
    %vm772 = vcmp.eq.f32.partialorder %v764, 0.0
    %v773 = vand.u32 %v764, 2147483648
    %v774 = vsel %vm772, %v773, %v771
    %v775 = vrsqrt.pop %v765
    %v776 = vmul.f32 %v765, %v775
    %vm777 = vcmp.eq.f32.partialorder %v765, inf
    %v778 = vsel %vm777, %v765, %v776
    %vm779 = vcmp.eq.f32.partialorder %v765, 0.0
    %v780 = vand.u32 %v765, 2147483648
    %v781 = vsel %vm779, %v780, %v778
    %v782 = vrsqrt.pop %v766
    %v783 = vmul.f32 %v766, %v782
    %vm784 = vcmp.eq.f32.partialorder %v766, inf
    %v785 = vsel %vm784, %v766, %v783
    %vm786 = vcmp.eq.f32.partialorder %v766, 0.0
    %v787 = vand.u32 %v766, 2147483648
    %v788 = vsel %vm786, %v787, %v785
    %v789 = vrsqrt.pop %v767
    %v790 = vmul.f32 %v767, %v789
    %vm791 = vcmp.eq.f32.partialorder %v767, inf
    %v792 = vsel %vm791, %v767, %v790
    %vm793 = vcmp.eq.f32.partialorder %v767, 0.0
    %v794 = vand.u32 %v767, 2147483648
    %v795 = vsel %vm793, %v794, %v792
    %v796 = vrcp.pop %v774
    %v797 = vmul.f32 %v740, %v796
    %v798 = vrcp.pop %v781
    %v799 = vmul.f32 %v741, %v798
    %v800 = vrcp.pop %v788
    %v801 = vmul.f32 %v742, %v800
    %v802 = vrcp.pop %v795
    %v803 = vmul.f32 %v743, %v802
    %v804 = vsel %vm722, %v718, 0.0
    %805 = vadd.xlane.f32.xlu0 %v804
    %v806 = vpop.xlane.xlu0 %805
    %v807 = vsel %vm722, %v719, 0.0
    %808 = vadd.xlane.f32.xlu0 %v807
    %v809 = vpop.xlane.xlu0 %808
    %v810 = vsel %vm722, %v720, 0.0
    %811 = vadd.xlane.f32.xlu0 %v810
    %v812 = vpop.xlane.xlu0 %811
    %v813 = vsel %vm722, %v721, 0.0
    %814 = vadd.xlane.f32.xlu0 %v813
    %v815 = vpop.xlane.xlu0 %814
    %v816 = vmul.f32 %v806, %v735
    %v817 = vmul.f32 %v809, %v735
    %v818 = vmul.f32 %v812, %v735
    %v819 = vmul.f32 %v815, %v735
    %v820 = vsub.f32 %v718, %v816
    %v821 = vsub.f32 %v719, %v817
    %v822 = vsub.f32 %v720, %v818
    %v823 = vsub.f32 %v721, %v819
    %v824 = vmul.f32 %v820, %v820
    %v825 = vmul.f32 %v821, %v821
    %v826 = vmul.f32 %v822, %v822
    %v827 = vmul.f32 %v823, %v823
    %v828 = vsel %vm722, %v824, 0.0
    %829 = vadd.xlane.f32.xlu0 %v828
    %v830 = vpop.xlane.xlu0 %829
    %v831 = vsel %vm722, %v825, 0.0
    %832 = vadd.xlane.f32.xlu0 %v831
    %v833 = vpop.xlane.xlu0 %832
    %v834 = vsel %vm722, %v826, 0.0
    %835 = vadd.xlane.f32.xlu0 %v834
    %v836 = vpop.xlane.xlu0 %835
    %v837 = vsel %vm722, %v827, 0.0
    %838 = vadd.xlane.f32.xlu0 %v837
    %v839 = vpop.xlane.xlu0 %838
    %v840 = vmul.f32 %v830, 0.06666667
    %v841 = vmul.f32 %v833, 0.06666667
    %v842 = vmul.f32 %v836, 0.06666667
    %v843 = vmul.f32 %v839, 0.06666667
    %v844 = vadd.f32 %v840, 1e-08
    %v845 = vadd.f32 %v841, 1e-08
    %v846 = vadd.f32 %v842, 1e-08
    %v847 = vadd.f32 %v843, 1e-08
    %v848 = vrsqrt.pop %v844
    %v849 = vmul.f32 %v844, %v848
    %vm850 = vcmp.eq.f32.partialorder %v844, inf
    %v851 = vsel %vm850, %v844, %v849
    %vm852 = vcmp.eq.f32.partialorder %v844, 0.0
    %v853 = vand.u32 %v844, 2147483648
    %v854 = vsel %vm852, %v853, %v851
    %v855 = vrsqrt.pop %v845
    %v856 = vmul.f32 %v845, %v855
    %vm857 = vcmp.eq.f32.partialorder %v845, inf
    %v858 = vsel %vm857, %v845, %v856
    %vm859 = vcmp.eq.f32.partialorder %v845, 0.0
    %v860 = vand.u32 %v845, 2147483648
    %v861 = vsel %vm859, %v860, %v858
    %v862 = vrsqrt.pop %v846
    %v863 = vmul.f32 %v846, %v862
    %vm864 = vcmp.eq.f32.partialorder %v846, inf
    %v865 = vsel %vm864, %v846, %v863
    %vm866 = vcmp.eq.f32.partialorder %v846, 0.0
    %v867 = vand.u32 %v846, 2147483648
    %v868 = vsel %vm866, %v867, %v865
    %v869 = vrsqrt.pop %v847
    %v870 = vmul.f32 %v847, %v869
    %vm871 = vcmp.eq.f32.partialorder %v847, inf
    %v872 = vsel %vm871, %v847, %v870
    %vm873 = vcmp.eq.f32.partialorder %v847, 0.0
    %v874 = vand.u32 %v847, 2147483648
    %v875 = vsel %vm873, %v874, %v872
    %v876 = vrcp.pop %v854
    %v877 = vmul.f32 %v820, %v876
    %v878 = vrcp.pop %v861
    %v879 = vmul.f32 %v821, %v878
    %v880 = vrcp.pop %v868
    %v881 = vmul.f32 %v822, %v880
    %v882 = vrcp.pop %v875
    %v883 = vmul.f32 %v823, %v882
    %v885 = vsel %vm722, %v797, 0
    %v888 = vsel %vm722, %v877, 0
    %890 = vmatprep.subr.mxu0 0.0
    %891 = vmatpush1.xpose.msra.mxu0 %v888
    %892 = vmatprep.subr.mxu0 0.0
    %893 = vmatpush1.xpose.msra.mxu0 0.0
    %894 = vmatprep.subr.mxu0 0.0
    %895 = vmatpush1.xpose.msra.mxu0 0.0
    %896 = vmatprep.subr.mxu0 0.0
    %897 = vmatpush1.xpose.msra.mxu0 0.0
    %898 = vmatprep.subr.mxu0 0.0
    %899 = vmatpush1.xpose.msra.mxu0 0.0
    %900 = vmatprep.subr.mxu0 0.0
    %901 = vmatpush1.xpose.msra.mxu0 0.0
    %902 = vmatprep.subr.mxu0 0.0
    %903 = vmatpush1.xpose.msra.mxu0 0.0
    %904 = vmatprep.subr.mxu0 0.0
    %905 = vmatpush1.xpose.msra.mxu0 0.0
    %906 = vmatprep.subr.mxu0 0.0
    %907 = vmatpush1.xpose.msra.mxu0 0.0
    %908 = vmatprep.subr.mxu0 0.0
    %909 = vmatpush1.xpose.msra.mxu0 0.0
    %910 = vmatprep.subr.mxu0 0.0
    %911 = vmatpush1.xpose.msra.mxu0 0.0
    %912 = vmatprep.subr.mxu0 0.0
    %913 = vmatpush1.xpose.msra.mxu0 0.0
    %914 = vmatprep.subr.mxu0 0.0
    %915 = vmatpush1.xpose.msra.mxu0 0.0
    %916 = vmatprep.subr.mxu0 0.0
    %917 = vmatpush1.xpose.msra.mxu0 0.0
    %918 = vmatprep.subr.mxu0 0.0
    %919 = vmatpush1.xpose.msra.mxu0 0.0
    %920 = vmatprep.subr.mxu0 0.0
    %921 = vmatpush1.xpose.msra.mxu0 0.0
    %922 = vmatprep.subr.mxu0 0.0
    %923 = vmatpush1.xpose.msra.mxu0 0.0
    %924 = vmatprep.subr.mxu0 0.0
    %925 = vmatpush1.xpose.msra.mxu0 0.0
    %926 = vmatprep.subr.mxu0 0.0
    %927 = vmatpush1.xpose.msra.mxu0 0.0
    %928 = vmatprep.subr.mxu0 0.0
    %929 = vmatpush1.xpose.msra.mxu0 0.0
    %930 = vmatprep.subr.mxu0 0.0
    %931 = vmatpush1.xpose.msra.mxu0 0.0
    %932 = vmatprep.subr.mxu0 0.0
    %933 = vmatpush1.xpose.msra.mxu0 0.0
    %934 = vmatprep.subr.mxu0 0.0
    %935 = vmatpush1.xpose.msra.mxu0 0.0
    %936 = vmatprep.subr.mxu0 0.0
    %937 = vmatpush1.xpose.msra.mxu0 0.0
    %938 = vmatprep.subr.mxu0 0.0
    %939 = vmatpush1.xpose.msra.mxu0 0.0
    %940 = vmatprep.subr.mxu0 0.0
    %941 = vmatpush1.xpose.msra.mxu0 0.0
    %942 = vmatprep.subr.mxu0 0.0
    %943 = vmatpush1.xpose.msra.mxu0 0.0
    %944 = vmatprep.subr.mxu0 0.0
    %945 = vmatpush1.xpose.msra.mxu0 0.0
    %946 = vmatprep.subr.mxu0 0.0
    %947 = vmatpush1.xpose.msra.mxu0 0.0
    %948 = vmatprep.subr.mxu0 0.0
    %949 = vmatpush1.xpose.msra.mxu0 0.0
    %950 = vmatprep.subr.mxu0 0.0
    %951 = vmatpush1.xpose.msra.mxu0 0.0
    %952 = vmatprep.subr.mxu0 0.0
    %953 = vmatpush1.xpose.msra.mxu0 0.0
    %954 = vmatprep.mubr.f32.mxu0 0.0
    %955 = vmatmul.mubr.f32.gmra.mrb[0].mxu0 %v885
    %v956 = vpop.f32.mrb[0].mxu0
    %v957 = vadd.f32 0.0, %v956
    %v958 = vpop.f32.mrb[0].mxu0
    %959 = vdwg.mxu0
    %v961 = vsel %vm722, %v799, 0
    %v964 = vsel %vm722, %v879, 0
    %966 = vmatprep.subr.mxu0 0.0
    %967 = vmatpush1.xpose.msra.mxu0 %v964
    %968 = vmatprep.subr.mxu0 0.0
    %969 = vmatpush1.xpose.msra.mxu0 0.0
    %970 = vmatprep.subr.mxu0 0.0
    %971 = vmatpush1.xpose.msra.mxu0 0.0
    %972 = vmatprep.subr.mxu0 0.0
    %973 = vmatpush1.xpose.msra.mxu0 0.0
    %974 = vmatprep.subr.mxu0 0.0
    %975 = vmatpush1.xpose.msra.mxu0 0.0
    %976 = vmatprep.subr.mxu0 0.0
    %977 = vmatpush1.xpose.msra.mxu0 0.0
    %978 = vmatprep.subr.mxu0 0.0
    %979 = vmatpush1.xpose.msra.mxu0 0.0
    %980 = vmatprep.subr.mxu0 0.0
    %981 = vmatpush1.xpose.msra.mxu0 0.0
    %982 = vmatprep.subr.mxu0 0.0
    %983 = vmatpush1.xpose.msra.mxu0 0.0
    %984 = vmatprep.subr.mxu0 0.0
    %985 = vmatpush1.xpose.msra.mxu0 0.0
    %986 = vmatprep.subr.mxu0 0.0
    %987 = vmatpush1.xpose.msra.mxu0 0.0
    %988 = vmatprep.subr.mxu0 0.0
    %989 = vmatpush1.xpose.msra.mxu0 0.0
    %990 = vmatprep.subr.mxu0 0.0
    %991 = vmatpush1.xpose.msra.mxu0 0.0
    %992 = vmatprep.subr.mxu0 0.0
    %993 = vmatpush1.xpose.msra.mxu0 0.0
    %994 = vmatprep.subr.mxu0 0.0
    %995 = vmatpush1.xpose.msra.mxu0 0.0
    %996 = vmatprep.subr.mxu0 0.0
    %997 = vmatpush1.xpose.msra.mxu0 0.0
    %998 = vmatprep.subr.mxu0 0.0
    %999 = vmatpush1.xpose.msra.mxu0 0.0
    %1000 = vmatprep.subr.mxu0 0.0
    %1001 = vmatpush1.xpose.msra.mxu0 0.0
    %1002 = vmatprep.subr.mxu0 0.0
    %1003 = vmatpush1.xpose.msra.mxu0 0.0
    %1004 = vmatprep.subr.mxu0 0.0
    %1005 = vmatpush1.xpose.msra.mxu0 0.0
    %1006 = vmatprep.subr.mxu0 0.0
    %1007 = vmatpush1.xpose.msra.mxu0 0.0
    %1008 = vmatprep.subr.mxu0 0.0
    %1009 = vmatpush1.xpose.msra.mxu0 0.0
    %1010 = vmatprep.subr.mxu0 0.0
    %1011 = vmatpush1.xpose.msra.mxu0 0.0
    %1012 = vmatprep.subr.mxu0 0.0
    %1013 = vmatpush1.xpose.msra.mxu0 0.0
    %1014 = vmatprep.subr.mxu0 0.0
    %1015 = vmatpush1.xpose.msra.mxu0 0.0
    %1016 = vmatprep.subr.mxu0 0.0
    %1017 = vmatpush1.xpose.msra.mxu0 0.0
    %1018 = vmatprep.subr.mxu0 0.0
    %1019 = vmatpush1.xpose.msra.mxu0 0.0
    %1020 = vmatprep.subr.mxu0 0.0
    %1021 = vmatpush1.xpose.msra.mxu0 0.0
    %1022 = vmatprep.subr.mxu0 0.0
    %1023 = vmatpush1.xpose.msra.mxu0 0.0
    %1024 = vmatprep.subr.mxu0 0.0
    %1025 = vmatpush1.xpose.msra.mxu0 0.0
    %1026 = vmatprep.subr.mxu0 0.0
    %1027 = vmatpush1.xpose.msra.mxu0 0.0
    %1028 = vmatprep.subr.mxu0 0.0
    %1029 = vmatpush1.xpose.msra.mxu0 0.0
    %1030 = vmatprep.mubr.f32.mxu0 0.0
    %1031 = vmatmul.mubr.f32.gmra.mrb[0].mxu0 %v961
    %v1032 = vpop.f32.mrb[0].mxu0
    %v1033 = vadd.f32 0.0, %v1032
    %v1034 = vpop.f32.mrb[0].mxu0
    %1035 = vdwg.mxu0
    %v1037 = vsel %vm722, %v801, 0
    %v1040 = vsel %vm722, %v881, 0
    %1042 = vmatprep.subr.mxu0 0.0
    %1043 = vmatpush1.xpose.msra.mxu0 %v1040
    %1044 = vmatprep.subr.mxu0 0.0
    %1045 = vmatpush1.xpose.msra.mxu0 0.0
    %1046 = vmatprep.subr.mxu0 0.0
    %1047 = vmatpush1.xpose.msra.mxu0 0.0
    %1048 = vmatprep.subr.mxu0 0.0
    %1049 = vmatpush1.xpose.msra.mxu0 0.0
    %1050 = vmatprep.subr.mxu0 0.0
    %1051 = vmatpush1.xpose.msra.mxu0 0.0
    %1052 = vmatprep.subr.mxu0 0.0
    %1053 = vmatpush1.xpose.msra.mxu0 0.0
    %1054 = vmatprep.subr.mxu0 0.0
    %1055 = vmatpush1.xpose.msra.mxu0 0.0
    %1056 = vmatprep.subr.mxu0 0.0
    %1057 = vmatpush1.xpose.msra.mxu0 0.0
    %1058 = vmatprep.subr.mxu0 0.0
    %1059 = vmatpush1.xpose.msra.mxu0 0.0
    %1060 = vmatprep.subr.mxu0 0.0
    %1061 = vmatpush1.xpose.msra.mxu0 0.0
    %1062 = vmatprep.subr.mxu0 0.0
    %1063 = vmatpush1.xpose.msra.mxu0 0.0
    %1064 = vmatprep.subr.mxu0 0.0
    %1065 = vmatpush1.xpose.msra.mxu0 0.0
    %1066 = vmatprep.subr.mxu0 0.0
    %1067 = vmatpush1.xpose.msra.mxu0 0.0
    %1068 = vmatprep.subr.mxu0 0.0
    %1069 = vmatpush1.xpose.msra.mxu0 0.0
    %1070 = vmatprep.subr.mxu0 0.0
    %1071 = vmatpush1.xpose.msra.mxu0 0.0
    %1072 = vmatprep.subr.mxu0 0.0
    %1073 = vmatpush1.xpose.msra.mxu0 0.0
    %1074 = vmatprep.subr.mxu0 0.0
    %1075 = vmatpush1.xpose.msra.mxu0 0.0
    %1076 = vmatprep.subr.mxu0 0.0
    %1077 = vmatpush1.xpose.msra.mxu0 0.0
    %1078 = vmatprep.subr.mxu0 0.0
    %1079 = vmatpush1.xpose.msra.mxu0 0.0
    %1080 = vmatprep.subr.mxu0 0.0
    %1081 = vmatpush1.xpose.msra.mxu0 0.0
    %1082 = vmatprep.subr.mxu0 0.0
    %1083 = vmatpush1.xpose.msra.mxu0 0.0
    %1084 = vmatprep.subr.mxu0 0.0
    %1085 = vmatpush1.xpose.msra.mxu0 0.0
    %1086 = vmatprep.subr.mxu0 0.0
    %1087 = vmatpush1.xpose.msra.mxu0 0.0
    %1088 = vmatprep.subr.mxu0 0.0
    %1089 = vmatpush1.xpose.msra.mxu0 0.0
    %1090 = vmatprep.subr.mxu0 0.0
    %1091 = vmatpush1.xpose.msra.mxu0 0.0
    %1092 = vmatprep.subr.mxu0 0.0
    %1093 = vmatpush1.xpose.msra.mxu0 0.0
    %1094 = vmatprep.subr.mxu0 0.0
    %1095 = vmatpush1.xpose.msra.mxu0 0.0
    %1096 = vmatprep.subr.mxu0 0.0
    %1097 = vmatpush1.xpose.msra.mxu0 0.0
    %1098 = vmatprep.subr.mxu0 0.0
    %1099 = vmatpush1.xpose.msra.mxu0 0.0
    %1100 = vmatprep.subr.mxu0 0.0
    %1101 = vmatpush1.xpose.msra.mxu0 0.0
    %1102 = vmatprep.subr.mxu0 0.0
    %1103 = vmatpush1.xpose.msra.mxu0 0.0
    %1104 = vmatprep.subr.mxu0 0.0
    %1105 = vmatpush1.xpose.msra.mxu0 0.0
    %1106 = vmatprep.mubr.f32.mxu0 0.0
    %1107 = vmatmul.mubr.f32.gmra.mrb[0].mxu0 %v1037
    %v1108 = vpop.f32.mrb[0].mxu0
    %v1109 = vadd.f32 0.0, %v1108
    %v1110 = vpop.f32.mrb[0].mxu0
    %1111 = vdwg.mxu0
    %v1113 = vsel %vm722, %v803, 0
    %v1116 = vsel %vm722, %v883, 0
    %1118 = vmatprep.subr.mxu0 0.0
    %1119 = vmatpush1.xpose.msra.mxu0 %v1116
    %1120 = vmatprep.subr.mxu0 0.0
    %1121 = vmatpush1.xpose.msra.mxu0 0.0
    %1122 = vmatprep.subr.mxu0 0.0
    %1123 = vmatpush1.xpose.msra.mxu0 0.0
    %1124 = vmatprep.subr.mxu0 0.0
    %1125 = vmatpush1.xpose.msra.mxu0 0.0
    %1126 = vmatprep.subr.mxu0 0.0
    %1127 = vmatpush1.xpose.msra.mxu0 0.0
    %1128 = vmatprep.subr.mxu0 0.0
    %1129 = vmatpush1.xpose.msra.mxu0 0.0
    %1130 = vmatprep.subr.mxu0 0.0
    %1131 = vmatpush1.xpose.msra.mxu0 0.0
    %1132 = vmatprep.subr.mxu0 0.0
    %1133 = vmatpush1.xpose.msra.mxu0 0.0
    %1134 = vmatprep.subr.mxu0 0.0
    %1135 = vmatpush1.xpose.msra.mxu0 0.0
    %1136 = vmatprep.subr.mxu0 0.0
    %1137 = vmatpush1.xpose.msra.mxu0 0.0
    %1138 = vmatprep.subr.mxu0 0.0
    %1139 = vmatpush1.xpose.msra.mxu0 0.0
    %1140 = vmatprep.subr.mxu0 0.0
    %1141 = vmatpush1.xpose.msra.mxu0 0.0
    %1142 = vmatprep.subr.mxu0 0.0
    %1143 = vmatpush1.xpose.msra.mxu0 0.0
    %1144 = vmatprep.subr.mxu0 0.0
    %1145 = vmatpush1.xpose.msra.mxu0 0.0
    %1146 = vmatprep.subr.mxu0 0.0
    %1147 = vmatpush1.xpose.msra.mxu0 0.0
    %1148 = vmatprep.subr.mxu0 0.0
    %1149 = vmatpush1.xpose.msra.mxu0 0.0
    %1150 = vmatprep.subr.mxu0 0.0
    %1151 = vmatpush1.xpose.msra.mxu0 0.0
    %1152 = vmatprep.subr.mxu0 0.0
    %1153 = vmatpush1.xpose.msra.mxu0 0.0
    %1154 = vmatprep.subr.mxu0 0.0
    %1155 = vmatpush1.xpose.msra.mxu0 0.0
    %1156 = vmatprep.subr.mxu0 0.0
    %1157 = vmatpush1.xpose.msra.mxu0 0.0
    %1158 = vmatprep.subr.mxu0 0.0
    %1159 = vmatpush1.xpose.msra.mxu0 0.0
    %1160 = vmatprep.subr.mxu0 0.0
    %1161 = vmatpush1.xpose.msra.mxu0 0.0
    %1162 = vmatprep.subr.mxu0 0.0
    %1163 = vmatpush1.xpose.msra.mxu0 0.0
    %1164 = vmatprep.subr.mxu0 0.0
    %1165 = vmatpush1.xpose.msra.mxu0 0.0
    %1166 = vmatprep.subr.mxu0 0.0
    %1167 = vmatpush1.xpose.msra.mxu0 0.0
    %1168 = vmatprep.subr.mxu0 0.0
    %1169 = vmatpush1.xpose.msra.mxu0 0.0
    %1170 = vmatprep.subr.mxu0 0.0
    %1171 = vmatpush1.xpose.msra.mxu0 0.0
    %1172 = vmatprep.subr.mxu0 0.0
    %1173 = vmatpush1.xpose.msra.mxu0 0.0
    %1174 = vmatprep.subr.mxu0 0.0
    %1175 = vmatpush1.xpose.msra.mxu0 0.0
    %1176 = vmatprep.subr.mxu0 0.0
    %1177 = vmatpush1.xpose.msra.mxu0 0.0
    %1178 = vmatprep.subr.mxu0 0.0
    %1179 = vmatpush1.xpose.msra.mxu0 0.0
    %1180 = vmatprep.subr.mxu0 0.0
    %1181 = vmatpush1.xpose.msra.mxu0 0.0
    %1182 = vmatprep.mubr.f32.mxu0 0.0
    %1183 = vmatmul.mubr.f32.gmra.mrb[0].mxu0 %v1113
    %v1184 = vpop.f32.mrb[0].mxu0
    %v1185 = vadd.f32 0.0, %v1184
    %v1186 = vpop.f32.mrb[0].mxu0
    %1187 = vdwg.mxu0
    %v1188 = vmul.f32 %v957, 0.25
    %v1189 = vmul.f32 %v1033, 0.25
    %v1190 = vmul.f32 %v1109, 0.25
    %v1191 = vmul.f32 %v1185, 0.25
    %v1192 = vmul.f32 %v1188, 1.442695
    %v1193 = vpow.pop %v1192
    %v1194 = vmul.f32 %v1189, 1.442695
    %v1195 = vpow.pop %v1194
    %v1196 = vmul.f32 %v1190, 1.442695
    %v1197 = vpow.pop %v1196
    %v1198 = vmul.f32 %v1191, 1.442695
    %v1199 = vpow.pop %v1198
    %1200 = vxpose.xlu0.b32.start [1/16] %v395, 128
    %1201 = vxpose.xlu0.b32.cont [2/16] 0.0, 128
    %1202 = vxpose.xlu0.b32.cont [3/16] 0.0, 128
    %1203 = vxpose.xlu0.b32.cont [4/16] 0.0, 128
    %1204 = vxpose.xlu0.b32.cont [5/16] 0.0, 128
    %1205 = vxpose.xlu0.b32.cont [6/16] 0.0, 128
    %1206 = vxpose.xlu0.b32.cont [7/16] 0.0, 128
    %1207 = vxpose.xlu0.b32.cont [8/16] 0.0, 128
    %1208 = vxpose.xlu0.b32.cont [9/16] 0.0, 128
    %1209 = vxpose.xlu0.b32.cont [10/16] 0.0, 128
    %1210 = vxpose.xlu0.b32.cont [11/16] 0.0, 128
    %1211 = vxpose.xlu0.b32.cont [12/16] 0.0, 128
    %1212 = vxpose.xlu0.b32.cont [13/16] 0.0, 128
    %1213 = vxpose.xlu0.b32.cont [14/16] 0.0, 128
    %1214 = vxpose.xlu0.b32.cont [15/16] 0.0, 128
    %1215 = vxpose.xlu0.b32.end [16/16] 0.0, 128
    %v1216 = vpop.trf.xlu0
    %v1217 = vpop.trf.xlu0
    %v1218 = vpop.trf.xlu0
    %v1219 = vpop.trf.xlu0
    %v1220 = vpop.trf.xlu0
    %v1221 = vpop.trf.xlu0
    %v1222 = vpop.trf.xlu0
    %v1223 = vpop.trf.xlu0
    %v1224 = vpop.trf.xlu0
    %v1225 = vpop.trf.xlu0
    %v1226 = vpop.trf.xlu0
    %v1227 = vpop.trf.xlu0
    %v1228 = vpop.trf.xlu0
    %v1229 = vpop.trf.xlu0
    %v1230 = vpop.trf.xlu0
    %v1231 = vpop.trf.xlu0
    %v1232 = vlaneseq
    %v1233 = vshrl.u32 %v1232, 7
    %v1234 = vsub.s32 0, %v1233
    %v1235 = vrot.slane %v1216, %v1234
    %1237 = vbcast.lane.b32.xlu0 %v1235, 256
    %v1238 = vpop.permute.xlu0 %1237
    %v1239 = vlaneseq
    %v1240 = vshrl.u32 %v1239, 7
    %v1241 = vsub.s32 1, %v1240
    %v1242 = vrot.slane %v1216, %v1241
    %1244 = vbcast.lane.b32.xlu0 %v1242, 256
    %v1245 = vpop.permute.xlu0 %1244
    %v1246 = vlaneseq
    %v1247 = vshrl.u32 %v1246, 7
    %v1248 = vsub.s32 2, %v1247
    %v1249 = vrot.slane %v1216, %v1248
    %1251 = vbcast.lane.b32.xlu0 %v1249, 256
    %v1252 = vpop.permute.xlu0 %1251
    %v1253 = vlaneseq
    %v1254 = vshrl.u32 %v1253, 7
    %v1255 = vsub.s32 3, %v1254
    %v1256 = vrot.slane %v1216, %v1255
    %1258 = vbcast.lane.b32.xlu0 %v1256, 256
    %v1259 = vpop.permute.xlu0 %1258
    %1261 = vrot.lane.b32.xlu0 %v411, 124
    %v1262 = vpop.permute.xlu0 %1261
    %1264 = vxpose.xlu0.b32.start [1/16] %v1262, 128
    %1265 = vxpose.xlu0.b32.cont [2/16] 0.0, 128
    %1266 = vxpose.xlu0.b32.cont [3/16] 0.0, 128
    %1267 = vxpose.xlu0.b32.cont [4/16] 0.0, 128
    %1268 = vxpose.xlu0.b32.cont [5/16] 0.0, 128
    %1269 = vxpose.xlu0.b32.cont [6/16] 0.0, 128
    %1270 = vxpose.xlu0.b32.cont [7/16] 0.0, 128
    %1271 = vxpose.xlu0.b32.cont [8/16] 0.0, 128
    %1272 = vxpose.xlu0.b32.cont [9/16] 0.0, 128
    %1273 = vxpose.xlu0.b32.cont [10/16] 0.0, 128
    %1274 = vxpose.xlu0.b32.cont [11/16] 0.0, 128
    %1275 = vxpose.xlu0.b32.cont [12/16] 0.0, 128
    %1276 = vxpose.xlu0.b32.cont [13/16] 0.0, 128
    %1277 = vxpose.xlu0.b32.cont [14/16] 0.0, 128
    %1278 = vxpose.xlu0.b32.cont [15/16] 0.0, 128
    %1279 = vxpose.xlu0.b32.end [16/16] 0.0, 128
    %v1280 = vpop.trf.xlu0
    %v1281 = vpop.trf.xlu0
    %v1282 = vpop.trf.xlu0
    %v1283 = vpop.trf.xlu0
    %v1284 = vpop.trf.xlu0
    %v1285 = vpop.trf.xlu0
    %v1286 = vpop.trf.xlu0
    %v1287 = vpop.trf.xlu0
    %v1288 = vpop.trf.xlu0
    %v1289 = vpop.trf.xlu0
    %v1290 = vpop.trf.xlu0
    %v1291 = vpop.trf.xlu0
    %v1292 = vpop.trf.xlu0
    %v1293 = vpop.trf.xlu0
    %v1294 = vpop.trf.xlu0
    %v1295 = vpop.trf.xlu0
    %v1298 = vunpack.c.l.s4 1966171168
    %v1299 = vunpack.c.0.s8 %v1298
    %v1300 = vlaneseq
    %v1301 = vshrl.u32 %v1300, 7
    %v1302 = vsub.s32 %v1299, %v1301
    %v1303 = vrot.slane %v1280, %v1302
    %v1304 = vcombine.high %v1303, %v1303
    %v1306 = vunpack.c.l.s4 1966171168
    %v1307 = vunpack.c.0.s8 %v1306
    %v1308 = vlaneseq
    %v1309 = vshrl.u32 %v1308, 7
    %v1310 = vsub.s32 %v1307, %v1309
    %v1311 = vrot.slane %v1303, %v1310
    %v1313 = vunpack.c.l.s4 1966171168
    %v1314 = vunpack.c.0.s8 %v1313
    %v1315 = vlaneseq
    %v1316 = vshrl.u32 %v1315, 7
    %v1317 = vsub.s32 %v1314, %v1316
    %v1318 = vrot.slane %v1304, %v1317
    %v1319 = vcombine.high %v1311, %v1311
    %v1320 = vcombine.high %v1318, %v1318
    %v1325 = vlaneseq
    %v1326 = vshrl.u32 %v1325, 7
    %v1327 = vsub.s32 0, %v1326
    %v1328 = vrot.slane %v1311, %v1327
    %v1329 = vlaneseq
    %v1330 = vshrl.u32 %v1329, 7
    %v1331 = vsub.s32 0, %v1330
    %v1332 = vrot.slane %v1318, %v1331
    %v1333 = vlaneseq
    %v1334 = vshrl.u32 %v1333, 7
    %v1335 = vsub.s32 0, %v1334
    %v1336 = vrot.slane %v1319, %v1335
    %v1337 = vlaneseq
    %v1338 = vshrl.u32 %v1337, 7
    %v1339 = vsub.s32 0, %v1338
    %v1340 = vrot.slane %v1320, %v1339
    // While loop
    $region34: #{ce_alignment_information_forward.1} parent=1 // loop_pre_header
      _
    $region35: #{ce_alignment_information_forward.1} parent=1 // loop_header
      %s1346 = sphi 0, %s3462
      %v1347 = vphi %v1193, %v3450
      %v1348 = vphi %v1195, %v3451
      %v1349 = vphi %v1197, %v3452
      %v1350 = vphi %v1199, %v3453
      %v1351 = vphi 0.0, %v3467
      %v1352 = vphi 0.0, %v3468
      %v1353 = vphi 0.0, %v3469
      %v1354 = vphi 0.0, %v3470
      %p1355 = scmp.lt.s32.totalorder %s1346, 50
      %vm1356 = vcmask 1040384
      %v1357 = vsel %vm1356, %v1351, inf
      %v1358 = vsel %vm1356, %v1352, inf
      %v1359 = vsel %vm1356, %v1353, inf
      %v1360 = vsel %vm1356, %v1354, inf
      %v1361 = vmin.f32 %v1357, %v1358
      %v1362 = vmin.f32 %v1359, %v1360
      %v1363 = vmin.f32 %v1361, %v1362
      %v1364 = vrot.slane %v1363, 4
      %v1365 = vmin.f32 %v1363, %v1364
      %v1366 = vrot.slane %v1365, 2
      %v1367 = vmin.f32 %v1365, %v1366
      %v1368 = vrot.slane %v1367, 1
      %v1369 = vmin.f32 %v1367, %v1368
      %s1370 = vtos %v1369
      %p1371 = scmp.lt.f32.partialorder %s1370, 0.5
      %p1372 = pnand %p1355, %p1371
      %p1373 = pneg %p1372
    $region36: #{ce_alignment_information_forward.1} parent=1 // loop_header_branch
      %1375 = sbr.rel (%p1372) target = $region40
    $region37: #{ce_alignment_information_forward.1} parent=1 // loop_body
      %vm1376 = vcmp.gt.f32.partialorder %v1351, 0.5
      %vm1377 = vcmp.gt.f32.partialorder %v1352, 0.5
      %vm1378 = vcmp.gt.f32.partialorder %v1353, 0.5
      %vm1379 = vcmp.gt.f32.partialorder %v1354, 0.5
      %vm1380 = vcmask 64512
      %v1381 = vsel %vm1380, %v1347, 0.0
      %v1382 = vrot.slane %v1381, 4
      %v1383 = vadd.f32 %v1381, %v1382
      %v1384 = vrot.slane %v1383, 2
      %v1385 = vadd.f32 %v1383, %v1384
      %v1386 = vrot.slane %v1385, 1
      %v1387 = vadd.f32 %v1385, %v1386
      %v1388 = vsel %vm1380, %v1348, 0.0
      %v1389 = vrot.slane %v1388, 4
      %v1390 = vadd.f32 %v1388, %v1389
      %v1391 = vrot.slane %v1390, 2
      %v1392 = vadd.f32 %v1390, %v1391
      %v1393 = vrot.slane %v1392, 1
      %v1394 = vadd.f32 %v1392, %v1393
      %v1395 = vsel %vm1380, %v1349, 0.0
      %v1396 = vrot.slane %v1395, 4
      %v1397 = vadd.f32 %v1395, %v1396
      %v1398 = vrot.slane %v1397, 2
      %v1399 = vadd.f32 %v1397, %v1398
      %v1400 = vrot.slane %v1399, 1
      %v1401 = vadd.f32 %v1399, %v1400
      %v1402 = vsel %vm1380, %v1350, 0.0
      %v1403 = vrot.slane %v1402, 4
      %v1404 = vadd.f32 %v1402, %v1403
      %v1405 = vrot.slane %v1404, 2
      %v1406 = vadd.f32 %v1404, %v1405
      %v1407 = vrot.slane %v1406, 1
      %v1408 = vadd.f32 %v1406, %v1407
      %v1409 = vadd.f32 %v1387, 1e-08
      %v1410 = vadd.f32 %v1394, 1e-08
      %v1411 = vadd.f32 %v1401, 1e-08
      %v1412 = vadd.f32 %v1408, 1e-08
      %v1413 = vrcp.pop %v1409
      %v1414 = vmul.f32 %v1347, %v1413
      %v1415 = vrcp.pop %v1410
      %v1416 = vmul.f32 %v1348, %v1415
      %v1417 = vrcp.pop %v1411
      %v1418 = vmul.f32 %v1349, %v1417
      %v1419 = vrcp.pop %v1412
      %v1420 = vmul.f32 %v1350, %v1419
      %v1421 = vmul.f32 %v1414, %v1328
      %v1422 = vmul.f32 %v1416, %v1332
      %v1423 = vmul.f32 %v1418, %v1336
      %v1424 = vmul.f32 %v1420, %v1340
      %v1425 = vsel %vm1380, %v1421, 0.0
      %1426 = vadd.xlane.f32.xlu0 %v1425
      %v1427 = vpop.xlane.xlu0 %1426
      %v1428 = vsel %vm1380, %v1422, 0.0
      %1429 = vadd.xlane.f32.xlu0 %v1428
      %v1430 = vpop.xlane.xlu0 %1429
      %v1431 = vsel %vm1380, %v1423, 0.0
      %1432 = vadd.xlane.f32.xlu0 %v1431
      %v1433 = vpop.xlane.xlu0 %1432
      %v1434 = vsel %vm1380, %v1424, 0.0
      %1435 = vadd.xlane.f32.xlu0 %v1434
      %v1436 = vpop.xlane.xlu0 %1435
      %v1437 = vsub.f32 %v1427, %v1238
      %v1438 = vsub.f32 %v1430, %v1245
      %v1439 = vsub.f32 %v1433, %v1252
      %v1440 = vsub.f32 %v1436, %v1259
      %v1441 = vand.u32 2147483647, %v1437
      %v1442 = vand.u32 2147483647, %v1438
      %v1443 = vand.u32 2147483647, %v1439
      %v1444 = vand.u32 2147483647, %v1440
      %v1445 = vrot.slane %v1441, 4
      %v1446 = vmax.f32 %v1441, %v1445
      %v1447 = vrot.slane %v1446, 2
      %v1448 = vmax.f32 %v1446, %v1447
      %v1449 = vrot.slane %v1448, 1
      %v1450 = vmax.f32 %v1448, %v1449
      %v1451 = vrot.slane %v1442, 4
      %v1452 = vmax.f32 %v1442, %v1451
      %v1453 = vrot.slane %v1452, 2
      %v1454 = vmax.f32 %v1452, %v1453
      %v1455 = vrot.slane %v1454, 1
      %v1456 = vmax.f32 %v1454, %v1455
      %v1457 = vrot.slane %v1443, 4
      %v1458 = vmax.f32 %v1443, %v1457
      %v1459 = vrot.slane %v1458, 2
      %v1460 = vmax.f32 %v1458, %v1459
      %v1461 = vrot.slane %v1460, 1
      %v1462 = vmax.f32 %v1460, %v1461
      %v1463 = vrot.slane %v1444, 4
      %v1464 = vmax.f32 %v1444, %v1463
      %v1465 = vrot.slane %v1464, 2
      %v1466 = vmax.f32 %v1464, %v1465
      %v1467 = vrot.slane %v1466, 1
      %v1468 = vmax.f32 %v1466, %v1467
      %vm1469 = vcmp.le.f32.partialorder %v1450, 0.01
      %vm1470 = vcmp.le.f32.partialorder %v1456, 0.01
      %vm1471 = vcmp.le.f32.partialorder %v1462, 0.01
      %vm1472 = vcmp.le.f32.partialorder %v1468, 0.01
      %v1473 = vadd.f32 %v1427, 1e-08
      %v1474 = vadd.f32 %v1430, 1e-08
      %v1475 = vadd.f32 %v1433, 1e-08
      %v1476 = vadd.f32 %v1436, 1e-08
      %v1477 = vrcp.pop %v1473
      %v1478 = vmul.f32 %v1421, %v1477
      %v1479 = vrcp.pop %v1474
      %v1480 = vmul.f32 %v1422, %v1479
      %v1481 = vrcp.pop %v1475
      %v1482 = vmul.f32 %v1423, %v1481
      %v1483 = vrcp.pop %v1476
      %v1484 = vmul.f32 %v1424, %v1483
      %v1485 = vmul.f32 %v1478, %v1238
      %v1486 = vmul.f32 %v1480, %v1245
      %v1487 = vmul.f32 %v1482, %v1252
      %v1488 = vmul.f32 %v1484, %v1259
      %v1489 = vsel %vm1380, %v1485, 0.0
      %v1490 = vrot.slane %v1489, 4
      %v1491 = vadd.f32 %v1489, %v1490
      %v1492 = vrot.slane %v1491, 2
      %v1493 = vadd.f32 %v1491, %v1492
      %v1494 = vrot.slane %v1493, 1
      %v1495 = vadd.f32 %v1493, %v1494
      %v1496 = vsel %vm1380, %v1486, 0.0
      %v1497 = vrot.slane %v1496, 4
      %v1498 = vadd.f32 %v1496, %v1497
      %v1499 = vrot.slane %v1498, 2
      %v1500 = vadd.f32 %v1498, %v1499
      %v1501 = vrot.slane %v1500, 1
      %v1502 = vadd.f32 %v1500, %v1501
      %v1503 = vsel %vm1380, %v1487, 0.0
      %v1504 = vrot.slane %v1503, 4
      %v1505 = vadd.f32 %v1503, %v1504
      %v1506 = vrot.slane %v1505, 2
      %v1507 = vadd.f32 %v1505, %v1506
      %v1508 = vrot.slane %v1507, 1
      %v1509 = vadd.f32 %v1507, %v1508
      %v1510 = vsel %vm1380, %v1488, 0.0
      %v1511 = vrot.slane %v1510, 4
      %v1512 = vadd.f32 %v1510, %v1511
      %v1513 = vrot.slane %v1512, 2
      %v1514 = vadd.f32 %v1512, %v1513
      %v1515 = vrot.slane %v1514, 1
      %v1516 = vadd.f32 %v1514, %v1515
      %v1517 = vsub.f32 %v1495, %v1311
      %v1518 = vsub.f32 %v1502, %v1318
      %v1519 = vsub.f32 %v1509, %v1319
      %v1520 = vsub.f32 %v1516, %v1320
      %v1521 = vand.u32 2147483647, %v1517
      %v1522 = vand.u32 2147483647, %v1518
      %v1523 = vand.u32 2147483647, %v1519
      %v1524 = vand.u32 2147483647, %v1520
      %vm1525 = vcmask 57344
      %v1526 = vsel %vm1525, %v1521, -inf
      %1527 = vmax.xlane.f32.xlu0 %v1526
      %v1528 = vpop.xlane.xlu0 %1527
      %v1529 = vsel %vm1525, %v1522, -inf
      %1530 = vmax.xlane.f32.xlu0 %v1529
      %v1531 = vpop.xlane.xlu0 %1530
      %v1532 = vsel %vm1525, %v1523, -inf
      %1533 = vmax.xlane.f32.xlu0 %v1532
      %v1534 = vpop.xlane.xlu0 %1533
      %v1535 = vsel %vm1525, %v1524, -inf
      %1536 = vmax.xlane.f32.xlu0 %v1535
      %v1537 = vpop.xlane.xlu0 %1536
      %vm1538 = vcmp.le.f32.partialorder %v1528, 0.01
      %vm1539 = vcmp.le.f32.partialorder %v1531, 0.01
      %vm1540 = vcmp.le.f32.partialorder %v1534, 0.01
      %vm1541 = vcmp.le.f32.partialorder %v1537, 0.01
      %v1542 = vsel %vm1469, 1, 0
      %v1543 = vsel %vm1470, 1, 0
      %v1544 = vsel %vm1471, 1, 0
      %v1545 = vsel %vm1472, 1, 0
      %vm1546 = vcmp.eq.s32.totalorder %v1542, 1
      %vm1547 = vcmp.eq.s32.totalorder %v1543, 1
      %vm1548 = vcmp.eq.s32.totalorder %v1544, 1
      %vm1549 = vcmp.eq.s32.totalorder %v1545, 1
      %v1550 = vsel %vm1546, %v1421, %v1485
      %v1551 = vsel %vm1547, %v1422, %v1486
      %v1552 = vsel %vm1548, %v1423, %v1487
      %v1553 = vsel %vm1549, %v1424, %v1488
      %v1554 = vsel %vm1376, 1, 0
      %v1555 = vsel %vm1377, 1, 0
      %v1556 = vsel %vm1378, 1, 0
      %v1557 = vsel %vm1379, 1, 0
      %v1558 = vlaneseq
      %v1559 = vshrl.u32 %v1558, 7
      %v1560 = vsub.s32 0, %v1559
      %v1561 = vrot.slane %v1554, %v1560
      %v1562 = vlaneseq
      %v1563 = vshrl.u32 %v1562, 7
      %v1564 = vsub.s32 0, %v1563
      %v1565 = vrot.slane %v1555, %v1564
      %v1566 = vlaneseq
      %v1567 = vshrl.u32 %v1566, 7
      %v1568 = vsub.s32 0, %v1567
      %v1569 = vrot.slane %v1556, %v1568
      %v1570 = vlaneseq
      %v1571 = vshrl.u32 %v1570, 7
      %v1572 = vsub.s32 0, %v1571
      %v1573 = vrot.slane %v1557, %v1572
      %vm1574 = vcmp.eq.s32.totalorder %v1561, 1
      %vm1575 = vcmp.eq.s32.totalorder %v1565, 1
      %vm1576 = vcmp.eq.s32.totalorder %v1569, 1
      %vm1577 = vcmp.eq.s32.totalorder %v1573, 1
      %v1578 = vsel %vm1574, %v1347, %v1550
      %v1579 = vsel %vm1575, %v1348, %v1551
      %v1580 = vsel %vm1576, %v1349, %v1552
      %v1581 = vsel %vm1577, %v1350, %v1553
      %vm1582 = vmor %vm1469, %vm1538
      %vm1583 = vmor %vm1470, %vm1539
      %vm1584 = vmor %vm1471, %vm1540
      %vm1585 = vmor %vm1472, %vm1541
      %vm1586 = vmor %vm1376, %vm1582
      %vm1587 = vmor %vm1377, %vm1583
      %vm1588 = vmor %vm1378, %vm1584
      %vm1589 = vmor %vm1379, %vm1585
      %v1590 = vsel %vm1380, %v1578, 0.0
      %v1591 = vrot.slane %v1590, 4
      %v1592 = vadd.f32 %v1590, %v1591
      %v1593 = vrot.slane %v1592, 2
      %v1594 = vadd.f32 %v1592, %v1593
      %v1595 = vrot.slane %v1594, 1
      %v1596 = vadd.f32 %v1594, %v1595
      %v1597 = vsel %vm1380, %v1579, 0.0
      %v1598 = vrot.slane %v1597, 4
      %v1599 = vadd.f32 %v1597, %v1598
      %v1600 = vrot.slane %v1599, 2
      %v1601 = vadd.f32 %v1599, %v1600
      %v1602 = vrot.slane %v1601, 1
      %v1603 = vadd.f32 %v1601, %v1602
      %v1604 = vsel %vm1380, %v1580, 0.0
      %v1605 = vrot.slane %v1604, 4
      %v1606 = vadd.f32 %v1604, %v1605
      %v1607 = vrot.slane %v1606, 2
      %v1608 = vadd.f32 %v1606, %v1607
      %v1609 = vrot.slane %v1608, 1
      %v1610 = vadd.f32 %v1608, %v1609
      %v1611 = vsel %vm1380, %v1581, 0.0
      %v1612 = vrot.slane %v1611, 4
      %v1613 = vadd.f32 %v1611, %v1612
      %v1614 = vrot.slane %v1613, 2
      %v1615 = vadd.f32 %v1613, %v1614
      %v1616 = vrot.slane %v1615, 1
      %v1617 = vadd.f32 %v1615, %v1616
      %v1618 = vadd.f32 %v1596, 1e-08
      %v1619 = vadd.f32 %v1603, 1e-08
      %v1620 = vadd.f32 %v1610, 1e-08
      %v1621 = vadd.f32 %v1617, 1e-08
      %v1622 = vrcp.pop %v1618
      %v1623 = vmul.f32 %v1578, %v1622
      %v1624 = vrcp.pop %v1619
      %v1625 = vmul.f32 %v1579, %v1624
      %v1626 = vrcp.pop %v1620
      %v1627 = vmul.f32 %v1580, %v1626
      %v1628 = vrcp.pop %v1621
      %v1629 = vmul.f32 %v1581, %v1628
      %v1630 = vmul.f32 %v1623, %v1328
      %v1631 = vmul.f32 %v1625, %v1332
      %v1632 = vmul.f32 %v1627, %v1336
      %v1633 = vmul.f32 %v1629, %v1340
      %v1634 = vsel %vm1380, %v1630, 0.0
      %1635 = vadd.xlane.f32.xlu0 %v1634
      %v1636 = vpop.xlane.xlu0 %1635
      %v1637 = vsel %vm1380, %v1631, 0.0
      %1638 = vadd.xlane.f32.xlu0 %v1637
      %v1639 = vpop.xlane.xlu0 %1638
      %v1640 = vsel %vm1380, %v1632, 0.0
      %1641 = vadd.xlane.f32.xlu0 %v1640
      %v1642 = vpop.xlane.xlu0 %1641
      %v1643 = vsel %vm1380, %v1633, 0.0
      %1644 = vadd.xlane.f32.xlu0 %v1643
      %v1645 = vpop.xlane.xlu0 %1644
      %v1646 = vsub.f32 %v1636, %v1238
      %v1647 = vsub.f32 %v1639, %v1245
      %v1648 = vsub.f32 %v1642, %v1252
      %v1649 = vsub.f32 %v1645, %v1259
      %v1650 = vand.u32 2147483647, %v1646
      %v1651 = vand.u32 2147483647, %v1647
      %v1652 = vand.u32 2147483647, %v1648
      %v1653 = vand.u32 2147483647, %v1649
      %v1654 = vrot.slane %v1650, 4
      %v1655 = vmax.f32 %v1650, %v1654
      %v1656 = vrot.slane %v1655, 2
      %v1657 = vmax.f32 %v1655, %v1656
      %v1658 = vrot.slane %v1657, 1
      %v1659 = vmax.f32 %v1657, %v1658
      %v1660 = vrot.slane %v1651, 4
      %v1661 = vmax.f32 %v1651, %v1660
      %v1662 = vrot.slane %v1661, 2
      %v1663 = vmax.f32 %v1661, %v1662
      %v1664 = vrot.slane %v1663, 1
      %v1665 = vmax.f32 %v1663, %v1664
      %v1666 = vrot.slane %v1652, 4
      %v1667 = vmax.f32 %v1652, %v1666
      %v1668 = vrot.slane %v1667, 2
      %v1669 = vmax.f32 %v1667, %v1668
      %v1670 = vrot.slane %v1669, 1
      %v1671 = vmax.f32 %v1669, %v1670
      %v1672 = vrot.slane %v1653, 4
      %v1673 = vmax.f32 %v1653, %v1672
      %v1674 = vrot.slane %v1673, 2
      %v1675 = vmax.f32 %v1673, %v1674
      %v1676 = vrot.slane %v1675, 1
      %v1677 = vmax.f32 %v1675, %v1676
      %vm1678 = vcmp.le.f32.partialorder %v1659, 0.01
      %vm1679 = vcmp.le.f32.partialorder %v1665, 0.01
      %vm1680 = vcmp.le.f32.partialorder %v1671, 0.01
      %vm1681 = vcmp.le.f32.partialorder %v1677, 0.01
      %v1682 = vadd.f32 %v1636, 1e-08
      %v1683 = vadd.f32 %v1639, 1e-08
      %v1684 = vadd.f32 %v1642, 1e-08
      %v1685 = vadd.f32 %v1645, 1e-08
      %v1686 = vrcp.pop %v1682
      %v1687 = vmul.f32 %v1630, %v1686
      %v1688 = vrcp.pop %v1683
      %v1689 = vmul.f32 %v1631, %v1688
      %v1690 = vrcp.pop %v1684
      %v1691 = vmul.f32 %v1632, %v1690
      %v1692 = vrcp.pop %v1685
      %v1693 = vmul.f32 %v1633, %v1692
      %v1694 = vmul.f32 %v1687, %v1238
      %v1695 = vmul.f32 %v1689, %v1245
      %v1696 = vmul.f32 %v1691, %v1252
      %v1697 = vmul.f32 %v1693, %v1259
      %v1698 = vsel %vm1380, %v1694, 0.0
      %v1699 = vrot.slane %v1698, 4
      %v1700 = vadd.f32 %v1698, %v1699
      %v1701 = vrot.slane %v1700, 2
      %v1702 = vadd.f32 %v1700, %v1701
      %v1703 = vrot.slane %v1702, 1
      %v1704 = vadd.f32 %v1702, %v1703
      %v1705 = vsel %vm1380, %v1695, 0.0
      %v1706 = vrot.slane %v1705, 4
      %v1707 = vadd.f32 %v1705, %v1706
      %v1708 = vrot.slane %v1707, 2
      %v1709 = vadd.f32 %v1707, %v1708
      %v1710 = vrot.slane %v1709, 1
      %v1711 = vadd.f32 %v1709, %v1710
      %v1712 = vsel %vm1380, %v1696, 0.0
      %v1713 = vrot.slane %v1712, 4
      %v1714 = vadd.f32 %v1712, %v1713
      %v1715 = vrot.slane %v1714, 2
      %v1716 = vadd.f32 %v1714, %v1715
      %v1717 = vrot.slane %v1716, 1
      %v1718 = vadd.f32 %v1716, %v1717
      %v1719 = vsel %vm1380, %v1697, 0.0
      %v1720 = vrot.slane %v1719, 4
      %v1721 = vadd.f32 %v1719, %v1720
      %v1722 = vrot.slane %v1721, 2
      %v1723 = vadd.f32 %v1721, %v1722
      %v1724 = vrot.slane %v1723, 1
      %v1725 = vadd.f32 %v1723, %v1724
      %v1726 = vsub.f32 %v1704, %v1311
      %v1727 = vsub.f32 %v1711, %v1318
      %v1728 = vsub.f32 %v1718, %v1319
      %v1729 = vsub.f32 %v1725, %v1320
      %v1730 = vand.u32 2147483647, %v1726
      %v1731 = vand.u32 2147483647, %v1727
      %v1732 = vand.u32 2147483647, %v1728
      %v1733 = vand.u32 2147483647, %v1729
      %v1734 = vsel %vm1525, %v1730, -inf
      %1735 = vmax.xlane.f32.xlu0 %v1734
      %v1736 = vpop.xlane.xlu0 %1735
      %v1737 = vsel %vm1525, %v1731, -inf
      %1738 = vmax.xlane.f32.xlu0 %v1737
      %v1739 = vpop.xlane.xlu0 %1738
      %v1740 = vsel %vm1525, %v1732, -inf
      %1741 = vmax.xlane.f32.xlu0 %v1740
      %v1742 = vpop.xlane.xlu0 %1741
      %v1743 = vsel %vm1525, %v1733, -inf
      %1744 = vmax.xlane.f32.xlu0 %v1743
      %v1745 = vpop.xlane.xlu0 %1744
      %vm1746 = vcmp.le.f32.partialorder %v1736, 0.01
      %vm1747 = vcmp.le.f32.partialorder %v1739, 0.01
      %vm1748 = vcmp.le.f32.partialorder %v1742, 0.01
      %vm1749 = vcmp.le.f32.partialorder %v1745, 0.01
      %v1750 = vsel %vm1678, 1, 0
      %v1751 = vsel %vm1679, 1, 0
      %v1752 = vsel %vm1680, 1, 0
      %v1753 = vsel %vm1681, 1, 0
      %vm1754 = vcmp.eq.s32.totalorder %v1750, 1
      %vm1755 = vcmp.eq.s32.totalorder %v1751, 1
      %vm1756 = vcmp.eq.s32.totalorder %v1752, 1
      %vm1757 = vcmp.eq.s32.totalorder %v1753, 1
      %v1758 = vsel %vm1754, %v1630, %v1694
      %v1759 = vsel %vm1755, %v1631, %v1695
      %v1760 = vsel %vm1756, %v1632, %v1696
      %v1761 = vsel %vm1757, %v1633, %v1697
      %v1762 = vsel %vm1586, 1, 0
      %v1763 = vsel %vm1587, 1, 0
      %v1764 = vsel %vm1588, 1, 0
      %v1765 = vsel %vm1589, 1, 0
      %v1766 = vlaneseq
      %v1767 = vshrl.u32 %v1766, 7
      %v1768 = vsub.s32 0, %v1767
      %v1769 = vrot.slane %v1762, %v1768
      %v1770 = vlaneseq
      %v1771 = vshrl.u32 %v1770, 7
      %v1772 = vsub.s32 0, %v1771
      %v1773 = vrot.slane %v1763, %v1772
      %v1774 = vlaneseq
      %v1775 = vshrl.u32 %v1774, 7
      %v1776 = vsub.s32 0, %v1775
      %v1777 = vrot.slane %v1764, %v1776
      %v1778 = vlaneseq
      %v1779 = vshrl.u32 %v1778, 7
      %v1780 = vsub.s32 0, %v1779
      %v1781 = vrot.slane %v1765, %v1780
      %vm1782 = vcmp.eq.s32.totalorder %v1769, 1
      %vm1783 = vcmp.eq.s32.totalorder %v1773, 1
      %vm1784 = vcmp.eq.s32.totalorder %v1777, 1
      %vm1785 = vcmp.eq.s32.totalorder %v1781, 1
      %v1786 = vsel %vm1782, %v1578, %v1758
      %v1787 = vsel %vm1783, %v1579, %v1759
      %v1788 = vsel %vm1784, %v1580, %v1760
      %v1789 = vsel %vm1785, %v1581, %v1761
      %vm1790 = vmor %vm1678, %vm1746
      %vm1791 = vmor %vm1679, %vm1747
      %vm1792 = vmor %vm1680, %vm1748
      %vm1793 = vmor %vm1681, %vm1749
      %vm1794 = vmor %vm1586, %vm1790
      %vm1795 = vmor %vm1587, %vm1791
      %vm1796 = vmor %vm1588, %vm1792
      %vm1797 = vmor %vm1589, %vm1793
      %v1798 = vsel %vm1380, %v1786, 0.0
      %v1799 = vrot.slane %v1798, 4
      %v1800 = vadd.f32 %v1798, %v1799
      %v1801 = vrot.slane %v1800, 2
      %v1802 = vadd.f32 %v1800, %v1801
      %v1803 = vrot.slane %v1802, 1
      %v1804 = vadd.f32 %v1802, %v1803
      %v1805 = vsel %vm1380, %v1787, 0.0
      %v1806 = vrot.slane %v1805, 4
      %v1807 = vadd.f32 %v1805, %v1806
      %v1808 = vrot.slane %v1807, 2
      %v1809 = vadd.f32 %v1807, %v1808
      %v1810 = vrot.slane %v1809, 1
      %v1811 = vadd.f32 %v1809, %v1810
      %v1812 = vsel %vm1380, %v1788, 0.0
      %v1813 = vrot.slane %v1812, 4
      %v1814 = vadd.f32 %v1812, %v1813
      %v1815 = vrot.slane %v1814, 2
      %v1816 = vadd.f32 %v1814, %v1815
      %v1817 = vrot.slane %v1816, 1
      %v1818 = vadd.f32 %v1816, %v1817
      %v1819 = vsel %vm1380, %v1789, 0.0
      %v1820 = vrot.slane %v1819, 4
      %v1821 = vadd.f32 %v1819, %v1820
      %v1822 = vrot.slane %v1821, 2
      %v1823 = vadd.f32 %v1821, %v1822
      %v1824 = vrot.slane %v1823, 1
      %v1825 = vadd.f32 %v1823, %v1824
      %v1826 = vadd.f32 %v1804, 1e-08
      %v1827 = vadd.f32 %v1811, 1e-08
      %v1828 = vadd.f32 %v1818, 1e-08
      %v1829 = vadd.f32 %v1825, 1e-08
      %v1830 = vrcp.pop %v1826
      %v1831 = vmul.f32 %v1786, %v1830
      %v1832 = vrcp.pop %v1827
      %v1833 = vmul.f32 %v1787, %v1832
      %v1834 = vrcp.pop %v1828
      %v1835 = vmul.f32 %v1788, %v1834
      %v1836 = vrcp.pop %v1829
      %v1837 = vmul.f32 %v1789, %v1836
      %v1838 = vmul.f32 %v1831, %v1328
      %v1839 = vmul.f32 %v1833, %v1332
      %v1840 = vmul.f32 %v1835, %v1336
      %v1841 = vmul.f32 %v1837, %v1340
      %v1842 = vsel %vm1380, %v1838, 0.0
      %1843 = vadd.xlane.f32.xlu0 %v1842
      %v1844 = vpop.xlane.xlu0 %1843
      %v1845 = vsel %vm1380, %v1839, 0.0
      %1846 = vadd.xlane.f32.xlu0 %v1845
      %v1847 = vpop.xlane.xlu0 %1846
      %v1848 = vsel %vm1380, %v1840, 0.0
      %1849 = vadd.xlane.f32.xlu0 %v1848
      %v1850 = vpop.xlane.xlu0 %1849
      %v1851 = vsel %vm1380, %v1841, 0.0
      %1852 = vadd.xlane.f32.xlu0 %v1851
      %v1853 = vpop.xlane.xlu0 %1852
      %v1854 = vsub.f32 %v1844, %v1238
      %v1855 = vsub.f32 %v1847, %v1245
      %v1856 = vsub.f32 %v1850, %v1252
      %v1857 = vsub.f32 %v1853, %v1259
      %v1858 = vand.u32 2147483647, %v1854
      %v1859 = vand.u32 2147483647, %v1855
      %v1860 = vand.u32 2147483647, %v1856
      %v1861 = vand.u32 2147483647, %v1857
      %v1862 = vrot.slane %v1858, 4
      %v1863 = vmax.f32 %v1858, %v1862
      %v1864 = vrot.slane %v1863, 2
      %v1865 = vmax.f32 %v1863, %v1864
      %v1866 = vrot.slane %v1865, 1
      %v1867 = vmax.f32 %v1865, %v1866
      %v1868 = vrot.slane %v1859, 4
      %v1869 = vmax.f32 %v1859, %v1868
      %v1870 = vrot.slane %v1869, 2
      %v1871 = vmax.f32 %v1869, %v1870
      %v1872 = vrot.slane %v1871, 1
      %v1873 = vmax.f32 %v1871, %v1872
      %v1874 = vrot.slane %v1860, 4
      %v1875 = vmax.f32 %v1860, %v1874
      %v1876 = vrot.slane %v1875, 2
      %v1877 = vmax.f32 %v1875, %v1876
      %v1878 = vrot.slane %v1877, 1
      %v1879 = vmax.f32 %v1877, %v1878
      %v1880 = vrot.slane %v1861, 4
      %v1881 = vmax.f32 %v1861, %v1880
      %v1882 = vrot.slane %v1881, 2
      %v1883 = vmax.f32 %v1881, %v1882
      %v1884 = vrot.slane %v1883, 1
      %v1885 = vmax.f32 %v1883, %v1884
      %vm1886 = vcmp.le.f32.partialorder %v1867, 0.01
      %vm1887 = vcmp.le.f32.partialorder %v1873, 0.01
      %vm1888 = vcmp.le.f32.partialorder %v1879, 0.01
      %vm1889 = vcmp.le.f32.partialorder %v1885, 0.01
      %v1890 = vadd.f32 %v1844, 1e-08
      %v1891 = vadd.f32 %v1847, 1e-08
      %v1892 = vadd.f32 %v1850, 1e-08
      %v1893 = vadd.f32 %v1853, 1e-08
      %v1894 = vrcp.pop %v1890
      %v1895 = vmul.f32 %v1838, %v1894
      %v1896 = vrcp.pop %v1891
      %v1897 = vmul.f32 %v1839, %v1896
      %v1898 = vrcp.pop %v1892
      %v1899 = vmul.f32 %v1840, %v1898
      %v1900 = vrcp.pop %v1893
      %v1901 = vmul.f32 %v1841, %v1900
      %v1902 = vmul.f32 %v1895, %v1238
      %v1903 = vmul.f32 %v1897, %v1245
      %v1904 = vmul.f32 %v1899, %v1252
      %v1905 = vmul.f32 %v1901, %v1259
      %v1906 = vsel %vm1380, %v1902, 0.0
      %v1907 = vrot.slane %v1906, 4
      %v1908 = vadd.f32 %v1906, %v1907
      %v1909 = vrot.slane %v1908, 2
      %v1910 = vadd.f32 %v1908, %v1909
      %v1911 = vrot.slane %v1910, 1
      %v1912 = vadd.f32 %v1910, %v1911
      %v1913 = vsel %vm1380, %v1903, 0.0
      %v1914 = vrot.slane %v1913, 4
      %v1915 = vadd.f32 %v1913, %v1914
      %v1916 = vrot.slane %v1915, 2
      %v1917 = vadd.f32 %v1915, %v1916
      %v1918 = vrot.slane %v1917, 1
      %v1919 = vadd.f32 %v1917, %v1918
      %v1920 = vsel %vm1380, %v1904, 0.0
      %v1921 = vrot.slane %v1920, 4
      %v1922 = vadd.f32 %v1920, %v1921
      %v1923 = vrot.slane %v1922, 2
      %v1924 = vadd.f32 %v1922, %v1923
      %v1925 = vrot.slane %v1924, 1
      %v1926 = vadd.f32 %v1924, %v1925
      %v1927 = vsel %vm1380, %v1905, 0.0
      %v1928 = vrot.slane %v1927, 4
      %v1929 = vadd.f32 %v1927, %v1928
      %v1930 = vrot.slane %v1929, 2
      %v1931 = vadd.f32 %v1929, %v1930
      %v1932 = vrot.slane %v1931, 1
      %v1933 = vadd.f32 %v1931, %v1932
      %v1934 = vsub.f32 %v1912, %v1311
      %v1935 = vsub.f32 %v1919, %v1318
      %v1936 = vsub.f32 %v1926, %v1319
      %v1937 = vsub.f32 %v1933, %v1320
      %v1938 = vand.u32 2147483647, %v1934
      %v1939 = vand.u32 2147483647, %v1935
      %v1940 = vand.u32 2147483647, %v1936
      %v1941 = vand.u32 2147483647, %v1937
      %v1942 = vsel %vm1525, %v1938, -inf
      %1943 = vmax.xlane.f32.xlu0 %v1942
      %v1944 = vpop.xlane.xlu0 %1943
      %v1945 = vsel %vm1525, %v1939, -inf
      %1946 = vmax.xlane.f32.xlu0 %v1945
      %v1947 = vpop.xlane.xlu0 %1946
      %v1948 = vsel %vm1525, %v1940, -inf
      %1949 = vmax.xlane.f32.xlu0 %v1948
      %v1950 = vpop.xlane.xlu0 %1949
      %v1951 = vsel %vm1525, %v1941, -inf
      %1952 = vmax.xlane.f32.xlu0 %v1951
      %v1953 = vpop.xlane.xlu0 %1952
      %vm1954 = vcmp.le.f32.partialorder %v1944, 0.01
      %vm1955 = vcmp.le.f32.partialorder %v1947, 0.01
      %vm1956 = vcmp.le.f32.partialorder %v1950, 0.01
      %vm1957 = vcmp.le.f32.partialorder %v1953, 0.01
      %v1958 = vsel %vm1886, 1, 0
      %v1959 = vsel %vm1887, 1, 0
      %v1960 = vsel %vm1888, 1, 0
      %v1961 = vsel %vm1889, 1, 0
      %vm1962 = vcmp.eq.s32.totalorder %v1958, 1
      %vm1963 = vcmp.eq.s32.totalorder %v1959, 1
      %vm1964 = vcmp.eq.s32.totalorder %v1960, 1
      %vm1965 = vcmp.eq.s32.totalorder %v1961, 1
      %v1966 = vsel %vm1962, %v1838, %v1902
      %v1967 = vsel %vm1963, %v1839, %v1903
      %v1968 = vsel %vm1964, %v1840, %v1904
      %v1969 = vsel %vm1965, %v1841, %v1905
      %v1970 = vsel %vm1794, 1, 0
      %v1971 = vsel %vm1795, 1, 0
      %v1972 = vsel %vm1796, 1, 0
      %v1973 = vsel %vm1797, 1, 0
      %v1974 = vlaneseq
      %v1975 = vshrl.u32 %v1974, 7
      %v1976 = vsub.s32 0, %v1975
      %v1977 = vrot.slane %v1970, %v1976
      %v1978 = vlaneseq
      %v1979 = vshrl.u32 %v1978, 7
      %v1980 = vsub.s32 0, %v1979
      %v1981 = vrot.slane %v1971, %v1980
      %v1982 = vlaneseq
      %v1983 = vshrl.u32 %v1982, 7
      %v1984 = vsub.s32 0, %v1983
      %v1985 = vrot.slane %v1972, %v1984
      %v1986 = vlaneseq
      %v1987 = vshrl.u32 %v1986, 7
      %v1988 = vsub.s32 0, %v1987
      %v1989 = vrot.slane %v1973, %v1988
      %vm1990 = vcmp.eq.s32.totalorder %v1977, 1
      %vm1991 = vcmp.eq.s32.totalorder %v1981, 1
      %vm1992 = vcmp.eq.s32.totalorder %v1985, 1
      %vm1993 = vcmp.eq.s32.totalorder %v1989, 1
      %v1994 = vsel %vm1990, %v1786, %v1966
      %v1995 = vsel %vm1991, %v1787, %v1967
      %v1996 = vsel %vm1992, %v1788, %v1968
      %v1997 = vsel %vm1993, %v1789, %v1969
      %vm1998 = vmor %vm1886, %vm1954
      %vm1999 = vmor %vm1887, %vm1955
      %vm2000 = vmor %vm1888, %vm1956
      %vm2001 = vmor %vm1889, %vm1957
      %vm2002 = vmor %vm1794, %vm1998
      %vm2003 = vmor %vm1795, %vm1999
      %vm2004 = vmor %vm1796, %vm2000
      %vm2005 = vmor %vm1797, %vm2001
      %v2006 = vsel %vm1380, %v1994, 0.0
      %v2007 = vrot.slane %v2006, 4
      %v2008 = vadd.f32 %v2006, %v2007
      %v2009 = vrot.slane %v2008, 2
      %v2010 = vadd.f32 %v2008, %v2009
      %v2011 = vrot.slane %v2010, 1
      %v2012 = vadd.f32 %v2010, %v2011
      %v2013 = vsel %vm1380, %v1995, 0.0
      %v2014 = vrot.slane %v2013, 4
      %v2015 = vadd.f32 %v2013, %v2014
      %v2016 = vrot.slane %v2015, 2
      %v2017 = vadd.f32 %v2015, %v2016
      %v2018 = vrot.slane %v2017, 1
      %v2019 = vadd.f32 %v2017, %v2018
      %v2020 = vsel %vm1380, %v1996, 0.0
      %v2021 = vrot.slane %v2020, 4
      %v2022 = vadd.f32 %v2020, %v2021
      %v2023 = vrot.slane %v2022, 2
      %v2024 = vadd.f32 %v2022, %v2023
      %v2025 = vrot.slane %v2024, 1
      %v2026 = vadd.f32 %v2024, %v2025
      %v2027 = vsel %vm1380, %v1997, 0.0
      %v2028 = vrot.slane %v2027, 4
      %v2029 = vadd.f32 %v2027, %v2028
      %v2030 = vrot.slane %v2029, 2
      %v2031 = vadd.f32 %v2029, %v2030
      %v2032 = vrot.slane %v2031, 1
      %v2033 = vadd.f32 %v2031, %v2032
      %v2034 = vadd.f32 %v2012, 1e-08
      %v2035 = vadd.f32 %v2019, 1e-08
      %v2036 = vadd.f32 %v2026, 1e-08
      %v2037 = vadd.f32 %v2033, 1e-08
      %v2038 = vrcp.pop %v2034
      %v2039 = vmul.f32 %v1994, %v2038
      %v2040 = vrcp.pop %v2035
      %v2041 = vmul.f32 %v1995, %v2040
      %v2042 = vrcp.pop %v2036
      %v2043 = vmul.f32 %v1996, %v2042
      %v2044 = vrcp.pop %v2037
      %v2045 = vmul.f32 %v1997, %v2044
      %v2046 = vmul.f32 %v2039, %v1328
      %v2047 = vmul.f32 %v2041, %v1332
      %v2048 = vmul.f32 %v2043, %v1336
      %v2049 = vmul.f32 %v2045, %v1340
      %v2050 = vsel %vm1380, %v2046, 0.0
      %2051 = vadd.xlane.f32.xlu0 %v2050
      %v2052 = vpop.xlane.xlu0 %2051
      %v2053 = vsel %vm1380, %v2047, 0.0
      %2054 = vadd.xlane.f32.xlu0 %v2053
      %v2055 = vpop.xlane.xlu0 %2054
      %v2056 = vsel %vm1380, %v2048, 0.0
      %2057 = vadd.xlane.f32.xlu0 %v2056
      %v2058 = vpop.xlane.xlu0 %2057
      %v2059 = vsel %vm1380, %v2049, 0.0
      %2060 = vadd.xlane.f32.xlu0 %v2059
      %v2061 = vpop.xlane.xlu0 %2060
      %v2062 = vsub.f32 %v2052, %v1238
      %v2063 = vsub.f32 %v2055, %v1245
      %v2064 = vsub.f32 %v2058, %v1252
      %v2065 = vsub.f32 %v2061, %v1259
      %v2066 = vand.u32 2147483647, %v2062
      %v2067 = vand.u32 2147483647, %v2063
      %v2068 = vand.u32 2147483647, %v2064
      %v2069 = vand.u32 2147483647, %v2065
      %v2070 = vrot.slane %v2066, 4
      %v2071 = vmax.f32 %v2066, %v2070
      %v2072 = vrot.slane %v2071, 2
      %v2073 = vmax.f32 %v2071, %v2072
      %v2074 = vrot.slane %v2073, 1
      %v2075 = vmax.f32 %v2073, %v2074
      %v2076 = vrot.slane %v2067, 4
      %v2077 = vmax.f32 %v2067, %v2076
      %v2078 = vrot.slane %v2077, 2
      %v2079 = vmax.f32 %v2077, %v2078
      %v2080 = vrot.slane %v2079, 1
      %v2081 = vmax.f32 %v2079, %v2080
      %v2082 = vrot.slane %v2068, 4
      %v2083 = vmax.f32 %v2068, %v2082
      %v2084 = vrot.slane %v2083, 2
      %v2085 = vmax.f32 %v2083, %v2084
      %v2086 = vrot.slane %v2085, 1
      %v2087 = vmax.f32 %v2085, %v2086
      %v2088 = vrot.slane %v2069, 4
      %v2089 = vmax.f32 %v2069, %v2088
      %v2090 = vrot.slane %v2089, 2
      %v2091 = vmax.f32 %v2089, %v2090
      %v2092 = vrot.slane %v2091, 1
      %v2093 = vmax.f32 %v2091, %v2092
      %vm2094 = vcmp.le.f32.partialorder %v2075, 0.01
      %vm2095 = vcmp.le.f32.partialorder %v2081, 0.01
      %vm2096 = vcmp.le.f32.partialorder %v2087, 0.01
      %vm2097 = vcmp.le.f32.partialorder %v2093, 0.01
      %v2098 = vadd.f32 %v2052, 1e-08
      %v2099 = vadd.f32 %v2055, 1e-08
      %v2100 = vadd.f32 %v2058, 1e-08
      %v2101 = vadd.f32 %v2061, 1e-08
      %v2102 = vrcp.pop %v2098
      %v2103 = vmul.f32 %v2046, %v2102
      %v2104 = vrcp.pop %v2099
      %v2105 = vmul.f32 %v2047, %v2104
      %v2106 = vrcp.pop %v2100
      %v2107 = vmul.f32 %v2048, %v2106
      %v2108 = vrcp.pop %v2101
      %v2109 = vmul.f32 %v2049, %v2108
      %v2110 = vmul.f32 %v2103, %v1238
      %v2111 = vmul.f32 %v2105, %v1245
      %v2112 = vmul.f32 %v2107, %v1252
      %v2113 = vmul.f32 %v2109, %v1259
      %v2114 = vsel %vm1380, %v2110, 0.0
      %v2115 = vrot.slane %v2114, 4
      %v2116 = vadd.f32 %v2114, %v2115
      %v2117 = vrot.slane %v2116, 2
      %v2118 = vadd.f32 %v2116, %v2117
      %v2119 = vrot.slane %v2118, 1
      %v2120 = vadd.f32 %v2118, %v2119
      %v2121 = vsel %vm1380, %v2111, 0.0
      %v2122 = vrot.slane %v2121, 4
      %v2123 = vadd.f32 %v2121, %v2122
      %v2124 = vrot.slane %v2123, 2
      %v2125 = vadd.f32 %v2123, %v2124
      %v2126 = vrot.slane %v2125, 1
      %v2127 = vadd.f32 %v2125, %v2126
      %v2128 = vsel %vm1380, %v2112, 0.0
      %v2129 = vrot.slane %v2128, 4
      %v2130 = vadd.f32 %v2128, %v2129
      %v2131 = vrot.slane %v2130, 2
      %v2132 = vadd.f32 %v2130, %v2131
      %v2133 = vrot.slane %v2132, 1
      %v2134 = vadd.f32 %v2132, %v2133
      %v2135 = vsel %vm1380, %v2113, 0.0
      %v2136 = vrot.slane %v2135, 4
      %v2137 = vadd.f32 %v2135, %v2136
      %v2138 = vrot.slane %v2137, 2
      %v2139 = vadd.f32 %v2137, %v2138
      %v2140 = vrot.slane %v2139, 1
      %v2141 = vadd.f32 %v2139, %v2140
      %v2142 = vsub.f32 %v2120, %v1311
      %v2143 = vsub.f32 %v2127, %v1318
      %v2144 = vsub.f32 %v2134, %v1319
      %v2145 = vsub.f32 %v2141, %v1320
      %v2146 = vand.u32 2147483647, %v2142
      %v2147 = vand.u32 2147483647, %v2143
      %v2148 = vand.u32 2147483647, %v2144
      %v2149 = vand.u32 2147483647, %v2145
      %v2150 = vsel %vm1525, %v2146, -inf
      %2151 = vmax.xlane.f32.xlu0 %v2150
      %v2152 = vpop.xlane.xlu0 %2151
      %v2153 = vsel %vm1525, %v2147, -inf
      %2154 = vmax.xlane.f32.xlu0 %v2153
      %v2155 = vpop.xlane.xlu0 %2154
      %v2156 = vsel %vm1525, %v2148, -inf
      %2157 = vmax.xlane.f32.xlu0 %v2156
      %v2158 = vpop.xlane.xlu0 %2157
      %v2159 = vsel %vm1525, %v2149, -inf
      %2160 = vmax.xlane.f32.xlu0 %v2159
      %v2161 = vpop.xlane.xlu0 %2160
      %vm2162 = vcmp.le.f32.partialorder %v2152, 0.01
      %vm2163 = vcmp.le.f32.partialorder %v2155, 0.01
      %vm2164 = vcmp.le.f32.partialorder %v2158, 0.01
      %vm2165 = vcmp.le.f32.partialorder %v2161, 0.01
      %v2166 = vsel %vm2094, 1, 0
      %v2167 = vsel %vm2095, 1, 0
      %v2168 = vsel %vm2096, 1, 0
      %v2169 = vsel %vm2097, 1, 0
      %vm2170 = vcmp.eq.s32.totalorder %v2166, 1
      %vm2171 = vcmp.eq.s32.totalorder %v2167, 1
      %vm2172 = vcmp.eq.s32.totalorder %v2168, 1
      %vm2173 = vcmp.eq.s32.totalorder %v2169, 1
      %v2174 = vsel %vm2170, %v2046, %v2110
      %v2175 = vsel %vm2171, %v2047, %v2111
      %v2176 = vsel %vm2172, %v2048, %v2112
      %v2177 = vsel %vm2173, %v2049, %v2113
      %v2178 = vsel %vm2002, 1, 0
      %v2179 = vsel %vm2003, 1, 0
      %v2180 = vsel %vm2004, 1, 0
      %v2181 = vsel %vm2005, 1, 0
      %v2182 = vlaneseq
      %v2183 = vshrl.u32 %v2182, 7
      %v2184 = vsub.s32 0, %v2183
      %v2185 = vrot.slane %v2178, %v2184
      %v2186 = vlaneseq
      %v2187 = vshrl.u32 %v2186, 7
      %v2188 = vsub.s32 0, %v2187
      %v2189 = vrot.slane %v2179, %v2188
      %v2190 = vlaneseq
      %v2191 = vshrl.u32 %v2190, 7
      %v2192 = vsub.s32 0, %v2191
      %v2193 = vrot.slane %v2180, %v2192
      %v2194 = vlaneseq
      %v2195 = vshrl.u32 %v2194, 7
      %v2196 = vsub.s32 0, %v2195
      %v2197 = vrot.slane %v2181, %v2196
      %vm2198 = vcmp.eq.s32.totalorder %v2185, 1
      %vm2199 = vcmp.eq.s32.totalorder %v2189, 1
      %vm2200 = vcmp.eq.s32.totalorder %v2193, 1
      %vm2201 = vcmp.eq.s32.totalorder %v2197, 1
      %v2202 = vsel %vm2198, %v1994, %v2174
      %v2203 = vsel %vm2199, %v1995, %v2175
      %v2204 = vsel %vm2200, %v1996, %v2176
      %v2205 = vsel %vm2201, %v1997, %v2177
      %vm2206 = vmor %vm2094, %vm2162
      %vm2207 = vmor %vm2095, %vm2163
      %vm2208 = vmor %vm2096, %vm2164
      %vm2209 = vmor %vm2097, %vm2165
      %vm2210 = vmor %vm2002, %vm2206
      %vm2211 = vmor %vm2003, %vm2207
      %vm2212 = vmor %vm2004, %vm2208
      %vm2213 = vmor %vm2005, %vm2209
      %v2214 = vsel %vm1380, %v2202, 0.0
      %v2215 = vrot.slane %v2214, 4
      %v2216 = vadd.f32 %v2214, %v2215
      %v2217 = vrot.slane %v2216, 2
      %v2218 = vadd.f32 %v2216, %v2217
      %v2219 = vrot.slane %v2218, 1
      %v2220 = vadd.f32 %v2218, %v2219
      %v2221 = vsel %vm1380, %v2203, 0.0
      %v2222 = vrot.slane %v2221, 4
      %v2223 = vadd.f32 %v2221, %v2222
      %v2224 = vrot.slane %v2223, 2
      %v2225 = vadd.f32 %v2223, %v2224
      %v2226 = vrot.slane %v2225, 1
      %v2227 = vadd.f32 %v2225, %v2226
      %v2228 = vsel %vm1380, %v2204, 0.0
      %v2229 = vrot.slane %v2228, 4
      %v2230 = vadd.f32 %v2228, %v2229
      %v2231 = vrot.slane %v2230, 2
      %v2232 = vadd.f32 %v2230, %v2231
      %v2233 = vrot.slane %v2232, 1
      %v2234 = vadd.f32 %v2232, %v2233
      %v2235 = vsel %vm1380, %v2205, 0.0
      %v2236 = vrot.slane %v2235, 4
      %v2237 = vadd.f32 %v2235, %v2236
      %v2238 = vrot.slane %v2237, 2
      %v2239 = vadd.f32 %v2237, %v2238
      %v2240 = vrot.slane %v2239, 1
      %v2241 = vadd.f32 %v2239, %v2240
      %v2242 = vadd.f32 %v2220, 1e-08
      %v2243 = vadd.f32 %v2227, 1e-08
      %v2244 = vadd.f32 %v2234, 1e-08
      %v2245 = vadd.f32 %v2241, 1e-08
      %v2246 = vrcp.pop %v2242
      %v2247 = vmul.f32 %v2202, %v2246
      %v2248 = vrcp.pop %v2243
      %v2249 = vmul.f32 %v2203, %v2248
      %v2250 = vrcp.pop %v2244
      %v2251 = vmul.f32 %v2204, %v2250
      %v2252 = vrcp.pop %v2245
      %v2253 = vmul.f32 %v2205, %v2252
      %v2254 = vmul.f32 %v2247, %v1328
      %v2255 = vmul.f32 %v2249, %v1332
      %v2256 = vmul.f32 %v2251, %v1336
      %v2257 = vmul.f32 %v2253, %v1340
      %v2258 = vsel %vm1380, %v2254, 0.0
      %2259 = vadd.xlane.f32.xlu0 %v2258
      %v2260 = vpop.xlane.xlu0 %2259
      %v2261 = vsel %vm1380, %v2255, 0.0
      %2262 = vadd.xlane.f32.xlu0 %v2261
      %v2263 = vpop.xlane.xlu0 %2262
      %v2264 = vsel %vm1380, %v2256, 0.0
      %2265 = vadd.xlane.f32.xlu0 %v2264
      %v2266 = vpop.xlane.xlu0 %2265
      %v2267 = vsel %vm1380, %v2257, 0.0
      %2268 = vadd.xlane.f32.xlu0 %v2267
      %v2269 = vpop.xlane.xlu0 %2268
      %v2270 = vsub.f32 %v2260, %v1238
      %v2271 = vsub.f32 %v2263, %v1245
      %v2272 = vsub.f32 %v2266, %v1252
      %v2273 = vsub.f32 %v2269, %v1259
      %v2274 = vand.u32 2147483647, %v2270
      %v2275 = vand.u32 2147483647, %v2271
      %v2276 = vand.u32 2147483647, %v2272
      %v2277 = vand.u32 2147483647, %v2273
      %v2278 = vrot.slane %v2274, 4
      %v2279 = vmax.f32 %v2274, %v2278
      %v2280 = vrot.slane %v2279, 2
      %v2281 = vmax.f32 %v2279, %v2280
      %v2282 = vrot.slane %v2281, 1
      %v2283 = vmax.f32 %v2281, %v2282
      %v2284 = vrot.slane %v2275, 4
      %v2285 = vmax.f32 %v2275, %v2284
      %v2286 = vrot.slane %v2285, 2
      %v2287 = vmax.f32 %v2285, %v2286
      %v2288 = vrot.slane %v2287, 1
      %v2289 = vmax.f32 %v2287, %v2288
      %v2290 = vrot.slane %v2276, 4
      %v2291 = vmax.f32 %v2276, %v2290
      %v2292 = vrot.slane %v2291, 2
      %v2293 = vmax.f32 %v2291, %v2292
      %v2294 = vrot.slane %v2293, 1
      %v2295 = vmax.f32 %v2293, %v2294
      %v2296 = vrot.slane %v2277, 4
      %v2297 = vmax.f32 %v2277, %v2296
      %v2298 = vrot.slane %v2297, 2
      %v2299 = vmax.f32 %v2297, %v2298
      %v2300 = vrot.slane %v2299, 1
      %v2301 = vmax.f32 %v2299, %v2300
      %vm2302 = vcmp.le.f32.partialorder %v2283, 0.01
      %vm2303 = vcmp.le.f32.partialorder %v2289, 0.01
      %vm2304 = vcmp.le.f32.partialorder %v2295, 0.01
      %vm2305 = vcmp.le.f32.partialorder %v2301, 0.01
      %v2306 = vadd.f32 %v2260, 1e-08
      %v2307 = vadd.f32 %v2263, 1e-08
      %v2308 = vadd.f32 %v2266, 1e-08
      %v2309 = vadd.f32 %v2269, 1e-08
      %v2310 = vrcp.pop %v2306
      %v2311 = vmul.f32 %v2254, %v2310
      %v2312 = vrcp.pop %v2307
      %v2313 = vmul.f32 %v2255, %v2312
      %v2314 = vrcp.pop %v2308
      %v2315 = vmul.f32 %v2256, %v2314
      %v2316 = vrcp.pop %v2309
      %v2317 = vmul.f32 %v2257, %v2316
      %v2318 = vmul.f32 %v2311, %v1238
      %v2319 = vmul.f32 %v2313, %v1245
      %v2320 = vmul.f32 %v2315, %v1252
      %v2321 = vmul.f32 %v2317, %v1259
      %v2322 = vsel %vm1380, %v2318, 0.0
      %v2323 = vrot.slane %v2322, 4
      %v2324 = vadd.f32 %v2322, %v2323
      %v2325 = vrot.slane %v2324, 2
      %v2326 = vadd.f32 %v2324, %v2325
      %v2327 = vrot.slane %v2326, 1
      %v2328 = vadd.f32 %v2326, %v2327
      %v2329 = vsel %vm1380, %v2319, 0.0
      %v2330 = vrot.slane %v2329, 4
      %v2331 = vadd.f32 %v2329, %v2330
      %v2332 = vrot.slane %v2331, 2
      %v2333 = vadd.f32 %v2331, %v2332
      %v2334 = vrot.slane %v2333, 1
      %v2335 = vadd.f32 %v2333, %v2334
      %v2336 = vsel %vm1380, %v2320, 0.0
      %v2337 = vrot.slane %v2336, 4
      %v2338 = vadd.f32 %v2336, %v2337
      %v2339 = vrot.slane %v2338, 2
      %v2340 = vadd.f32 %v2338, %v2339
      %v2341 = vrot.slane %v2340, 1
      %v2342 = vadd.f32 %v2340, %v2341
      %v2343 = vsel %vm1380, %v2321, 0.0
      %v2344 = vrot.slane %v2343, 4
      %v2345 = vadd.f32 %v2343, %v2344
      %v2346 = vrot.slane %v2345, 2
      %v2347 = vadd.f32 %v2345, %v2346
      %v2348 = vrot.slane %v2347, 1
      %v2349 = vadd.f32 %v2347, %v2348
      %v2350 = vsub.f32 %v2328, %v1311
      %v2351 = vsub.f32 %v2335, %v1318
      %v2352 = vsub.f32 %v2342, %v1319
      %v2353 = vsub.f32 %v2349, %v1320
      %v2354 = vand.u32 2147483647, %v2350
      %v2355 = vand.u32 2147483647, %v2351
      %v2356 = vand.u32 2147483647, %v2352
      %v2357 = vand.u32 2147483647, %v2353
      %v2358 = vsel %vm1525, %v2354, -inf
      %2359 = vmax.xlane.f32.xlu0 %v2358
      %v2360 = vpop.xlane.xlu0 %2359
      %v2361 = vsel %vm1525, %v2355, -inf
      %2362 = vmax.xlane.f32.xlu0 %v2361
      %v2363 = vpop.xlane.xlu0 %2362
      %v2364 = vsel %vm1525, %v2356, -inf
      %2365 = vmax.xlane.f32.xlu0 %v2364
      %v2366 = vpop.xlane.xlu0 %2365
      %v2367 = vsel %vm1525, %v2357, -inf
      %2368 = vmax.xlane.f32.xlu0 %v2367
      %v2369 = vpop.xlane.xlu0 %2368
      %vm2370 = vcmp.le.f32.partialorder %v2360, 0.01
      %vm2371 = vcmp.le.f32.partialorder %v2363, 0.01
      %vm2372 = vcmp.le.f32.partialorder %v2366, 0.01
      %vm2373 = vcmp.le.f32.partialorder %v2369, 0.01
      %v2374 = vsel %vm2302, 1, 0
      %v2375 = vsel %vm2303, 1, 0
      %v2376 = vsel %vm2304, 1, 0
      %v2377 = vsel %vm2305, 1, 0
      %vm2378 = vcmp.eq.s32.totalorder %v2374, 1
      %vm2379 = vcmp.eq.s32.totalorder %v2375, 1
      %vm2380 = vcmp.eq.s32.totalorder %v2376, 1
      %vm2381 = vcmp.eq.s32.totalorder %v2377, 1
      %v2382 = vsel %vm2378, %v2254, %v2318
      %v2383 = vsel %vm2379, %v2255, %v2319
      %v2384 = vsel %vm2380, %v2256, %v2320
      %v2385 = vsel %vm2381, %v2257, %v2321
      %v2386 = vsel %vm2210, 1, 0
      %v2387 = vsel %vm2211, 1, 0
      %v2388 = vsel %vm2212, 1, 0
      %v2389 = vsel %vm2213, 1, 0
      %v2390 = vlaneseq
      %v2391 = vshrl.u32 %v2390, 7
      %v2392 = vsub.s32 0, %v2391
      %v2393 = vrot.slane %v2386, %v2392
      %v2394 = vlaneseq
      %v2395 = vshrl.u32 %v2394, 7
      %v2396 = vsub.s32 0, %v2395
      %v2397 = vrot.slane %v2387, %v2396
      %v2398 = vlaneseq
      %v2399 = vshrl.u32 %v2398, 7
      %v2400 = vsub.s32 0, %v2399
      %v2401 = vrot.slane %v2388, %v2400
      %v2402 = vlaneseq
      %v2403 = vshrl.u32 %v2402, 7
      %v2404 = vsub.s32 0, %v2403
      %v2405 = vrot.slane %v2389, %v2404
      %vm2406 = vcmp.eq.s32.totalorder %v2393, 1
      %vm2407 = vcmp.eq.s32.totalorder %v2397, 1
      %vm2408 = vcmp.eq.s32.totalorder %v2401, 1
      %vm2409 = vcmp.eq.s32.totalorder %v2405, 1
      %v2410 = vsel %vm2406, %v2202, %v2382
      %v2411 = vsel %vm2407, %v2203, %v2383
      %v2412 = vsel %vm2408, %v2204, %v2384
      %v2413 = vsel %vm2409, %v2205, %v2385
      %vm2414 = vmor %vm2302, %vm2370
      %vm2415 = vmor %vm2303, %vm2371
      %vm2416 = vmor %vm2304, %vm2372
      %vm2417 = vmor %vm2305, %vm2373
      %vm2418 = vmor %vm2210, %vm2414
      %vm2419 = vmor %vm2211, %vm2415
      %vm2420 = vmor %vm2212, %vm2416
      %vm2421 = vmor %vm2213, %vm2417
      %v2422 = vsel %vm1380, %v2410, 0.0
      %v2423 = vrot.slane %v2422, 4
      %v2424 = vadd.f32 %v2422, %v2423
      %v2425 = vrot.slane %v2424, 2
      %v2426 = vadd.f32 %v2424, %v2425
      %v2427 = vrot.slane %v2426, 1
      %v2428 = vadd.f32 %v2426, %v2427
      %v2429 = vsel %vm1380, %v2411, 0.0
      %v2430 = vrot.slane %v2429, 4
      %v2431 = vadd.f32 %v2429, %v2430
      %v2432 = vrot.slane %v2431, 2
      %v2433 = vadd.f32 %v2431, %v2432
      %v2434 = vrot.slane %v2433, 1
      %v2435 = vadd.f32 %v2433, %v2434
      %v2436 = vsel %vm1380, %v2412, 0.0
      %v2437 = vrot.slane %v2436, 4
      %v2438 = vadd.f32 %v2436, %v2437
      %v2439 = vrot.slane %v2438, 2
      %v2440 = vadd.f32 %v2438, %v2439
      %v2441 = vrot.slane %v2440, 1
      %v2442 = vadd.f32 %v2440, %v2441
      %v2443 = vsel %vm1380, %v2413, 0.0
      %v2444 = vrot.slane %v2443, 4
      %v2445 = vadd.f32 %v2443, %v2444
      %v2446 = vrot.slane %v2445, 2
      %v2447 = vadd.f32 %v2445, %v2446
      %v2448 = vrot.slane %v2447, 1
      %v2449 = vadd.f32 %v2447, %v2448
      %v2450 = vadd.f32 %v2428, 1e-08
      %v2451 = vadd.f32 %v2435, 1e-08
      %v2452 = vadd.f32 %v2442, 1e-08
      %v2453 = vadd.f32 %v2449, 1e-08
      %v2454 = vrcp.pop %v2450
      %v2455 = vmul.f32 %v2410, %v2454
      %v2456 = vrcp.pop %v2451
      %v2457 = vmul.f32 %v2411, %v2456
      %v2458 = vrcp.pop %v2452
      %v2459 = vmul.f32 %v2412, %v2458
      %v2460 = vrcp.pop %v2453
      %v2461 = vmul.f32 %v2413, %v2460
      %v2462 = vmul.f32 %v2455, %v1328
      %v2463 = vmul.f32 %v2457, %v1332
      %v2464 = vmul.f32 %v2459, %v1336
      %v2465 = vmul.f32 %v2461, %v1340
      %v2466 = vsel %vm1380, %v2462, 0.0
      %2467 = vadd.xlane.f32.xlu0 %v2466
      %v2468 = vpop.xlane.xlu0 %2467
      %v2469 = vsel %vm1380, %v2463, 0.0
      %2470 = vadd.xlane.f32.xlu0 %v2469
      %v2471 = vpop.xlane.xlu0 %2470
      %v2472 = vsel %vm1380, %v2464, 0.0
      %2473 = vadd.xlane.f32.xlu0 %v2472
      %v2474 = vpop.xlane.xlu0 %2473
      %v2475 = vsel %vm1380, %v2465, 0.0
      %2476 = vadd.xlane.f32.xlu0 %v2475
      %v2477 = vpop.xlane.xlu0 %2476
      %v2478 = vsub.f32 %v2468, %v1238
      %v2479 = vsub.f32 %v2471, %v1245
      %v2480 = vsub.f32 %v2474, %v1252
      %v2481 = vsub.f32 %v2477, %v1259
      %v2482 = vand.u32 2147483647, %v2478
      %v2483 = vand.u32 2147483647, %v2479
      %v2484 = vand.u32 2147483647, %v2480
      %v2485 = vand.u32 2147483647, %v2481
      %v2486 = vrot.slane %v2482, 4
      %v2487 = vmax.f32 %v2482, %v2486
      %v2488 = vrot.slane %v2487, 2
      %v2489 = vmax.f32 %v2487, %v2488
      %v2490 = vrot.slane %v2489, 1
      %v2491 = vmax.f32 %v2489, %v2490
      %v2492 = vrot.slane %v2483, 4
      %v2493 = vmax.f32 %v2483, %v2492
      %v2494 = vrot.slane %v2493, 2
      %v2495 = vmax.f32 %v2493, %v2494
      %v2496 = vrot.slane %v2495, 1
      %v2497 = vmax.f32 %v2495, %v2496
      %v2498 = vrot.slane %v2484, 4
      %v2499 = vmax.f32 %v2484, %v2498
      %v2500 = vrot.slane %v2499, 2
      %v2501 = vmax.f32 %v2499, %v2500
      %v2502 = vrot.slane %v2501, 1
      %v2503 = vmax.f32 %v2501, %v2502
      %v2504 = vrot.slane %v2485, 4
      %v2505 = vmax.f32 %v2485, %v2504
      %v2506 = vrot.slane %v2505, 2
      %v2507 = vmax.f32 %v2505, %v2506
      %v2508 = vrot.slane %v2507, 1
      %v2509 = vmax.f32 %v2507, %v2508
      %vm2510 = vcmp.le.f32.partialorder %v2491, 0.01
      %vm2511 = vcmp.le.f32.partialorder %v2497, 0.01
      %vm2512 = vcmp.le.f32.partialorder %v2503, 0.01
      %vm2513 = vcmp.le.f32.partialorder %v2509, 0.01
      %v2514 = vadd.f32 %v2468, 1e-08
      %v2515 = vadd.f32 %v2471, 1e-08
      %v2516 = vadd.f32 %v2474, 1e-08
      %v2517 = vadd.f32 %v2477, 1e-08
      %v2518 = vrcp.pop %v2514
      %v2519 = vmul.f32 %v2462, %v2518
      %v2520 = vrcp.pop %v2515
      %v2521 = vmul.f32 %v2463, %v2520
      %v2522 = vrcp.pop %v2516
      %v2523 = vmul.f32 %v2464, %v2522
      %v2524 = vrcp.pop %v2517
      %v2525 = vmul.f32 %v2465, %v2524
      %v2526 = vmul.f32 %v2519, %v1238
      %v2527 = vmul.f32 %v2521, %v1245
      %v2528 = vmul.f32 %v2523, %v1252
      %v2529 = vmul.f32 %v2525, %v1259
      %v2530 = vsel %vm1380, %v2526, 0.0
      %v2531 = vrot.slane %v2530, 4
      %v2532 = vadd.f32 %v2530, %v2531
      %v2533 = vrot.slane %v2532, 2
      %v2534 = vadd.f32 %v2532, %v2533
      %v2535 = vrot.slane %v2534, 1
      %v2536 = vadd.f32 %v2534, %v2535
      %v2537 = vsel %vm1380, %v2527, 0.0
      %v2538 = vrot.slane %v2537, 4
      %v2539 = vadd.f32 %v2537, %v2538
      %v2540 = vrot.slane %v2539, 2
      %v2541 = vadd.f32 %v2539, %v2540
      %v2542 = vrot.slane %v2541, 1
      %v2543 = vadd.f32 %v2541, %v2542
      %v2544 = vsel %vm1380, %v2528, 0.0
      %v2545 = vrot.slane %v2544, 4
      %v2546 = vadd.f32 %v2544, %v2545
      %v2547 = vrot.slane %v2546, 2
      %v2548 = vadd.f32 %v2546, %v2547
      %v2549 = vrot.slane %v2548, 1
      %v2550 = vadd.f32 %v2548, %v2549
      %v2551 = vsel %vm1380, %v2529, 0.0
      %v2552 = vrot.slane %v2551, 4
      %v2553 = vadd.f32 %v2551, %v2552
      %v2554 = vrot.slane %v2553, 2
      %v2555 = vadd.f32 %v2553, %v2554
      %v2556 = vrot.slane %v2555, 1
      %v2557 = vadd.f32 %v2555, %v2556
      %v2558 = vsub.f32 %v2536, %v1311
      %v2559 = vsub.f32 %v2543, %v1318
      %v2560 = vsub.f32 %v2550, %v1319
      %v2561 = vsub.f32 %v2557, %v1320
      %v2562 = vand.u32 2147483647, %v2558
      %v2563 = vand.u32 2147483647, %v2559
      %v2564 = vand.u32 2147483647, %v2560
      %v2565 = vand.u32 2147483647, %v2561
      %v2566 = vsel %vm1525, %v2562, -inf
      %2567 = vmax.xlane.f32.xlu0 %v2566
      %v2568 = vpop.xlane.xlu0 %2567
      %v2569 = vsel %vm1525, %v2563, -inf
      %2570 = vmax.xlane.f32.xlu0 %v2569
      %v2571 = vpop.xlane.xlu0 %2570
      %v2572 = vsel %vm1525, %v2564, -inf
      %2573 = vmax.xlane.f32.xlu0 %v2572
      %v2574 = vpop.xlane.xlu0 %2573
      %v2575 = vsel %vm1525, %v2565, -inf
      %2576 = vmax.xlane.f32.xlu0 %v2575
      %v2577 = vpop.xlane.xlu0 %2576
      %vm2578 = vcmp.le.f32.partialorder %v2568, 0.01
      %vm2579 = vcmp.le.f32.partialorder %v2571, 0.01
      %vm2580 = vcmp.le.f32.partialorder %v2574, 0.01
      %vm2581 = vcmp.le.f32.partialorder %v2577, 0.01
      %v2582 = vsel %vm2510, 1, 0
      %v2583 = vsel %vm2511, 1, 0
      %v2584 = vsel %vm2512, 1, 0
      %v2585 = vsel %vm2513, 1, 0
      %vm2586 = vcmp.eq.s32.totalorder %v2582, 1
      %vm2587 = vcmp.eq.s32.totalorder %v2583, 1
      %vm2588 = vcmp.eq.s32.totalorder %v2584, 1
      %vm2589 = vcmp.eq.s32.totalorder %v2585, 1
      %v2590 = vsel %vm2586, %v2462, %v2526
      %v2591 = vsel %vm2587, %v2463, %v2527
      %v2592 = vsel %vm2588, %v2464, %v2528
      %v2593 = vsel %vm2589, %v2465, %v2529
      %v2594 = vsel %vm2418, 1, 0
      %v2595 = vsel %vm2419, 1, 0
      %v2596 = vsel %vm2420, 1, 0
      %v2597 = vsel %vm2421, 1, 0
      %v2598 = vlaneseq
      %v2599 = vshrl.u32 %v2598, 7
      %v2600 = vsub.s32 0, %v2599
      %v2601 = vrot.slane %v2594, %v2600
      %v2602 = vlaneseq
      %v2603 = vshrl.u32 %v2602, 7
      %v2604 = vsub.s32 0, %v2603
      %v2605 = vrot.slane %v2595, %v2604
      %v2606 = vlaneseq
      %v2607 = vshrl.u32 %v2606, 7
      %v2608 = vsub.s32 0, %v2607
      %v2609 = vrot.slane %v2596, %v2608
      %v2610 = vlaneseq
      %v2611 = vshrl.u32 %v2610, 7
      %v2612 = vsub.s32 0, %v2611
      %v2613 = vrot.slane %v2597, %v2612
      %vm2614 = vcmp.eq.s32.totalorder %v2601, 1
      %vm2615 = vcmp.eq.s32.totalorder %v2605, 1
      %vm2616 = vcmp.eq.s32.totalorder %v2609, 1
      %vm2617 = vcmp.eq.s32.totalorder %v2613, 1
      %v2618 = vsel %vm2614, %v2410, %v2590
      %v2619 = vsel %vm2615, %v2411, %v2591
      %v2620 = vsel %vm2616, %v2412, %v2592
      %v2621 = vsel %vm2617, %v2413, %v2593
      %vm2622 = vmor %vm2510, %vm2578
      %vm2623 = vmor %vm2511, %vm2579
      %vm2624 = vmor %vm2512, %vm2580
      %vm2625 = vmor %vm2513, %vm2581
      %vm2626 = vmor %vm2418, %vm2622
      %vm2627 = vmor %vm2419, %vm2623
      %vm2628 = vmor %vm2420, %vm2624
      %vm2629 = vmor %vm2421, %vm2625
      %v2630 = vsel %vm1380, %v2618, 0.0
      %v2631 = vrot.slane %v2630, 4
      %v2632 = vadd.f32 %v2630, %v2631
      %v2633 = vrot.slane %v2632, 2
      %v2634 = vadd.f32 %v2632, %v2633
      %v2635 = vrot.slane %v2634, 1
      %v2636 = vadd.f32 %v2634, %v2635
      %v2637 = vsel %vm1380, %v2619, 0.0
      %v2638 = vrot.slane %v2637, 4
      %v2639 = vadd.f32 %v2637, %v2638
      %v2640 = vrot.slane %v2639, 2
      %v2641 = vadd.f32 %v2639, %v2640
      %v2642 = vrot.slane %v2641, 1
      %v2643 = vadd.f32 %v2641, %v2642
      %v2644 = vsel %vm1380, %v2620, 0.0
      %v2645 = vrot.slane %v2644, 4
      %v2646 = vadd.f32 %v2644, %v2645
      %v2647 = vrot.slane %v2646, 2
      %v2648 = vadd.f32 %v2646, %v2647
      %v2649 = vrot.slane %v2648, 1
      %v2650 = vadd.f32 %v2648, %v2649
      %v2651 = vsel %vm1380, %v2621, 0.0
      %v2652 = vrot.slane %v2651, 4
      %v2653 = vadd.f32 %v2651, %v2652
      %v2654 = vrot.slane %v2653, 2
      %v2655 = vadd.f32 %v2653, %v2654
      %v2656 = vrot.slane %v2655, 1
      %v2657 = vadd.f32 %v2655, %v2656
      %v2658 = vadd.f32 %v2636, 1e-08
      %v2659 = vadd.f32 %v2643, 1e-08
      %v2660 = vadd.f32 %v2650, 1e-08
      %v2661 = vadd.f32 %v2657, 1e-08
      %v2662 = vrcp.pop %v2658
      %v2663 = vmul.f32 %v2618, %v2662
      %v2664 = vrcp.pop %v2659
      %v2665 = vmul.f32 %v2619, %v2664
      %v2666 = vrcp.pop %v2660
      %v2667 = vmul.f32 %v2620, %v2666
      %v2668 = vrcp.pop %v2661
      %v2669 = vmul.f32 %v2621, %v2668
      %v2670 = vmul.f32 %v2663, %v1328
      %v2671 = vmul.f32 %v2665, %v1332
      %v2672 = vmul.f32 %v2667, %v1336
      %v2673 = vmul.f32 %v2669, %v1340
      %v2674 = vsel %vm1380, %v2670, 0.0
      %2675 = vadd.xlane.f32.xlu0 %v2674
      %v2676 = vpop.xlane.xlu0 %2675
      %v2677 = vsel %vm1380, %v2671, 0.0
      %2678 = vadd.xlane.f32.xlu0 %v2677
      %v2679 = vpop.xlane.xlu0 %2678
      %v2680 = vsel %vm1380, %v2672, 0.0
      %2681 = vadd.xlane.f32.xlu0 %v2680
      %v2682 = vpop.xlane.xlu0 %2681
      %v2683 = vsel %vm1380, %v2673, 0.0
      %2684 = vadd.xlane.f32.xlu0 %v2683
      %v2685 = vpop.xlane.xlu0 %2684
      %v2686 = vsub.f32 %v2676, %v1238
      %v2687 = vsub.f32 %v2679, %v1245
      %v2688 = vsub.f32 %v2682, %v1252
      %v2689 = vsub.f32 %v2685, %v1259
      %v2690 = vand.u32 2147483647, %v2686
      %v2691 = vand.u32 2147483647, %v2687
      %v2692 = vand.u32 2147483647, %v2688
      %v2693 = vand.u32 2147483647, %v2689
      %v2694 = vrot.slane %v2690, 4
      %v2695 = vmax.f32 %v2690, %v2694
      %v2696 = vrot.slane %v2695, 2
      %v2697 = vmax.f32 %v2695, %v2696
      %v2698 = vrot.slane %v2697, 1
      %v2699 = vmax.f32 %v2697, %v2698
      %v2700 = vrot.slane %v2691, 4
      %v2701 = vmax.f32 %v2691, %v2700
      %v2702 = vrot.slane %v2701, 2
      %v2703 = vmax.f32 %v2701, %v2702
      %v2704 = vrot.slane %v2703, 1
      %v2705 = vmax.f32 %v2703, %v2704
      %v2706 = vrot.slane %v2692, 4
      %v2707 = vmax.f32 %v2692, %v2706
      %v2708 = vrot.slane %v2707, 2
      %v2709 = vmax.f32 %v2707, %v2708
      %v2710 = vrot.slane %v2709, 1
      %v2711 = vmax.f32 %v2709, %v2710
      %v2712 = vrot.slane %v2693, 4
      %v2713 = vmax.f32 %v2693, %v2712
      %v2714 = vrot.slane %v2713, 2
      %v2715 = vmax.f32 %v2713, %v2714
      %v2716 = vrot.slane %v2715, 1
      %v2717 = vmax.f32 %v2715, %v2716
      %vm2718 = vcmp.le.f32.partialorder %v2699, 0.01
      %vm2719 = vcmp.le.f32.partialorder %v2705, 0.01
      %vm2720 = vcmp.le.f32.partialorder %v2711, 0.01
      %vm2721 = vcmp.le.f32.partialorder %v2717, 0.01
      %v2722 = vadd.f32 %v2676, 1e-08
      %v2723 = vadd.f32 %v2679, 1e-08
      %v2724 = vadd.f32 %v2682, 1e-08
      %v2725 = vadd.f32 %v2685, 1e-08
      %v2726 = vrcp.pop %v2722
      %v2727 = vmul.f32 %v2670, %v2726
      %v2728 = vrcp.pop %v2723
      %v2729 = vmul.f32 %v2671, %v2728
      %v2730 = vrcp.pop %v2724
      %v2731 = vmul.f32 %v2672, %v2730
      %v2732 = vrcp.pop %v2725
      %v2733 = vmul.f32 %v2673, %v2732
      %v2734 = vmul.f32 %v2727, %v1238
      %v2735 = vmul.f32 %v2729, %v1245
      %v2736 = vmul.f32 %v2731, %v1252
      %v2737 = vmul.f32 %v2733, %v1259
      %v2738 = vsel %vm1380, %v2734, 0.0
      %v2739 = vrot.slane %v2738, 4
      %v2740 = vadd.f32 %v2738, %v2739
      %v2741 = vrot.slane %v2740, 2
      %v2742 = vadd.f32 %v2740, %v2741
      %v2743 = vrot.slane %v2742, 1
      %v2744 = vadd.f32 %v2742, %v2743
      %v2745 = vsel %vm1380, %v2735, 0.0
      %v2746 = vrot.slane %v2745, 4
      %v2747 = vadd.f32 %v2745, %v2746
      %v2748 = vrot.slane %v2747, 2
      %v2749 = vadd.f32 %v2747, %v2748
      %v2750 = vrot.slane %v2749, 1
      %v2751 = vadd.f32 %v2749, %v2750
      %v2752 = vsel %vm1380, %v2736, 0.0
      %v2753 = vrot.slane %v2752, 4
      %v2754 = vadd.f32 %v2752, %v2753
      %v2755 = vrot.slane %v2754, 2
      %v2756 = vadd.f32 %v2754, %v2755
      %v2757 = vrot.slane %v2756, 1
      %v2758 = vadd.f32 %v2756, %v2757
      %v2759 = vsel %vm1380, %v2737, 0.0
      %v2760 = vrot.slane %v2759, 4
      %v2761 = vadd.f32 %v2759, %v2760
      %v2762 = vrot.slane %v2761, 2
      %v2763 = vadd.f32 %v2761, %v2762
      %v2764 = vrot.slane %v2763, 1
      %v2765 = vadd.f32 %v2763, %v2764
      %v2766 = vsub.f32 %v2744, %v1311
      %v2767 = vsub.f32 %v2751, %v1318
      %v2768 = vsub.f32 %v2758, %v1319
      %v2769 = vsub.f32 %v2765, %v1320
      %v2770 = vand.u32 2147483647, %v2766
      %v2771 = vand.u32 2147483647, %v2767
      %v2772 = vand.u32 2147483647, %v2768
      %v2773 = vand.u32 2147483647, %v2769
      %v2774 = vsel %vm1525, %v2770, -inf
      %2775 = vmax.xlane.f32.xlu0 %v2774
      %v2776 = vpop.xlane.xlu0 %2775
      %v2777 = vsel %vm1525, %v2771, -inf
      %2778 = vmax.xlane.f32.xlu0 %v2777
      %v2779 = vpop.xlane.xlu0 %2778
      %v2780 = vsel %vm1525, %v2772, -inf
      %2781 = vmax.xlane.f32.xlu0 %v2780
      %v2782 = vpop.xlane.xlu0 %2781
      %v2783 = vsel %vm1525, %v2773, -inf
      %2784 = vmax.xlane.f32.xlu0 %v2783
      %v2785 = vpop.xlane.xlu0 %2784
      %vm2786 = vcmp.le.f32.partialorder %v2776, 0.01
      %vm2787 = vcmp.le.f32.partialorder %v2779, 0.01
      %vm2788 = vcmp.le.f32.partialorder %v2782, 0.01
      %vm2789 = vcmp.le.f32.partialorder %v2785, 0.01
      %v2790 = vsel %vm2718, 1, 0
      %v2791 = vsel %vm2719, 1, 0
      %v2792 = vsel %vm2720, 1, 0
      %v2793 = vsel %vm2721, 1, 0
      %vm2794 = vcmp.eq.s32.totalorder %v2790, 1
      %vm2795 = vcmp.eq.s32.totalorder %v2791, 1
      %vm2796 = vcmp.eq.s32.totalorder %v2792, 1
      %vm2797 = vcmp.eq.s32.totalorder %v2793, 1
      %v2798 = vsel %vm2794, %v2670, %v2734
      %v2799 = vsel %vm2795, %v2671, %v2735
      %v2800 = vsel %vm2796, %v2672, %v2736
      %v2801 = vsel %vm2797, %v2673, %v2737
      %v2802 = vsel %vm2626, 1, 0
      %v2803 = vsel %vm2627, 1, 0
      %v2804 = vsel %vm2628, 1, 0
      %v2805 = vsel %vm2629, 1, 0
      %v2806 = vlaneseq
      %v2807 = vshrl.u32 %v2806, 7
      %v2808 = vsub.s32 0, %v2807
      %v2809 = vrot.slane %v2802, %v2808
      %v2810 = vlaneseq
      %v2811 = vshrl.u32 %v2810, 7
      %v2812 = vsub.s32 0, %v2811
      %v2813 = vrot.slane %v2803, %v2812
      %v2814 = vlaneseq
      %v2815 = vshrl.u32 %v2814, 7
      %v2816 = vsub.s32 0, %v2815
      %v2817 = vrot.slane %v2804, %v2816
      %v2818 = vlaneseq
      %v2819 = vshrl.u32 %v2818, 7
      %v2820 = vsub.s32 0, %v2819
      %v2821 = vrot.slane %v2805, %v2820
      %vm2822 = vcmp.eq.s32.totalorder %v2809, 1
      %vm2823 = vcmp.eq.s32.totalorder %v2813, 1
      %vm2824 = vcmp.eq.s32.totalorder %v2817, 1
      %vm2825 = vcmp.eq.s32.totalorder %v2821, 1
      %v2826 = vsel %vm2822, %v2618, %v2798
      %v2827 = vsel %vm2823, %v2619, %v2799
      %v2828 = vsel %vm2824, %v2620, %v2800
      %v2829 = vsel %vm2825, %v2621, %v2801
      %vm2830 = vmor %vm2718, %vm2786
      %vm2831 = vmor %vm2719, %vm2787
      %vm2832 = vmor %vm2720, %vm2788
      %vm2833 = vmor %vm2721, %vm2789
      %vm2834 = vmor %vm2626, %vm2830
      %vm2835 = vmor %vm2627, %vm2831
      %vm2836 = vmor %vm2628, %vm2832
      %vm2837 = vmor %vm2629, %vm2833
      %v2838 = vsel %vm1380, %v2826, 0.0
      %v2839 = vrot.slane %v2838, 4
      %v2840 = vadd.f32 %v2838, %v2839
      %v2841 = vrot.slane %v2840, 2
      %v2842 = vadd.f32 %v2840, %v2841
      %v2843 = vrot.slane %v2842, 1
      %v2844 = vadd.f32 %v2842, %v2843
      %v2845 = vsel %vm1380, %v2827, 0.0
      %v2846 = vrot.slane %v2845, 4
      %v2847 = vadd.f32 %v2845, %v2846
      %v2848 = vrot.slane %v2847, 2
      %v2849 = vadd.f32 %v2847, %v2848
      %v2850 = vrot.slane %v2849, 1
      %v2851 = vadd.f32 %v2849, %v2850
      %v2852 = vsel %vm1380, %v2828, 0.0
      %v2853 = vrot.slane %v2852, 4
      %v2854 = vadd.f32 %v2852, %v2853
      %v2855 = vrot.slane %v2854, 2
      %v2856 = vadd.f32 %v2854, %v2855
      %v2857 = vrot.slane %v2856, 1
      %v2858 = vadd.f32 %v2856, %v2857
      %v2859 = vsel %vm1380, %v2829, 0.0
      %v2860 = vrot.slane %v2859, 4
      %v2861 = vadd.f32 %v2859, %v2860
      %v2862 = vrot.slane %v2861, 2
      %v2863 = vadd.f32 %v2861, %v2862
      %v2864 = vrot.slane %v2863, 1
      %v2865 = vadd.f32 %v2863, %v2864
      %v2866 = vadd.f32 %v2844, 1e-08
      %v2867 = vadd.f32 %v2851, 1e-08
      %v2868 = vadd.f32 %v2858, 1e-08
      %v2869 = vadd.f32 %v2865, 1e-08
      %v2870 = vrcp.pop %v2866
      %v2871 = vmul.f32 %v2826, %v2870
      %v2872 = vrcp.pop %v2867
      %v2873 = vmul.f32 %v2827, %v2872
      %v2874 = vrcp.pop %v2868
      %v2875 = vmul.f32 %v2828, %v2874
      %v2876 = vrcp.pop %v2869
      %v2877 = vmul.f32 %v2829, %v2876
      %v2878 = vmul.f32 %v2871, %v1328
      %v2879 = vmul.f32 %v2873, %v1332
      %v2880 = vmul.f32 %v2875, %v1336
      %v2881 = vmul.f32 %v2877, %v1340
      %v2882 = vsel %vm1380, %v2878, 0.0
      %2883 = vadd.xlane.f32.xlu0 %v2882
      %v2884 = vpop.xlane.xlu0 %2883
      %v2885 = vsel %vm1380, %v2879, 0.0
      %2886 = vadd.xlane.f32.xlu0 %v2885
      %v2887 = vpop.xlane.xlu0 %2886
      %v2888 = vsel %vm1380, %v2880, 0.0
      %2889 = vadd.xlane.f32.xlu0 %v2888
      %v2890 = vpop.xlane.xlu0 %2889
      %v2891 = vsel %vm1380, %v2881, 0.0
      %2892 = vadd.xlane.f32.xlu0 %v2891
      %v2893 = vpop.xlane.xlu0 %2892
      %v2894 = vsub.f32 %v2884, %v1238
      %v2895 = vsub.f32 %v2887, %v1245
      %v2896 = vsub.f32 %v2890, %v1252
      %v2897 = vsub.f32 %v2893, %v1259
      %v2898 = vand.u32 2147483647, %v2894
      %v2899 = vand.u32 2147483647, %v2895
      %v2900 = vand.u32 2147483647, %v2896
      %v2901 = vand.u32 2147483647, %v2897
      %v2902 = vrot.slane %v2898, 4
      %v2903 = vmax.f32 %v2898, %v2902
      %v2904 = vrot.slane %v2903, 2
      %v2905 = vmax.f32 %v2903, %v2904
      %v2906 = vrot.slane %v2905, 1
      %v2907 = vmax.f32 %v2905, %v2906
      %v2908 = vrot.slane %v2899, 4
      %v2909 = vmax.f32 %v2899, %v2908
      %v2910 = vrot.slane %v2909, 2
      %v2911 = vmax.f32 %v2909, %v2910
      %v2912 = vrot.slane %v2911, 1
      %v2913 = vmax.f32 %v2911, %v2912
      %v2914 = vrot.slane %v2900, 4
      %v2915 = vmax.f32 %v2900, %v2914
      %v2916 = vrot.slane %v2915, 2
      %v2917 = vmax.f32 %v2915, %v2916
      %v2918 = vrot.slane %v2917, 1
      %v2919 = vmax.f32 %v2917, %v2918
      %v2920 = vrot.slane %v2901, 4
      %v2921 = vmax.f32 %v2901, %v2920
      %v2922 = vrot.slane %v2921, 2
      %v2923 = vmax.f32 %v2921, %v2922
      %v2924 = vrot.slane %v2923, 1
      %v2925 = vmax.f32 %v2923, %v2924
      %vm2926 = vcmp.le.f32.partialorder %v2907, 0.01
      %vm2927 = vcmp.le.f32.partialorder %v2913, 0.01
      %vm2928 = vcmp.le.f32.partialorder %v2919, 0.01
      %vm2929 = vcmp.le.f32.partialorder %v2925, 0.01
      %v2930 = vadd.f32 %v2884, 1e-08
      %v2931 = vadd.f32 %v2887, 1e-08
      %v2932 = vadd.f32 %v2890, 1e-08
      %v2933 = vadd.f32 %v2893, 1e-08
      %v2934 = vrcp.pop %v2930
      %v2935 = vmul.f32 %v2878, %v2934
      %v2936 = vrcp.pop %v2931
      %v2937 = vmul.f32 %v2879, %v2936
      %v2938 = vrcp.pop %v2932
      %v2939 = vmul.f32 %v2880, %v2938
      %v2940 = vrcp.pop %v2933
      %v2941 = vmul.f32 %v2881, %v2940
      %v2942 = vmul.f32 %v2935, %v1238
      %v2943 = vmul.f32 %v2937, %v1245
      %v2944 = vmul.f32 %v2939, %v1252
      %v2945 = vmul.f32 %v2941, %v1259
      %v2946 = vsel %vm1380, %v2942, 0.0
      %v2947 = vrot.slane %v2946, 4
      %v2948 = vadd.f32 %v2946, %v2947
      %v2949 = vrot.slane %v2948, 2
      %v2950 = vadd.f32 %v2948, %v2949
      %v2951 = vrot.slane %v2950, 1
      %v2952 = vadd.f32 %v2950, %v2951
      %v2953 = vsel %vm1380, %v2943, 0.0
      %v2954 = vrot.slane %v2953, 4
      %v2955 = vadd.f32 %v2953, %v2954
      %v2956 = vrot.slane %v2955, 2
      %v2957 = vadd.f32 %v2955, %v2956
      %v2958 = vrot.slane %v2957, 1
      %v2959 = vadd.f32 %v2957, %v2958
      %v2960 = vsel %vm1380, %v2944, 0.0
      %v2961 = vrot.slane %v2960, 4
      %v2962 = vadd.f32 %v2960, %v2961
      %v2963 = vrot.slane %v2962, 2
      %v2964 = vadd.f32 %v2962, %v2963
      %v2965 = vrot.slane %v2964, 1
      %v2966 = vadd.f32 %v2964, %v2965
      %v2967 = vsel %vm1380, %v2945, 0.0
      %v2968 = vrot.slane %v2967, 4
      %v2969 = vadd.f32 %v2967, %v2968
      %v2970 = vrot.slane %v2969, 2
      %v2971 = vadd.f32 %v2969, %v2970
      %v2972 = vrot.slane %v2971, 1
      %v2973 = vadd.f32 %v2971, %v2972
      %v2974 = vsub.f32 %v2952, %v1311
      %v2975 = vsub.f32 %v2959, %v1318
      %v2976 = vsub.f32 %v2966, %v1319
      %v2977 = vsub.f32 %v2973, %v1320
      %v2978 = vand.u32 2147483647, %v2974
      %v2979 = vand.u32 2147483647, %v2975
      %v2980 = vand.u32 2147483647, %v2976
      %v2981 = vand.u32 2147483647, %v2977
      %v2982 = vsel %vm1525, %v2978, -inf
      %2983 = vmax.xlane.f32.xlu0 %v2982
      %v2984 = vpop.xlane.xlu0 %2983
      %v2985 = vsel %vm1525, %v2979, -inf
      %2986 = vmax.xlane.f32.xlu0 %v2985
      %v2987 = vpop.xlane.xlu0 %2986
      %v2988 = vsel %vm1525, %v2980, -inf
      %2989 = vmax.xlane.f32.xlu0 %v2988
      %v2990 = vpop.xlane.xlu0 %2989
      %v2991 = vsel %vm1525, %v2981, -inf
      %2992 = vmax.xlane.f32.xlu0 %v2991
      %v2993 = vpop.xlane.xlu0 %2992
      %vm2994 = vcmp.le.f32.partialorder %v2984, 0.01
      %vm2995 = vcmp.le.f32.partialorder %v2987, 0.01
      %vm2996 = vcmp.le.f32.partialorder %v2990, 0.01
      %vm2997 = vcmp.le.f32.partialorder %v2993, 0.01
      %v2998 = vsel %vm2926, 1, 0
      %v2999 = vsel %vm2927, 1, 0
      %v3000 = vsel %vm2928, 1, 0
      %v3001 = vsel %vm2929, 1, 0
      %vm3002 = vcmp.eq.s32.totalorder %v2998, 1
      %vm3003 = vcmp.eq.s32.totalorder %v2999, 1
      %vm3004 = vcmp.eq.s32.totalorder %v3000, 1
      %vm3005 = vcmp.eq.s32.totalorder %v3001, 1
      %v3006 = vsel %vm3002, %v2878, %v2942
      %v3007 = vsel %vm3003, %v2879, %v2943
      %v3008 = vsel %vm3004, %v2880, %v2944
      %v3009 = vsel %vm3005, %v2881, %v2945
      %v3010 = vsel %vm2834, 1, 0
      %v3011 = vsel %vm2835, 1, 0
      %v3012 = vsel %vm2836, 1, 0
      %v3013 = vsel %vm2837, 1, 0
      %v3014 = vlaneseq
      %v3015 = vshrl.u32 %v3014, 7
      %v3016 = vsub.s32 0, %v3015
      %v3017 = vrot.slane %v3010, %v3016
      %v3018 = vlaneseq
      %v3019 = vshrl.u32 %v3018, 7
      %v3020 = vsub.s32 0, %v3019
      %v3021 = vrot.slane %v3011, %v3020
      %v3022 = vlaneseq
      %v3023 = vshrl.u32 %v3022, 7
      %v3024 = vsub.s32 0, %v3023
      %v3025 = vrot.slane %v3012, %v3024
      %v3026 = vlaneseq
      %v3027 = vshrl.u32 %v3026, 7
      %v3028 = vsub.s32 0, %v3027
      %v3029 = vrot.slane %v3013, %v3028
      %vm3030 = vcmp.eq.s32.totalorder %v3017, 1
      %vm3031 = vcmp.eq.s32.totalorder %v3021, 1
      %vm3032 = vcmp.eq.s32.totalorder %v3025, 1
      %vm3033 = vcmp.eq.s32.totalorder %v3029, 1
      %v3034 = vsel %vm3030, %v2826, %v3006
      %v3035 = vsel %vm3031, %v2827, %v3007
      %v3036 = vsel %vm3032, %v2828, %v3008
      %v3037 = vsel %vm3033, %v2829, %v3009
      %vm3038 = vmor %vm2926, %vm2994
      %vm3039 = vmor %vm2927, %vm2995
      %vm3040 = vmor %vm2928, %vm2996
      %vm3041 = vmor %vm2929, %vm2997
      %vm3042 = vmor %vm2834, %vm3038
      %vm3043 = vmor %vm2835, %vm3039
      %vm3044 = vmor %vm2836, %vm3040
      %vm3045 = vmor %vm2837, %vm3041
      %v3046 = vsel %vm1380, %v3034, 0.0
      %v3047 = vrot.slane %v3046, 4
      %v3048 = vadd.f32 %v3046, %v3047
      %v3049 = vrot.slane %v3048, 2
      %v3050 = vadd.f32 %v3048, %v3049
      %v3051 = vrot.slane %v3050, 1
      %v3052 = vadd.f32 %v3050, %v3051
      %v3053 = vsel %vm1380, %v3035, 0.0
      %v3054 = vrot.slane %v3053, 4
      %v3055 = vadd.f32 %v3053, %v3054
      %v3056 = vrot.slane %v3055, 2
      %v3057 = vadd.f32 %v3055, %v3056
      %v3058 = vrot.slane %v3057, 1
      %v3059 = vadd.f32 %v3057, %v3058
      %v3060 = vsel %vm1380, %v3036, 0.0
      %v3061 = vrot.slane %v3060, 4
      %v3062 = vadd.f32 %v3060, %v3061
      %v3063 = vrot.slane %v3062, 2
      %v3064 = vadd.f32 %v3062, %v3063
      %v3065 = vrot.slane %v3064, 1
      %v3066 = vadd.f32 %v3064, %v3065
      %v3067 = vsel %vm1380, %v3037, 0.0
      %v3068 = vrot.slane %v3067, 4
      %v3069 = vadd.f32 %v3067, %v3068
      %v3070 = vrot.slane %v3069, 2
      %v3071 = vadd.f32 %v3069, %v3070
      %v3072 = vrot.slane %v3071, 1
      %v3073 = vadd.f32 %v3071, %v3072
      %v3074 = vadd.f32 %v3052, 1e-08
      %v3075 = vadd.f32 %v3059, 1e-08
      %v3076 = vadd.f32 %v3066, 1e-08
      %v3077 = vadd.f32 %v3073, 1e-08
      %v3078 = vrcp.pop %v3074
      %v3079 = vmul.f32 %v3034, %v3078
      %v3080 = vrcp.pop %v3075
      %v3081 = vmul.f32 %v3035, %v3080
      %v3082 = vrcp.pop %v3076
      %v3083 = vmul.f32 %v3036, %v3082
      %v3084 = vrcp.pop %v3077
      %v3085 = vmul.f32 %v3037, %v3084
      %v3086 = vmul.f32 %v3079, %v1328
      %v3087 = vmul.f32 %v3081, %v1332
      %v3088 = vmul.f32 %v3083, %v1336
      %v3089 = vmul.f32 %v3085, %v1340
      %v3090 = vsel %vm1380, %v3086, 0.0
      %3091 = vadd.xlane.f32.xlu0 %v3090
      %v3092 = vpop.xlane.xlu0 %3091
      %v3093 = vsel %vm1380, %v3087, 0.0
      %3094 = vadd.xlane.f32.xlu0 %v3093
      %v3095 = vpop.xlane.xlu0 %3094
      %v3096 = vsel %vm1380, %v3088, 0.0
      %3097 = vadd.xlane.f32.xlu0 %v3096
      %v3098 = vpop.xlane.xlu0 %3097
      %v3099 = vsel %vm1380, %v3089, 0.0
      %3100 = vadd.xlane.f32.xlu0 %v3099
      %v3101 = vpop.xlane.xlu0 %3100
      %v3102 = vsub.f32 %v3092, %v1238
      %v3103 = vsub.f32 %v3095, %v1245
      %v3104 = vsub.f32 %v3098, %v1252
      %v3105 = vsub.f32 %v3101, %v1259
      %v3106 = vand.u32 2147483647, %v3102
      %v3107 = vand.u32 2147483647, %v3103
      %v3108 = vand.u32 2147483647, %v3104
      %v3109 = vand.u32 2147483647, %v3105
      %v3110 = vrot.slane %v3106, 4
      %v3111 = vmax.f32 %v3106, %v3110
      %v3112 = vrot.slane %v3111, 2
      %v3113 = vmax.f32 %v3111, %v3112
      %v3114 = vrot.slane %v3113, 1
      %v3115 = vmax.f32 %v3113, %v3114
      %v3116 = vrot.slane %v3107, 4
      %v3117 = vmax.f32 %v3107, %v3116
      %v3118 = vrot.slane %v3117, 2
      %v3119 = vmax.f32 %v3117, %v3118
      %v3120 = vrot.slane %v3119, 1
      %v3121 = vmax.f32 %v3119, %v3120
      %v3122 = vrot.slane %v3108, 4
      %v3123 = vmax.f32 %v3108, %v3122
      %v3124 = vrot.slane %v3123, 2
      %v3125 = vmax.f32 %v3123, %v3124
      %v3126 = vrot.slane %v3125, 1
      %v3127 = vmax.f32 %v3125, %v3126
      %v3128 = vrot.slane %v3109, 4
      %v3129 = vmax.f32 %v3109, %v3128
      %v3130 = vrot.slane %v3129, 2
      %v3131 = vmax.f32 %v3129, %v3130
      %v3132 = vrot.slane %v3131, 1
      %v3133 = vmax.f32 %v3131, %v3132
      %vm3134 = vcmp.le.f32.partialorder %v3115, 0.01
      %vm3135 = vcmp.le.f32.partialorder %v3121, 0.01
      %vm3136 = vcmp.le.f32.partialorder %v3127, 0.01
      %vm3137 = vcmp.le.f32.partialorder %v3133, 0.01
      %v3138 = vadd.f32 %v3092, 1e-08
      %v3139 = vadd.f32 %v3095, 1e-08
      %v3140 = vadd.f32 %v3098, 1e-08
      %v3141 = vadd.f32 %v3101, 1e-08
      %v3142 = vrcp.pop %v3138
      %v3143 = vmul.f32 %v3086, %v3142
      %v3144 = vrcp.pop %v3139
      %v3145 = vmul.f32 %v3087, %v3144
      %v3146 = vrcp.pop %v3140
      %v3147 = vmul.f32 %v3088, %v3146
      %v3148 = vrcp.pop %v3141
      %v3149 = vmul.f32 %v3089, %v3148
      %v3150 = vmul.f32 %v3143, %v1238
      %v3151 = vmul.f32 %v3145, %v1245
      %v3152 = vmul.f32 %v3147, %v1252
      %v3153 = vmul.f32 %v3149, %v1259
      %v3154 = vsel %vm1380, %v3150, 0.0
      %v3155 = vrot.slane %v3154, 4
      %v3156 = vadd.f32 %v3154, %v3155
      %v3157 = vrot.slane %v3156, 2
      %v3158 = vadd.f32 %v3156, %v3157
      %v3159 = vrot.slane %v3158, 1
      %v3160 = vadd.f32 %v3158, %v3159
      %v3161 = vsel %vm1380, %v3151, 0.0
      %v3162 = vrot.slane %v3161, 4
      %v3163 = vadd.f32 %v3161, %v3162
      %v3164 = vrot.slane %v3163, 2
      %v3165 = vadd.f32 %v3163, %v3164
      %v3166 = vrot.slane %v3165, 1
      %v3167 = vadd.f32 %v3165, %v3166
      %v3168 = vsel %vm1380, %v3152, 0.0
      %v3169 = vrot.slane %v3168, 4
      %v3170 = vadd.f32 %v3168, %v3169
      %v3171 = vrot.slane %v3170, 2
      %v3172 = vadd.f32 %v3170, %v3171
      %v3173 = vrot.slane %v3172, 1
      %v3174 = vadd.f32 %v3172, %v3173
      %v3175 = vsel %vm1380, %v3153, 0.0
      %v3176 = vrot.slane %v3175, 4
      %v3177 = vadd.f32 %v3175, %v3176
      %v3178 = vrot.slane %v3177, 2
      %v3179 = vadd.f32 %v3177, %v3178
      %v3180 = vrot.slane %v3179, 1
      %v3181 = vadd.f32 %v3179, %v3180
      %v3182 = vsub.f32 %v3160, %v1311
      %v3183 = vsub.f32 %v3167, %v1318
      %v3184 = vsub.f32 %v3174, %v1319
      %v3185 = vsub.f32 %v3181, %v1320
      %v3186 = vand.u32 2147483647, %v3182
      %v3187 = vand.u32 2147483647, %v3183
      %v3188 = vand.u32 2147483647, %v3184
      %v3189 = vand.u32 2147483647, %v3185
      %v3190 = vsel %vm1525, %v3186, -inf
      %3191 = vmax.xlane.f32.xlu0 %v3190
      %v3192 = vpop.xlane.xlu0 %3191
      %v3193 = vsel %vm1525, %v3187, -inf
      %3194 = vmax.xlane.f32.xlu0 %v3193
      %v3195 = vpop.xlane.xlu0 %3194
      %v3196 = vsel %vm1525, %v3188, -inf
      %3197 = vmax.xlane.f32.xlu0 %v3196
      %v3198 = vpop.xlane.xlu0 %3197
      %v3199 = vsel %vm1525, %v3189, -inf
      %3200 = vmax.xlane.f32.xlu0 %v3199
      %v3201 = vpop.xlane.xlu0 %3200
      %vm3202 = vcmp.le.f32.partialorder %v3192, 0.01
      %vm3203 = vcmp.le.f32.partialorder %v3195, 0.01
      %vm3204 = vcmp.le.f32.partialorder %v3198, 0.01
      %vm3205 = vcmp.le.f32.partialorder %v3201, 0.01
      %v3206 = vsel %vm3134, 1, 0
      %v3207 = vsel %vm3135, 1, 0
      %v3208 = vsel %vm3136, 1, 0
      %v3209 = vsel %vm3137, 1, 0
      %vm3210 = vcmp.eq.s32.totalorder %v3206, 1
      %vm3211 = vcmp.eq.s32.totalorder %v3207, 1
      %vm3212 = vcmp.eq.s32.totalorder %v3208, 1
      %vm3213 = vcmp.eq.s32.totalorder %v3209, 1
      %v3214 = vsel %vm3210, %v3086, %v3150
      %v3215 = vsel %vm3211, %v3087, %v3151
      %v3216 = vsel %vm3212, %v3088, %v3152
      %v3217 = vsel %vm3213, %v3089, %v3153
      %v3218 = vsel %vm3042, 1, 0
      %v3219 = vsel %vm3043, 1, 0
      %v3220 = vsel %vm3044, 1, 0
      %v3221 = vsel %vm3045, 1, 0
      %v3222 = vlaneseq
      %v3223 = vshrl.u32 %v3222, 7
      %v3224 = vsub.s32 0, %v3223
      %v3225 = vrot.slane %v3218, %v3224
      %v3226 = vlaneseq
      %v3227 = vshrl.u32 %v3226, 7
      %v3228 = vsub.s32 0, %v3227
      %v3229 = vrot.slane %v3219, %v3228
      %v3230 = vlaneseq
      %v3231 = vshrl.u32 %v3230, 7
      %v3232 = vsub.s32 0, %v3231
      %v3233 = vrot.slane %v3220, %v3232
      %v3234 = vlaneseq
      %v3235 = vshrl.u32 %v3234, 7
      %v3236 = vsub.s32 0, %v3235
      %v3237 = vrot.slane %v3221, %v3236
      %vm3238 = vcmp.eq.s32.totalorder %v3225, 1
      %vm3239 = vcmp.eq.s32.totalorder %v3229, 1
      %vm3240 = vcmp.eq.s32.totalorder %v3233, 1
      %vm3241 = vcmp.eq.s32.totalorder %v3237, 1
      %v3242 = vsel %vm3238, %v3034, %v3214
      %v3243 = vsel %vm3239, %v3035, %v3215
      %v3244 = vsel %vm3240, %v3036, %v3216
      %v3245 = vsel %vm3241, %v3037, %v3217
      %vm3246 = vmor %vm3134, %vm3202
      %vm3247 = vmor %vm3135, %vm3203
      %vm3248 = vmor %vm3136, %vm3204
      %vm3249 = vmor %vm3137, %vm3205
      %vm3250 = vmor %vm3042, %vm3246
      %vm3251 = vmor %vm3043, %vm3247
      %vm3252 = vmor %vm3044, %vm3248
      %vm3253 = vmor %vm3045, %vm3249
      %v3254 = vsel %vm1380, %v3242, 0.0
      %v3255 = vrot.slane %v3254, 4
      %v3256 = vadd.f32 %v3254, %v3255
      %v3257 = vrot.slane %v3256, 2
      %v3258 = vadd.f32 %v3256, %v3257
      %v3259 = vrot.slane %v3258, 1
      %v3260 = vadd.f32 %v3258, %v3259
      %v3261 = vsel %vm1380, %v3243, 0.0
      %v3262 = vrot.slane %v3261, 4
      %v3263 = vadd.f32 %v3261, %v3262
      %v3264 = vrot.slane %v3263, 2
      %v3265 = vadd.f32 %v3263, %v3264
      %v3266 = vrot.slane %v3265, 1
      %v3267 = vadd.f32 %v3265, %v3266
      %v3268 = vsel %vm1380, %v3244, 0.0
      %v3269 = vrot.slane %v3268, 4
      %v3270 = vadd.f32 %v3268, %v3269
      %v3271 = vrot.slane %v3270, 2
      %v3272 = vadd.f32 %v3270, %v3271
      %v3273 = vrot.slane %v3272, 1
      %v3274 = vadd.f32 %v3272, %v3273
      %v3275 = vsel %vm1380, %v3245, 0.0
      %v3276 = vrot.slane %v3275, 4
      %v3277 = vadd.f32 %v3275, %v3276
      %v3278 = vrot.slane %v3277, 2
      %v3279 = vadd.f32 %v3277, %v3278
      %v3280 = vrot.slane %v3279, 1
      %v3281 = vadd.f32 %v3279, %v3280
      %v3282 = vadd.f32 %v3260, 1e-08
      %v3283 = vadd.f32 %v3267, 1e-08
      %v3284 = vadd.f32 %v3274, 1e-08
      %v3285 = vadd.f32 %v3281, 1e-08
      %v3286 = vrcp.pop %v3282
      %v3287 = vmul.f32 %v3242, %v3286
      %v3288 = vrcp.pop %v3283
      %v3289 = vmul.f32 %v3243, %v3288
      %v3290 = vrcp.pop %v3284
      %v3291 = vmul.f32 %v3244, %v3290
      %v3292 = vrcp.pop %v3285
      %v3293 = vmul.f32 %v3245, %v3292
      %v3294 = vmul.f32 %v3287, %v1328
      %v3295 = vmul.f32 %v3289, %v1332
      %v3296 = vmul.f32 %v3291, %v1336
      %v3297 = vmul.f32 %v3293, %v1340
      %v3298 = vsel %vm1380, %v3294, 0.0
      %3299 = vadd.xlane.f32.xlu0 %v3298
      %v3300 = vpop.xlane.xlu0 %3299
      %v3301 = vsel %vm1380, %v3295, 0.0
      %3302 = vadd.xlane.f32.xlu0 %v3301
      %v3303 = vpop.xlane.xlu0 %3302
      %v3304 = vsel %vm1380, %v3296, 0.0
      %3305 = vadd.xlane.f32.xlu0 %v3304
      %v3306 = vpop.xlane.xlu0 %3305
      %v3307 = vsel %vm1380, %v3297, 0.0
      %3308 = vadd.xlane.f32.xlu0 %v3307
      %v3309 = vpop.xlane.xlu0 %3308
      %v3310 = vsub.f32 %v3300, %v1238
      %v3311 = vsub.f32 %v3303, %v1245
      %v3312 = vsub.f32 %v3306, %v1252
      %v3313 = vsub.f32 %v3309, %v1259
      %v3314 = vand.u32 2147483647, %v3310
      %v3315 = vand.u32 2147483647, %v3311
      %v3316 = vand.u32 2147483647, %v3312
      %v3317 = vand.u32 2147483647, %v3313
      %v3318 = vrot.slane %v3314, 4
      %v3319 = vmax.f32 %v3314, %v3318
      %v3320 = vrot.slane %v3319, 2
      %v3321 = vmax.f32 %v3319, %v3320
      %v3322 = vrot.slane %v3321, 1
      %v3323 = vmax.f32 %v3321, %v3322
      %v3324 = vrot.slane %v3315, 4
      %v3325 = vmax.f32 %v3315, %v3324
      %v3326 = vrot.slane %v3325, 2
      %v3327 = vmax.f32 %v3325, %v3326
      %v3328 = vrot.slane %v3327, 1
      %v3329 = vmax.f32 %v3327, %v3328
      %v3330 = vrot.slane %v3316, 4
      %v3331 = vmax.f32 %v3316, %v3330
      %v3332 = vrot.slane %v3331, 2
      %v3333 = vmax.f32 %v3331, %v3332
      %v3334 = vrot.slane %v3333, 1
      %v3335 = vmax.f32 %v3333, %v3334
      %v3336 = vrot.slane %v3317, 4
      %v3337 = vmax.f32 %v3317, %v3336
      %v3338 = vrot.slane %v3337, 2
      %v3339 = vmax.f32 %v3337, %v3338
      %v3340 = vrot.slane %v3339, 1
      %v3341 = vmax.f32 %v3339, %v3340
      %vm3342 = vcmp.le.f32.partialorder %v3323, 0.01
      %vm3343 = vcmp.le.f32.partialorder %v3329, 0.01
      %vm3344 = vcmp.le.f32.partialorder %v3335, 0.01
      %vm3345 = vcmp.le.f32.partialorder %v3341, 0.01
      %v3346 = vadd.f32 %v3300, 1e-08
      %v3347 = vadd.f32 %v3303, 1e-08
      %v3348 = vadd.f32 %v3306, 1e-08
      %v3349 = vadd.f32 %v3309, 1e-08
      %v3350 = vrcp.pop %v3346
      %v3351 = vmul.f32 %v3294, %v3350
      %v3352 = vrcp.pop %v3347
      %v3353 = vmul.f32 %v3295, %v3352
      %v3354 = vrcp.pop %v3348
      %v3355 = vmul.f32 %v3296, %v3354
      %v3356 = vrcp.pop %v3349
      %v3357 = vmul.f32 %v3297, %v3356
      %v3358 = vmul.f32 %v3351, %v1238
      %v3359 = vmul.f32 %v3353, %v1245
      %v3360 = vmul.f32 %v3355, %v1252
      %v3361 = vmul.f32 %v3357, %v1259
      %v3362 = vsel %vm1380, %v3358, 0.0
      %v3363 = vrot.slane %v3362, 4
      %v3364 = vadd.f32 %v3362, %v3363
      %v3365 = vrot.slane %v3364, 2
      %v3366 = vadd.f32 %v3364, %v3365
      %v3367 = vrot.slane %v3366, 1
      %v3368 = vadd.f32 %v3366, %v3367
      %v3369 = vsel %vm1380, %v3359, 0.0
      %v3370 = vrot.slane %v3369, 4
      %v3371 = vadd.f32 %v3369, %v3370
      %v3372 = vrot.slane %v3371, 2
      %v3373 = vadd.f32 %v3371, %v3372
      %v3374 = vrot.slane %v3373, 1
      %v3375 = vadd.f32 %v3373, %v3374
      %v3376 = vsel %vm1380, %v3360, 0.0
      %v3377 = vrot.slane %v3376, 4
      %v3378 = vadd.f32 %v3376, %v3377
      %v3379 = vrot.slane %v3378, 2
      %v3380 = vadd.f32 %v3378, %v3379
      %v3381 = vrot.slane %v3380, 1
      %v3382 = vadd.f32 %v3380, %v3381
      %v3383 = vsel %vm1380, %v3361, 0.0
      %v3384 = vrot.slane %v3383, 4
      %v3385 = vadd.f32 %v3383, %v3384
      %v3386 = vrot.slane %v3385, 2
      %v3387 = vadd.f32 %v3385, %v3386
      %v3388 = vrot.slane %v3387, 1
      %v3389 = vadd.f32 %v3387, %v3388
      %v3390 = vsub.f32 %v3368, %v1311
      %v3391 = vsub.f32 %v3375, %v1318
      %v3392 = vsub.f32 %v3382, %v1319
      %v3393 = vsub.f32 %v3389, %v1320
      %v3394 = vand.u32 2147483647, %v3390
      %v3395 = vand.u32 2147483647, %v3391
      %v3396 = vand.u32 2147483647, %v3392
      %v3397 = vand.u32 2147483647, %v3393
      %v3398 = vsel %vm1525, %v3394, -inf
      %3399 = vmax.xlane.f32.xlu0 %v3398
      %v3400 = vpop.xlane.xlu0 %3399
      %v3401 = vsel %vm1525, %v3395, -inf
      %3402 = vmax.xlane.f32.xlu0 %v3401
      %v3403 = vpop.xlane.xlu0 %3402
      %v3404 = vsel %vm1525, %v3396, -inf
      %3405 = vmax.xlane.f32.xlu0 %v3404
      %v3406 = vpop.xlane.xlu0 %3405
      %v3407 = vsel %vm1525, %v3397, -inf
      %3408 = vmax.xlane.f32.xlu0 %v3407
      %v3409 = vpop.xlane.xlu0 %3408
      %vm3410 = vcmp.le.f32.partialorder %v3400, 0.01
      %vm3411 = vcmp.le.f32.partialorder %v3403, 0.01
      %vm3412 = vcmp.le.f32.partialorder %v3406, 0.01
      %vm3413 = vcmp.le.f32.partialorder %v3409, 0.01
      %v3414 = vsel %vm3342, 1, 0
      %v3415 = vsel %vm3343, 1, 0
      %v3416 = vsel %vm3344, 1, 0
      %v3417 = vsel %vm3345, 1, 0
      %vm3418 = vcmp.eq.s32.totalorder %v3414, 1
      %vm3419 = vcmp.eq.s32.totalorder %v3415, 1
      %vm3420 = vcmp.eq.s32.totalorder %v3416, 1
      %vm3421 = vcmp.eq.s32.totalorder %v3417, 1
      %v3422 = vsel %vm3418, %v3294, %v3358
      %v3423 = vsel %vm3419, %v3295, %v3359
      %v3424 = vsel %vm3420, %v3296, %v3360
      %v3425 = vsel %vm3421, %v3297, %v3361
      %v3426 = vsel %vm3250, 1, 0
      %v3427 = vsel %vm3251, 1, 0
      %v3428 = vsel %vm3252, 1, 0
      %v3429 = vsel %vm3253, 1, 0
      %v3430 = vlaneseq
      %v3431 = vshrl.u32 %v3430, 7
      %v3432 = vsub.s32 0, %v3431
      %v3433 = vrot.slane %v3426, %v3432
      %v3434 = vlaneseq
      %v3435 = vshrl.u32 %v3434, 7
      %v3436 = vsub.s32 0, %v3435
      %v3437 = vrot.slane %v3427, %v3436
      %v3438 = vlaneseq
      %v3439 = vshrl.u32 %v3438, 7
      %v3440 = vsub.s32 0, %v3439
      %v3441 = vrot.slane %v3428, %v3440
      %v3442 = vlaneseq
      %v3443 = vshrl.u32 %v3442, 7
      %v3444 = vsub.s32 0, %v3443
      %v3445 = vrot.slane %v3429, %v3444
      %vm3446 = vcmp.eq.s32.totalorder %v3433, 1
      %vm3447 = vcmp.eq.s32.totalorder %v3437, 1
      %vm3448 = vcmp.eq.s32.totalorder %v3441, 1
      %vm3449 = vcmp.eq.s32.totalorder %v3445, 1
      %v3450 = vsel %vm3446, %v3242, %v3422
      %v3451 = vsel %vm3447, %v3243, %v3423
      %v3452 = vsel %vm3448, %v3244, %v3424
      %v3453 = vsel %vm3449, %v3245, %v3425
      %vm3454 = vmor %vm3342, %vm3410
      %vm3455 = vmor %vm3343, %vm3411
      %vm3456 = vmor %vm3344, %vm3412
      %vm3457 = vmor %vm3345, %vm3413
      %vm3458 = vmor %vm3250, %vm3454
      %vm3459 = vmor %vm3251, %vm3455
      %vm3460 = vmor %vm3252, %vm3456
      %vm3461 = vmor %vm3253, %vm3457
      %s3462 = sadd.s32 %s1346, 1
      %v3463 = vsel %vm3458, 1, 0
      %v3464 = vsel %vm3459, 1, 0
      %v3465 = vsel %vm3460, 1, 0
      %v3466 = vsel %vm3461, 1, 0
      %v3467 = vcvt.s32.f32 %v3463
      %v3468 = vcvt.s32.f32 %v3464
      %v3469 = vcvt.s32.f32 %v3465
      %v3470 = vcvt.s32.f32 %v3466
    $region38: #{ce_alignment_information_forward.1} parent=1 // loop_footer
      _
    $region39: #{ce_alignment_information_forward.1} parent=1 // loop_footer_branch
      %1345 = sbr.rel target = $region35
    $region40: #{ce_alignment_information_forward.1} parent=1 // loop_exit
      _
    %vm3471 = vcmask 64512
    %3472 = vst.msk [vmem:[%s8] sm:$0xff] %vm3471, %v1347
    %3473 = vst.msk [vmem:[%s8 + $0x8] sm:$0xff] %vm3471, %v1348
    %3474 = vst.msk [vmem:[%s8 + $0x10] sm:$0xff] %vm3471, %v1349
    %3475 = vst.msk [vmem:[%s8 + $0x18] sm:$0xff] %vm3471, %v1350
    %v3476 = vsel %vm3471, %v1347, 0.0
    %3477 = vadd.xlane.f32.xlu0 %v3476
    %v3478 = vpop.xlane.xlu0 %3477
    %v3479 = vsel %vm3471, %v1348, 0.0
    %3480 = vadd.xlane.f32.xlu0 %v3479
    %v3481 = vpop.xlane.xlu0 %3480
    %v3482 = vsel %vm3471, %v1349, 0.0
    %3483 = vadd.xlane.f32.xlu0 %v3482
    %v3484 = vpop.xlane.xlu0 %3483
    %v3485 = vsel %vm3471, %v1350, 0.0
    %3486 = vadd.xlane.f32.xlu0 %v3485
    %v3487 = vpop.xlane.xlu0 %3486
    %v3488 = vadd.f32 %v3478, 1e-08
    %v3489 = vadd.f32 %v3481, 1e-08
    %v3490 = vadd.f32 %v3484, 1e-08
    %v3491 = vadd.f32 %v3487, 1e-08
    %v3492 = vrcp.pop %v3488
    %v3493 = vmul.f32 %v1347, %v3492
    %v3494 = vrcp.pop %v3489
    %v3495 = vmul.f32 %v1348, %v3494
    %v3496 = vrcp.pop %v3490
    %v3497 = vmul.f32 %v1349, %v3496
    %v3498 = vrcp.pop %v3491
    %v3499 = vmul.f32 %v1350, %v3498
    %v3500 = vmul.f32 %v3493, %v1238
    %v3501 = vmul.f32 %v3495, %v1245
    %v3502 = vmul.f32 %v3497, %v1252
    %v3503 = vmul.f32 %v3499, %v1259
    %v3504 = vsel %vm3471, %v3500, 0.0
    %v3505 = vsel %vm3471, %v3501, 0.0
    %v3506 = vadd.f32 %v3504, %v3505
    %v3507 = vsel %vm3471, %v3502, 0.0
    %v3508 = vadd.f32 %v3506, %v3507
    %v3509 = vsel %vm3471, %v3503, 0.0
    %v3510 = vadd.f32 %v3508, %v3509
    %v3511 = vadd.f32 %v3493, 1e-08
    %v3512 = vadd.f32 %v3495, 1e-08
    %v3513 = vadd.f32 %v3497, 1e-08
    %v3514 = vadd.f32 %v3499, 1e-08
    %v3515 = vlog2.pop %v3511
    %v3516 = vmul.f32 %v3515, 0.6931472
    %v3517 = vlog2.pop %v3512
    %v3518 = vmul.f32 %v3517, 0.6931472
    %v3519 = vlog2.pop %v3513
    %v3520 = vmul.f32 %v3519, 0.6931472
    %v3521 = vlog2.pop %v3514
    %v3522 = vmul.f32 %v3521, 0.6931472
    %v3523 = vadd.f32 %v3510, 1e-08
    %v3524 = vlog2.pop %v3523
    %v3525 = vmul.f32 %v3524, 0.6931472
    %v3526 = vsub.f32 %v3516, %v3525
    %v3527 = vsub.f32 %v3518, %v3525
    %v3528 = vsub.f32 %v3520, %v3525
    %v3529 = vsub.f32 %v3522, %v3525
    %v3530 = vld [vmem:[%s7] sm:$0x1]
    %v3531 = vlog2.pop %v3530
    %v3532 = vmul.f32 %v3531, 0.6931472
    %v3533 = vadd.f32 %v3530, 1e-08
    %v3534 = vlog2.pop %v3533
    %v3535 = vmul.f32 %v3534, 0.6931472
    %v3536 = vlaneseq
    %v3537 = vshrl.u32 %v3536, 7
    %v3538 = vsub.s32 0, %v3537
    %v3539 = vrot.slane %v3535, %v3538
    %3541 = vbcast.lane.b32.xlu0 %v3539, 256
    %v3542 = vpop.permute.xlu0 %3541
    %v3543 = vlaneseq
    %v3544 = vshrl.u32 %v3543, 7
    %v3545 = vsub.s32 0, %v3544
    %v3546 = vrot.slane %v3542, %v3545
    %v3547 = vlaneseq
    %v3548 = vshrl.u32 %v3547, 7
    %v3549 = vsub.s32 1, %v3548
    %v3550 = vrot.slane %v3542, %v3549
    %v3551 = vlaneseq
    %v3552 = vshrl.u32 %v3551, 7
    %v3553 = vsub.s32 2, %v3552
    %v3554 = vrot.slane %v3542, %v3553
    %v3555 = vlaneseq
    %v3556 = vshrl.u32 %v3555, 7
    %v3557 = vsub.s32 3, %v3556
    %v3558 = vrot.slane %v3542, %v3557
    %v3559 = vmul.f32 %v3500, %v3526
    %v3560 = vmul.f32 %v3501, %v3527
    %v3561 = vmul.f32 %v3502, %v3528
    %v3562 = vmul.f32 %v3503, %v3529
    %v3563 = vsel %vm3471, %v3559, 0.0
    %v3564 = vsel %vm3471, %v3560, 0.0
    %v3565 = vadd.f32 %v3563, %v3564
    %v3566 = vsel %vm3471, %v3561, 0.0
    %v3567 = vadd.f32 %v3565, %v3566
    %v3568 = vsel %vm3471, %v3562, 0.0
    %v3569 = vadd.f32 %v3567, %v3568
    %3570 = vadd.xlane.f32.xlu0 %v3569
    %v3571 = vpop.xlane.xlu0 %3570
    %v3572 = vrot.slane %v3571, 4
    %v3573 = vadd.f32 %v3571, %v3572
    %v3574 = vrot.slane %v3573, 2
    %v3575 = vadd.f32 %v3573, %v3574
    %v3576 = vrot.slane %v3575, 1
    %v3577 = vadd.f32 %v3575, %v3576
    %s3578 = vtos %v3577
    %s3579 = smul.f32 %s3578, 0.125
    %v3580 = vadd.f32 %v1238, 1e-08
    %v3581 = vadd.f32 %v1245, 1e-08
    %v3582 = vadd.f32 %v1252, 1e-08
    %v3583 = vadd.f32 %v1259, 1e-08
    %v3584 = vlog2.pop %v3580
    %v3585 = vmul.f32 %v3584, 0.6931472
    %v3586 = vlog2.pop %v3581
    %v3587 = vmul.f32 %v3586, 0.6931472
    %v3588 = vlog2.pop %v3582
    %v3589 = vmul.f32 %v3588, 0.6931472
    %v3590 = vlog2.pop %v3583
    %v3591 = vmul.f32 %v3590, 0.6931472
    %v3592 = vsub.f32 %v3585, %v3546
    %v3593 = vsub.f32 %v3587, %v3550
    %v3594 = vsub.f32 %v3589, %v3554
    %v3595 = vsub.f32 %v3591, %v3558
    %v3596 = vmul.f32 %v3500, %v3592
    %v3597 = vmul.f32 %v3501, %v3593
    %v3598 = vmul.f32 %v3502, %v3594
    %v3599 = vmul.f32 %v3503, %v3595
    %v3600 = vsel %vm3471, %v3596, 0.0
    %v3601 = vsel %vm3471, %v3597, 0.0
    %v3602 = vadd.f32 %v3600, %v3601
    %v3603 = vsel %vm3471, %v3598, 0.0
    %v3604 = vadd.f32 %v3602, %v3603
    %v3605 = vsel %vm3471, %v3599, 0.0
    %v3606 = vadd.f32 %v3604, %v3605
    %3607 = vadd.xlane.f32.xlu0 %v3606
    %v3608 = vpop.xlane.xlu0 %3607
    %v3609 = vrot.slane %v3608, 4
    %v3610 = vadd.f32 %v3608, %v3609
    %v3611 = vrot.slane %v3610, 2
    %v3612 = vadd.f32 %v3610, %v3611
    %v3613 = vrot.slane %v3612, 1
    %v3614 = vadd.f32 %v3612, %v3613
    %s3615 = vtos %v3614
    %s3616 = smul.f32 %s3615, 0.125
    %s3617 = sadd.f32 %s3579, %s3616
    %v3618 = vlog2.pop %v395
    %v3619 = vmul.f32 %v3618, 0.6931472
    %v3621 = vlaneseq
    %v3622 = vshrl.u32 %v3621, 7
    %v3623 = vsub.s32 0, %v3622
    %v3624 = vrot.slane %v3532, %v3623
    %v3626 = vsub.f32 %v3619, %v3624
    %v3627 = vmul.f32 %v395, %v3626
    %v3628 = vsel %vm384, %v3627, 0.0
    %3629 = vadd.xlane.f32.xlu0 %v3628
    %v3630 = vpop.xlane.xlu0 %3629
    %v3631 = vrot.slane %v3630, 4
    %v3632 = vadd.f32 %v3630, %v3631
    %v3633 = vrot.slane %v3632, 2
    %v3634 = vadd.f32 %v3632, %v3633
    %v3635 = vrot.slane %v3634, 1
    %v3636 = vadd.f32 %v3634, %v3635
    %s3637 = vtos %v3636
    %s3638 = smul.f32 %s3637, 0.125
    %v3639 = vlog2.pop %v411
    %v3640 = vmul.f32 %v3639, 0.6931472
    %3641 = vrot.lane.b32.xlu0 %v3624, 4
    %v3642 = vpop.permute.xlu0 %3641
    %v3644 = vsub.f32 %v3640, %v3642
    %v3645 = vmul.f32 %v411, %v3644
    %3647 = vrot.lane.b32.xlu0 %v3645, 124
    %v3648 = vpop.permute.xlu0 %3647
    %v3650 = vsel %vm384, %v3648, 0.0
    %3651 = vadd.xlane.f32.xlu0 %v3650
    %v3652 = vpop.xlane.xlu0 %3651
    %v3653 = vrot.slane %v3652, 4
    %v3654 = vadd.f32 %v3652, %v3653
    %v3655 = vrot.slane %v3654, 2
    %v3656 = vadd.f32 %v3654, %v3655
    %v3657 = vrot.slane %v3656, 1
    %v3658 = vadd.f32 %v3656, %v3657
    %s3659 = vtos %v3658
    %s3660 = smul.f32 %s3659, 0.125
    %v3661 = vlog2.pop %v427
    %v3662 = vmul.f32 %v3661, 0.6931472
    %3663 = vrot.lane.b32.xlu0 %v3624, 8
    %v3664 = vpop.permute.xlu0 %3663
    %v3666 = vsub.f32 %v3662, %v3664
    %v3667 = vmul.f32 %v427, %v3666
    %3669 = vrot.lane.b32.xlu0 %v3667, 120
    %v3670 = vpop.permute.xlu0 %3669
    %v3672 = vsel %vm384, %v3670, 0.0
    %3673 = vadd.xlane.f32.xlu0 %v3672
    %v3674 = vpop.xlane.xlu0 %3673
    %v3675 = vrot.slane %v3674, 4
    %v3676 = vadd.f32 %v3674, %v3675
    %v3677 = vrot.slane %v3676, 2
    %v3678 = vadd.f32 %v3676, %v3677
    %v3679 = vrot.slane %v3678, 1
    %v3680 = vadd.f32 %v3678, %v3679
    %s3681 = vtos %v3680
    %s3682 = smul.f32 %s3681, 0.125
    %s3683 = scalar_lea.smem [#allocation2], 0
    %3684 = sst [smem:[%s3683]] %s3579
    %s3685 = scalar_lea.smem [#allocation2], 1
    %3686 = sst [smem:[%s3685]] %s3638
    %s3687 = scalar_lea.smem [#allocation2], 2
    %3688 = sst [smem:[%s3687]] %s3660
    %s3689 = scalar_lea.smem [#allocation2], 3
    %3690 = sst [smem:[%s3689]] %s3682
    %s3691 = scalar_lea.smem [#allocation2], 4
    %3692 = sst [smem:[%s3691]] %s3617
    // Predicated region
    $region41: #{ce_alignment_information_forward.1} parent=1 // pred_check
      _
    $region42: #{ce_alignment_information_forward.1} parent=1 // pred_check_branch
      %3694 = sbr.rel (0) target = $region44
    $region43: #{ce_alignment_information_forward.1} parent=1 // pred_region
      _
    $region44: #{ce_alignment_information_forward.1} parent=1 // pred_fallthru
      _
    // Predicated region
    $region45: #{ce_alignment_information_forward.1} parent=1 // pred_check
      _
    $region46: #{ce_alignment_information_forward.1} parent=1 // pred_check_branch
      %3696 = sbr.rel (0) target = $region48
    $region47: #{ce_alignment_information_forward.1} parent=1 // pred_region
      %s3698 = ssub.s32 16, 16
      %3699 = vsyncadd [#allocation3], %s3698
      %s3701 = sshll.u32 %s9, 4
      %s3702 = int_to_ptr.vmem [resolvable:$true] %s3701
      %3704 = dma.smem_to_vmem [#allocation2], 16, %s3702, [#allocation3]
    $region48: #{ce_alignment_information_forward.1} parent=1 // pred_fallthru
      _
    // Predicated region
    $region49: #{ce_alignment_information_forward.1} parent=1 // pred_check
      _
    $region50: #{ce_alignment_information_forward.1} parent=1 // pred_check_branch
      %3706 = sbr.rel (0) target = $region52
    $region51: #{ce_alignment_information_forward.1} parent=1 // pred_region
      _
    $region52: #{ce_alignment_information_forward.1} parent=1 // pred_fallthru
      _
    // Predicated region
    $region53: #{ce_alignment_information_forward.1} parent=1 // pred_check
      _
    $region54: #{ce_alignment_information_forward.1} parent=1 // pred_check_branch
      %3708 = sbr.rel (0) target = $region56
    $region55: #{ce_alignment_information_forward.1} parent=1 // pred_region
      %3709 = dma.done [#allocation3], 16
    $region56: #{ce_alignment_information_forward.1} parent=1 // pred_fallthru
      _
    %3710 = sfence
    %3711 = vsyncpa [#allocation3], 1

</llo_original>
